<compile_context>
chip_gen: v5e
topology: v5e:2x2
jax: 0.10.0
libtpu: 0.0.40
codegen_flags: <defaults>
</compile_context>

<pallas_src>
import functools
import math

import jax
import jax.numpy as jnp
from jax.experimental import pallas as pl
from jax.experimental.pallas import tpu as pltpu


# ----------------------------- config ------------------------------------- #

CFG = dict(
    vocab_size=50,
    hidden_size=32,
    num_heads=4,
    num_layers=2,
    intermediate_size=64,
    max_position=32,
    type_vocab_size=2,
    ln_eps=1e-12,
)

SC_H1 = 100   # Sentiment_Classifier first hidden
SC_H2 = 10    # Sentiment_Classifier second hidden
N_CLS = 2     # output classes


# ----------------------------- spec helpers -------------------------------- #

def _zero_index_map(i, *, ndim):
    return (0,) * ndim


def _full_specs(arrays):
    """Full-array block, single grid step."""
    return [pl.BlockSpec(a.shape, functools.partial(_zero_index_map, ndim=a.ndim))
            for a in arrays]


# ----------------------------- fused kernel -------------------------------- #

def _fused_forward_kernel(
        emb_ref, addmask_ref, mask_col_ref, aug_ref,
        eln_g_ref, eln_b_ref,
        wqkv_ref, bqkv_ref, wo_ref, bo_ref, ln1g_ref, ln1b_ref,
        w1_ref, b1_ref, w2_ref, b2_ref, ln2g_ref, ln2b_ref,
        aw1_ref, ab1_ref, aw2_ref, ab2_ref,
        s1w_ref, s1b_ref, s3w_ref, s3b_ref, s4w_ref, s4b_ref,
        e1wa_ref, e1wf_ref, e1b_ref, e3w_ref, e3b_ref, e4w_ref, e4b_ref,
        sent_ref, env_ref, amask_ref,
        *, num_layers, num_heads, eps, batch, seq):
    """Embedding-LN -> L transformer layers -> rationale gate -> two classifiers."""
    f32, bf16 = jnp.float32, jnp.bfloat16

    def layer_norm(h, g, b):
        mu = jnp.mean(h, axis=-1, keepdims=True)
        var = jnp.mean(jnp.square(h - mu), axis=-1, keepdims=True)
        return (h - mu) * jax.lax.rsqrt(var + eps) * g + b

    # ---------------- embedding LayerNorm (no residual) ---------------- #
    x = layer_norm(emb_ref[...], eln_g_ref[...], eln_b_ref[...])          # [M, H] f32
    M, H = x.shape
    dh = H // num_heads
    scale = 1.0 / math.sqrt(dh)
    add_mask = addmask_ref[...]                                           # [M, M] block-diag additive mask

    # ---------------- encoder layers (static unroll) ---------------- #
    for l in range(num_layers):
        # fused QKV projection (bf16 operands, f32 accumulate)
        qkv = jnp.dot(x.astype(bf16), wqkv_ref[l], preferred_element_type=f32) + bqkv_ref[l]
        q = qkv[:, 0:H]
        k = qkv[:, H:2 * H]
        v = qkv[:, 2 * H:3 * H]

        # per-head attention, all batches at once via the block-diagonal mask
        ctx_heads = []
        for h in range(num_heads):
            sl = slice(h * dh, (h + 1) * dh)
            s = jax.lax.dot_general(
                (q[:, sl] * scale).astype(bf16), k[:, sl].astype(bf16),
                (((1,), (1,)), ((), ())), preferred_element_type=f32)     # [M, M]
            s = s + add_mask
            s = s - jnp.max(s, axis=-1, keepdims=True)
            p = jnp.exp(s)
            p = p * pl.reciprocal(jnp.sum(p, axis=-1, keepdims=True), approx=True)
            ctx_heads.append(jnp.dot(p.astype(bf16), v[:, sl].astype(bf16),
                                     preferred_element_type=f32))         # [M, dh]
        ctx = jnp.concatenate(ctx_heads, axis=-1)                         # [M, H]

        attn_out = jnp.dot(ctx.astype(bf16), wo_ref[l], preferred_element_type=f32) + bo_ref[l]

        # residual + LN1
        h1 = layer_norm(attn_out + x, ln1g_ref[l], ln1b_ref[l])

        # FFN (gelu) + residual + LN2
        ff = jnp.dot(h1.astype(bf16), w1_ref[l], preferred_element_type=f32) + b1_ref[l]
        ff = 0.5 * ff * (1.0 + jax.lax.erf(ff * (1.0 / math.sqrt(2.0))))
        ff = jnp.dot(ff.astype(bf16), w2_ref[l], preferred_element_type=f32) + b2_ref[l]
        x = layer_norm(ff + h1, ln2g_ref[l], ln2b_ref[l])

    # ---------------- Attention_Layer: hard rationale gate ---------------- #
    feat = x                                                              # [M, H]
    msk = mask_col_ref[...]                                               # [M, 1]

    ah = jnp.maximum(jnp.dot(feat.astype(bf16), aw1_ref[...], preferred_element_type=f32)
                     + ab1_ref[...], 0.0)
    att = jnp.dot(ah.astype(bf16), aw2_ref[...], preferred_element_type=f32) + ab2_ref[...]    # [M, 2]
    hard = (att >= jnp.max(att, axis=-1, keepdims=True)).astype(f32)      # == torch.eq(att, max)
    base = (jax.lax.broadcasted_iota(jnp.int32, att.shape, 1) == 1).astype(f32)   # [0, 1] per row
    amask = hard * msk + (1.0 - msk) * base                               # forward value of ST trick
    amask_ref[...] = amask
    rf = feat * amask[:, 0:1]                                             # rationale feature [M, H]

    # ------- Sentiment_Classifier trunk: Linear -> MaxPool(seq) -> Linear -> Tanh -> Linear ------- #
    def classify(w1, b1, w3, b3, w4, b4, extra):
        h = jnp.dot(rf.astype(bf16), w1, preferred_element_type=f32) + b1               # [M, 100]
        pooled = jnp.concatenate(
            [jnp.max(h[b * seq:(b + 1) * seq, :], axis=0, keepdims=True) for b in range(batch)],
            axis=0)                                                                      # [B, 100]
        if extra is not None:
            pooled = pooled + extra        # aug column is constant over seq -> commutes with max
        t = jnp.tanh(jnp.dot(pooled.astype(bf16), w3, preferred_element_type=f32) + b3)  # [B, 10]
        return jnp.dot(t.astype(bf16), w4, preferred_element_type=f32) + b4              # [B, 2]

    sent_ref[...] = classify(s1w_ref[...], s1b_ref[...], s3w_ref[...], s3b_ref[...],
                             s4w_ref[...], s4b_ref[...], None)

    # env_sc input is cat([aug, rf], -1); handled as rank-1 split of its first Linear's weight
    aug_extra = aug_ref[...] * e1wa_ref[...]                                             # [B,1]*[1,100]
    env_ref[...] = classify(e1wf_ref[...], e1b_ref[...], e3w_ref[...], e3b_ref[...],
                            e4w_ref[...], e4b_ref[...], aug_extra)


def fused_forward_call(params, cfg, emb, big_mask, mask_col, aug_col, batch, seq):
    M, _ = emb.shape
    args = (emb, big_mask, mask_col, aug_col,
            params["emb_ln_g"], params["emb_ln_b"],
            params["wqkv"], params["bqkv"], params["wo"], params["bo"],
            params["ln1_g"], params["ln1_b"],
            params["w1"], params["b1"], params["w2"], params["b2"],
            params["ln2_g"], params["ln2_b"],
            params["al_w1"], params["al_b1"], params["al_w2"], params["al_b2"],
            params["sc1_w"], params["sc1_b"], params["sc3_w"], params["sc3_b"],
            params["sc4_w"], params["sc4_b"],
            params["env1_w_aug"], params["env1_w_feat"], params["env1_b"],
            params["env3_w"], params["env3_b"], params["env4_w"], params["env4_b"])
    out_shape = (jax.ShapeDtypeStruct((batch, N_CLS), jnp.float32),
                 jax.ShapeDtypeStruct((batch, N_CLS), jnp.float32),
                 jax.ShapeDtypeStruct((M, N_CLS), jnp.float32))
    out_specs = (pl.BlockSpec((batch, N_CLS), lambda i: (0, 0)),
                 pl.BlockSpec((batch, N_CLS), lambda i: (0, 0)),
                 pl.BlockSpec((M, N_CLS), lambda i: (0, 0)))
    return pl.pallas_call(
        functools.partial(_fused_forward_kernel,
                          num_layers=cfg["num_layers"], num_heads=cfg["num_heads"],
                          eps=cfg["ln_eps"], batch=batch, seq=seq),
        out_shape=out_shape,
        grid=(1,),
        in_specs=_full_specs(args),
        out_specs=out_specs,
        compiler_params=pltpu.CompilerParams(dimension_semantics=("arbitrary",)),
    )(*args)


# ------------------------------ params ------------------------------------- #

def init_params(key, cfg):
    H, I, V, L = cfg["hidden_size"], cfg["intermediate_size"], cfg["vocab_size"], cfg["num_layers"]
    ks = iter(jax.random.split(key, 128))

    def nrm(shape, s=0.02):
        return (s * jax.random.normal(next(ks), shape)).astype(jnp.float32)

    def wbf(shape, s=0.02):                 # matmul weights: cast to bf16 ONCE here
        return nrm(shape, s).astype(jnp.bfloat16)

    zeros = lambda shape: jnp.zeros(shape, jnp.float32)
    ones = lambda shape: jnp.ones(shape, jnp.float32)

    p = {
        # K-BERT embedding
        "word_emb": nrm((V, H)),
        "pos_emb": nrm((cfg["max_position"], H)),
        "seg_emb": nrm((cfg["type_vocab_size"], H)),
        "emb_ln_g": ones((1, H)), "emb_ln_b": zeros((1, H)),
        # encoder layer weights, stacked on a leading [L, ...] axis
        "wqkv": wbf((L, H, 3 * H)), "bqkv": zeros((L, 1, 3 * H)),   # fused Q|K|V
        "wo": wbf((L, H, H)), "bo": zeros((L, 1, H)),
        "ln1_g": ones((L, 1, H)), "ln1_b": zeros((L, 1, H)),
        "w1": wbf((L, H, I)), "b1": zeros((L, 1, I)),
        "w2": wbf((L, I, H)), "b2": zeros((L, 1, H)),
        "ln2_g": ones((L, 1, H)), "ln2_b": zeros((L, 1, H)),
        # Attention_Layer (rationale extractor): Linear(H,H) -> ReLU -> Linear(H,2)
        "al_w1": wbf((H, H)), "al_b1": zeros((1, H)),
        "al_w2": wbf((H, N_CLS)), "al_b2": zeros((1, N_CLS)),
        # Sentiment_Classifier on rationale_feature (h_dim)
        "sc1_w": wbf((H, SC_H1)), "sc1_b": zeros((1, SC_H1)),
        "sc3_w": wbf((SC_H1, SC_H2)), "sc3_b": zeros((1, SC_H2)),
        "sc4_w": wbf((SC_H2, N_CLS)), "sc4_b": zeros((1, N_CLS)),
        # env Sentiment_Classifier on cat([aug, rationale_feature]) (h_dim + 1)
        "env1_w_aug": nrm((1, SC_H1)),                    # aug row of Linear(h_dim+1,100), f32 (VPU mul)
        "env1_w_feat": wbf((H, SC_H1)), "env1_b": zeros((1, SC_H1)),
        "env3_w": wbf((SC_H1, SC_H2)), "env3_b": zeros((1, SC_H2)),
        "env4_w": wbf((SC_H2, N_CLS)), "env4_b": zeros((1, N_CLS)),
    }
    return p


# ------------------------------ glue (XLA) ---------------------------------- #

def build_attention_mask(mask, vm):
    """Combine visible matrix + padding mask into a block-diagonal [B*S, B*S] additive mask."""
    B, S = mask.shape
    M = B * S
    visible = vm.astype(jnp.float32) * mask.astype(jnp.float32)[:, None, :]
    add = jnp.where(visible > 0.5, 0.0, -10000.0).astype(jnp.float32)     # [B, S, S]
    idx = jnp.arange(M)
    rb, ri = idx // S, idx % S
    cb, ci = idx // S, idx % S
    same = rb[:, None] == cb[None, :]
    vals = add[rb[:, None], ri[:, None], ci[None, :]]                     # [M, M]
    return jnp.where(same, vals, -1e9).astype(jnp.float32)


def causal_inference_forward(params, cfg, tokens, mask, pos, vm, aug):
    """Returns (sentiment_probs [B,2], env_enable_probs [B,2], attention_mask [B,S,2])."""
    B, S = tokens.shape
    H = cfg["hidden_size"]
    M = B * S

    # TODO(synk): build_model(args) internals are not given; a standard K-BERT-style
    # embedding (word+pos+seg, LN) and BERT encoder with visible-matrix masking is used.
    seg = jnp.clip(mask.astype(jnp.int32), 0, cfg["type_vocab_size"] - 1)
    emb = (jnp.take(params["word_emb"], tokens, axis=0)
           + jnp.take(params["pos_emb"], pos, axis=0)
           + jnp.take(params["seg_emb"], seg, axis=0)).reshape(M, H)

    big_mask = build_attention_mask(mask, vm)

    sent, env, amask = fused_forward_call(
        params, cfg, emb, big_mask,
        mask.reshape(M, 1).astype(jnp.float32),
        aug.reshape(B, 1).astype(jnp.float32),
        B, S)
    return sent, env, amask.reshape(B, S, N_CLS)


# --------------------------------- main ------------------------------------- #

if __name__ == "__main__":
    cfg = CFG
    key = jax.random.PRNGKey(0)
    kp, kt, kv, ka = jax.random.split(key, 4)
    params = init_params(kp, cfg)

    B, S = 2, 8
    tokens = jax.random.randint(kt, (B, S), 0, cfg["vocab_size"], dtype=jnp.int32)
    mask = jnp.ones((B, S), jnp.float32).at[1, -2:].set(0.0)       # batch 1: last two positions padded
    pos = jnp.broadcast_to(jnp.arange(S, dtype=jnp.int32)[None, :], (B, S))
    vm = (jax.random.uniform(kv, (B, S, S)) > 0.2).astype(jnp.float32)
    vm = jnp.maximum(vm, jnp.eye(S, dtype=jnp.float32)[None])      # keep diagonal visible
    aug = jax.random.bernoulli(ka, 0.5, (B,)).astype(jnp.float32)

    fwd = jax.jit(functools.partial(causal_inference_forward, params, cfg))
    sentiment_probs, env_enable_probs, attention_mask = fwd(tokens, mask, pos, vm, aug)
    jax.block_until_ready((sentiment_probs, env_enable_probs, attention_mask))

    assert sentiment_probs.shape == (B, N_CLS)
    assert env_enable_probs.shape == (B, N_CLS)
    assert attention_mask.shape == (B, S, N_CLS)
    print("KERNEL_OK")
</pallas_src>

<mosaic_0001>
module attributes {stable_mosaic.version = 11 : i64} {
  func.func @_fused_forward_kernel(%arg0: i32, %arg1: memref<16x32xf32, #tpu.memory_space<vmem>>, %arg2: memref<16x16xf32, #tpu.memory_space<vmem>>, %arg3: memref<16x1xf32, #tpu.memory_space<vmem>>, %arg4: memref<2x1xf32, #tpu.memory_space<vmem>>, %arg5: memref<1x32xf32, #tpu.memory_space<vmem>>, %arg6: memref<1x32xf32, #tpu.memory_space<vmem>>, %arg7: memref<2x32x96xbf16, #tpu.memory_space<vmem>>, %arg8: memref<2x1x96xf32, #tpu.memory_space<vmem>>, %arg9: memref<2x32x32xbf16, #tpu.memory_space<vmem>>, %arg10: memref<2x1x32xf32, #tpu.memory_space<vmem>>, %arg11: memref<2x1x32xf32, #tpu.memory_space<vmem>>, %arg12: memref<2x1x32xf32, #tpu.memory_space<vmem>>, %arg13: memref<2x32x64xbf16, #tpu.memory_space<vmem>>, %arg14: memref<2x1x64xf32, #tpu.memory_space<vmem>>, %arg15: memref<2x64x32xbf16, #tpu.memory_space<vmem>>, %arg16: memref<2x1x32xf32, #tpu.memory_space<vmem>>, %arg17: memref<2x1x32xf32, #tpu.memory_space<vmem>>, %arg18: memref<2x1x32xf32, #tpu.memory_space<vmem>>, %arg19: memref<32x32xbf16, #tpu.memory_space<vmem>>, %arg20: memref<1x32xf32, #tpu.memory_space<vmem>>, %arg21: memref<32x2xbf16, #tpu.memory_space<vmem>>, %arg22: memref<1x2xf32, #tpu.memory_space<vmem>>, %arg23: memref<32x100xbf16, #tpu.memory_space<vmem>>, %arg24: memref<1x100xf32, #tpu.memory_space<vmem>>, %arg25: memref<100x10xbf16, #tpu.memory_space<vmem>>, %arg26: memref<1x10xf32, #tpu.memory_space<vmem>>, %arg27: memref<10x2xbf16, #tpu.memory_space<vmem>>, %arg28: memref<1x2xf32, #tpu.memory_space<vmem>>, %arg29: memref<1x100xf32, #tpu.memory_space<vmem>>, %arg30: memref<32x100xbf16, #tpu.memory_space<vmem>>, %arg31: memref<1x100xf32, #tpu.memory_space<vmem>>, %arg32: memref<100x10xbf16, #tpu.memory_space<vmem>>, %arg33: memref<1x10xf32, #tpu.memory_space<vmem>>, %arg34: memref<10x2xbf16, #tpu.memory_space<vmem>>, %arg35: memref<1x2xf32, #tpu.memory_space<vmem>>, %arg36: memref<2x2xf32, #tpu.memory_space<vmem>>, %arg37: memref<2x2xf32, #tpu.memory_space<vmem>>, %arg38: memref<16x2xf32, #tpu.memory_space<vmem>>) attributes {dimension_semantics = [#tpu.dimension_semantics<arbitrary>], iteration_bounds = array<i64: 1>, scalar_prefetch = 0 : i64, scratch_operands = 0 : i64, tpu.core_type = #tpu.core_type<tc>, window_params = [{pipeline_mode = #tpu.pipeline_mode<synchronous>, transform_indices = @transform_0, window_bounds = array<i64: 16, 32>}, {pipeline_mode = #tpu.pipeline_mode<synchronous>, transform_indices = @transform_1, window_bounds = array<i64: 16, 16>}, {pipeline_mode = #tpu.pipeline_mode<synchronous>, transform_indices = @transform_2, window_bounds = array<i64: 16, 1>}, {pipeline_mode = #tpu.pipeline_mode<synchronous>, transform_indices = @transform_3, window_bounds = array<i64: 2, 1>}, {pipeline_mode = #tpu.pipeline_mode<synchronous>, transform_indices = @transform_4, window_bounds = array<i64: 1, 32>}, {pipeline_mode = #tpu.pipeline_mode<synchronous>, transform_indices = @transform_5, window_bounds = array<i64: 1, 32>}, {pipeline_mode = #tpu.pipeline_mode<synchronous>, transform_indices = @transform_6, window_bounds = array<i64: 2, 32, 96>}, {pipeline_mode = #tpu.pipeline_mode<synchronous>, transform_indices = @transform_7, window_bounds = array<i64: 2, 1, 96>}, {pipeline_mode = #tpu.pipeline_mode<synchronous>, transform_indices = @transform_8, window_bounds = array<i64: 2, 32, 32>}, {pipeline_mode = #tpu.pipeline_mode<synchronous>, transform_indices = @transform_9, window_bounds = array<i64: 2, 1, 32>}, {pipeline_mode = #tpu.pipeline_mode<synchronous>, transform_indices = @transform_10, window_bounds = array<i64: 2, 1, 32>}, {pipeline_mode = #tpu.pipeline_mode<synchronous>, transform_indices = @transform_11, window_bounds = array<i64: 2, 1, 32>}, {pipeline_mode = #tpu.pipeline_mode<synchronous>, transform_indices = @transform_12, window_bounds = array<i64: 2, 32, 64>}, {pipeline_mode = #tpu.pipeline_mode<synchronous>, transform_indices = @transform_13, window_bounds = array<i64: 2, 1, 64>}, {pipeline_mode = #tpu.pipeline_mode<synchronous>, transform_indices = @transform_14, window_bounds = array<i64: 2, 64, 32>}, {pipeline_mode = #tpu.pipeline_mode<synchronous>, transform_indices = @transform_15, window_bounds = array<i64: 2, 1, 32>}, {pipeline_mode = #tpu.pipeline_mode<synchronous>, transform_indices = @transform_16, window_bounds = array<i64: 2, 1, 32>}, {pipeline_mode = #tpu.pipeline_mode<synchronous>, transform_indices = @transform_17, window_bounds = array<i64: 2, 1, 32>}, {pipeline_mode = #tpu.pipeline_mode<synchronous>, transform_indices = @transform_18, window_bounds = array<i64: 32, 32>}, {pipeline_mode = #tpu.pipeline_mode<synchronous>, transform_indices = @transform_19, window_bounds = array<i64: 1, 32>}, {pipeline_mode = #tpu.pipeline_mode<synchronous>, transform_indices = @transform_20, window_bounds = array<i64: 32, 2>}, {pipeline_mode = #tpu.pipeline_mode<synchronous>, transform_indices = @transform_21, window_bounds = array<i64: 1, 2>}, {pipeline_mode = #tpu.pipeline_mode<synchronous>, transform_indices = @transform_22, window_bounds = array<i64: 32, 100>}, {pipeline_mode = #tpu.pipeline_mode<synchronous>, transform_indices = @transform_23, window_bounds = array<i64: 1, 100>}, {pipeline_mode = #tpu.pipeline_mode<synchronous>, transform_indices = @transform_24, window_bounds = array<i64: 100, 10>}, {pipeline_mode = #tpu.pipeline_mode<synchronous>, transform_indices = @transform_25, window_bounds = array<i64: 1, 10>}, {pipeline_mode = #tpu.pipeline_mode<synchronous>, transform_indices = @transform_26, window_bounds = array<i64: 10, 2>}, {pipeline_mode = #tpu.pipeline_mode<synchronous>, transform_indices = @transform_27, window_bounds = array<i64: 1, 2>}, {pipeline_mode = #tpu.pipeline_mode<synchronous>, transform_indices = @transform_28, window_bounds = array<i64: 1, 100>}, {pipeline_mode = #tpu.pipeline_mode<synchronous>, transform_indices = @transform_29, window_bounds = array<i64: 32, 100>}, {pipeline_mode = #tpu.pipeline_mode<synchronous>, transform_indices = @transform_30, window_bounds = array<i64: 1, 100>}, {pipeline_mode = #tpu.pipeline_mode<synchronous>, transform_indices = @transform_31, window_bounds = array<i64: 100, 10>}, {pipeline_mode = #tpu.pipeline_mode<synchronous>, transform_indices = @transform_32, window_bounds = array<i64: 1, 10>}, {pipeline_mode = #tpu.pipeline_mode<synchronous>, transform_indices = @transform_33, window_bounds = array<i64: 10, 2>}, {pipeline_mode = #tpu.pipeline_mode<synchronous>, transform_indices = @transform_34, window_bounds = array<i64: 1, 2>}, {pipeline_mode = #tpu.pipeline_mode<synchronous>, transform_indices = @transform_35, window_bounds = array<i64: 2, 2>}, {pipeline_mode = #tpu.pipeline_mode<synchronous>, transform_indices = @transform_36, window_bounds = array<i64: 2, 2>}, {pipeline_mode = #tpu.pipeline_mode<synchronous>, transform_indices = @transform_37, window_bounds = array<i64: 16, 2>}]} {
    %c0 = arith.constant 0 : index
    %c0_0 = arith.constant 0 : index
    %0 = vector.load %arg1[%c0, %c0_0] : memref<16x32xf32, #tpu.memory_space<vmem>>, vector<16x32xf32>
    %c0_1 = arith.constant 0 : index
    %c0_2 = arith.constant 0 : index
    %1 = vector.load %arg5[%c0_1, %c0_2] : memref<1x32xf32, #tpu.memory_space<vmem>>, vector<1x32xf32>
    %c0_3 = arith.constant 0 : index
    %c0_4 = arith.constant 0 : index
    %2 = vector.load %arg6[%c0_3, %c0_4] : memref<1x32xf32, #tpu.memory_space<vmem>>, vector<1x32xf32>
    %cst = arith.constant dense<0.000000e+00> : vector<16xf32>
    %3 = vector.multi_reduction <add>, %0, %cst [1] : vector<16x32xf32> to vector<16xf32>
    %4 = vector.shape_cast %3 : vector<16xf32> to vector<16x1xf32>
    %cst_5 = arith.constant 3.200000e+01 : f32
    %5 = vector.broadcast %cst_5 : f32 to vector<16x1xf32>
    %6 = arith.divf %4, %5 : vector<16x1xf32>
    %7 = vector.broadcast %6 : vector<16x1xf32> to vector<16x32xf32>
    %8 = arith.subf %0, %7 : vector<16x32xf32>
    %9 = arith.mulf %8, %8 : vector<16x32xf32>
    %cst_6 = arith.constant dense<0.000000e+00> : vector<16xf32>
    %10 = vector.multi_reduction <add>, %9, %cst_6 [1] : vector<16x32xf32> to vector<16xf32>
    %11 = vector.shape_cast %10 : vector<16xf32> to vector<16x1xf32>
    %cst_7 = arith.constant 3.200000e+01 : f32
    %12 = vector.broadcast %cst_7 : f32 to vector<16x1xf32>
    %13 = arith.divf %11, %12 : vector<16x1xf32>
    %14 = vector.broadcast %6 : vector<16x1xf32> to vector<16x32xf32>
    %15 = arith.subf %0, %14 : vector<16x32xf32>
    %cst_8 = arith.constant 9.99999996E-13 : f32
    %16 = vector.broadcast %cst_8 : f32 to vector<16x1xf32>
    %17 = arith.addf %13, %16 : vector<16x1xf32>
    %18 = math.rsqrt %17 : vector<16x1xf32>
    %19 = vector.broadcast %18 : vector<16x1xf32> to vector<16x32xf32>
    %20 = arith.mulf %15, %19 : vector<16x32xf32>
    %21 = vector.broadcast %1 : vector<1x32xf32> to vector<16x32xf32>
    %22 = arith.mulf %20, %21 : vector<16x32xf32>
    %23 = vector.broadcast %2 : vector<1x32xf32> to vector<16x32xf32>
    %24 = arith.addf %22, %23 : vector<16x32xf32>
    %c0_9 = arith.constant 0 : index
    %c0_10 = arith.constant 0 : index
    %25 = vector.load %arg2[%c0_9, %c0_10] : memref<16x16xf32, #tpu.memory_space<vmem>>, vector<16x16xf32>
    %26 = arith.truncf %24 : vector<16x32xf32> to vector<16x32xbf16>
    %c0_11 = arith.constant 0 : index
    %c0_12 = arith.constant 0 : index
    %c0_13 = arith.constant 0 : index
    %27 = vector.load %arg7[%c0_11, %c0_12, %c0_13] : memref<2x32x96xbf16, #tpu.memory_space<vmem>>, vector<1x32x96xbf16>
    %28 = vector.shape_cast %27 : vector<1x32x96xbf16> to vector<32x96xbf16>
    %cst_14 = arith.constant dense<0.000000e+00> : vector<16x96xf32>
    %29 = tpu.matmul %26, %28, %cst_14 {dimension_numbers = #tpu.dot_dimension_numbers<[1], [0], [0], [1], [0, 0, 1, 1], [], []>} : vector<16x32xbf16>, vector<32x96xbf16>, vector<16x96xf32> -> vector<16x96xf32>
    %c0_15 = arith.constant 0 : index
    %c0_16 = arith.constant 0 : index
    %c0_17 = arith.constant 0 : index
    %30 = vector.load %arg8[%c0_15, %c0_16, %c0_17] : memref<2x1x96xf32, #tpu.memory_space<vmem>>, vector<1x1x96xf32>
    %31 = vector.shape_cast %30 : vector<1x1x96xf32> to vector<1x96xf32>
    %32 = vector.broadcast %31 : vector<1x96xf32> to vector<16x96xf32>
    %33 = arith.addf %29, %32 : vector<16x96xf32>
    %34 = vector.extract_strided_slice %33 {offsets = [0, 0], sizes = [16, 32], strides = [1, 1]} : vector<16x96xf32> to vector<16x32xf32>
    %35 = vector.extract_strided_slice %33 {offsets = [0, 32], sizes = [16, 32], strides = [1, 1]} : vector<16x96xf32> to vector<16x32xf32>
    %36 = vector.extract_strided_slice %33 {offsets = [0, 64], sizes = [16, 32], strides = [1, 1]} : vector<16x96xf32> to vector<16x32xf32>
    %37 = vector.extract_strided_slice %34 {offsets = [0, 0], sizes = [16, 8], strides = [1, 1]} : vector<16x32xf32> to vector<16x8xf32>
    %cst_18 = arith.constant 0.353553385 : f32
    %38 = vector.broadcast %cst_18 : f32 to vector<16x8xf32>
    %39 = arith.mulf %37, %38 : vector<16x8xf32>
    %40 = arith.truncf %39 : vector<16x8xf32> to vector<16x8xbf16>
    %41 = vector.extract_strided_slice %35 {offsets = [0, 0], sizes = [16, 8], strides = [1, 1]} : vector<16x32xf32> to vector<16x8xf32>
    %42 = arith.truncf %41 : vector<16x8xf32> to vector<16x8xbf16>
    %cst_19 = arith.constant dense<0.000000e+00> : vector<16x16xf32>
    %43 = tpu.matmul %40, %42, %cst_19 {dimension_numbers = #tpu.dot_dimension_numbers<[1], [1], [0], [0], [0, 0, 1, 0], [], []>} : vector<16x8xbf16>, vector<16x8xbf16>, vector<16x16xf32> -> vector<16x16xf32>
    %44 = arith.addf %43, %25 : vector<16x16xf32>
    %cst_20 = arith.constant dense<0xFF800000> : vector<16xf32>
    %45 = vector.multi_reduction <maximumf>, %44, %cst_20 [1] : vector<16x16xf32> to vector<16xf32>
    %46 = vector.shape_cast %45 : vector<16xf32> to vector<16x1xf32>
    %47 = vector.broadcast %46 : vector<16x1xf32> to vector<16x16xf32>
    %48 = arith.subf %44, %47 : vector<16x16xf32>
    %49 = math.exp %48 : vector<16x16xf32>
    %cst_21 = arith.constant dense<0.000000e+00> : vector<16xf32>
    %50 = vector.multi_reduction <add>, %49, %cst_21 [1] : vector<16x16xf32> to vector<16xf32>
    %51 = vector.shape_cast %50 : vector<16xf32> to vector<16x1xf32>
    %52 = tpu.reciprocal %51 {approx = true} : vector<16x1xf32> -> vector<16x1xf32>
    %53 = vector.broadcast %52 : vector<16x1xf32> to vector<16x16xf32>
    %54 = arith.mulf %49, %53 : vector<16x16xf32>
    %55 = arith.truncf %54 : vector<16x16xf32> to vector<16x16xbf16>
    %56 = vector.extract_strided_slice %36 {offsets = [0, 0], sizes = [16, 8], strides = [1, 1]} : vector<16x32xf32> to vector<16x8xf32>
    %57 = arith.truncf %56 : vector<16x8xf32> to vector<16x8xbf16>
    %cst_22 = arith.constant dense<0.000000e+00> : vector<16x8xf32>
    %58 = tpu.matmul %55, %57, %cst_22 {dimension_numbers = #tpu.dot_dimension_numbers<[1], [0], [0], [1], [0, 0, 1, 1], [], []>} : vector<16x16xbf16>, vector<16x8xbf16>, vector<16x8xf32> -> vector<16x8xf32>
    %59 = vector.extract_strided_slice %34 {offsets = [0, 8], sizes = [16, 8], strides = [1, 1]} : vector<16x32xf32> to vector<16x8xf32>
    %cst_23 = arith.constant 0.353553385 : f32
    %60 = vector.broadcast %cst_23 : f32 to vector<16x8xf32>
    %61 = arith.mulf %59, %60 : vector<16x8xf32>
    %62 = arith.truncf %61 : vector<16x8xf32> to vector<16x8xbf16>
    %63 = vector.extract_strided_slice %35 {offsets = [0, 8], sizes = [16, 8], strides = [1, 1]} : vector<16x32xf32> to vector<16x8xf32>
    %64 = arith.truncf %63 : vector<16x8xf32> to vector<16x8xbf16>
    %cst_24 = arith.constant dense<0.000000e+00> : vector<16x16xf32>
    %65 = tpu.matmul %62, %64, %cst_24 {dimension_numbers = #tpu.dot_dimension_numbers<[1], [1], [0], [0], [0, 0, 1, 0], [], []>} : vector<16x8xbf16>, vector<16x8xbf16>, vector<16x16xf32> -> vector<16x16xf32>
    %66 = arith.addf %65, %25 : vector<16x16xf32>
    %cst_25 = arith.constant dense<0xFF800000> : vector<16xf32>
    %67 = vector.multi_reduction <maximumf>, %66, %cst_25 [1] : vector<16x16xf32> to vector<16xf32>
    %68 = vector.shape_cast %67 : vector<16xf32> to vector<16x1xf32>
    %69 = vector.broadcast %68 : vector<16x1xf32> to vector<16x16xf32>
    %70 = arith.subf %66, %69 : vector<16x16xf32>
    %71 = math.exp %70 : vector<16x16xf32>
    %cst_26 = arith.constant dense<0.000000e+00> : vector<16xf32>
    %72 = vector.multi_reduction <add>, %71, %cst_26 [1] : vector<16x16xf32> to vector<16xf32>
    %73 = vector.shape_cast %72 : vector<16xf32> to vector<16x1xf32>
    %74 = tpu.reciprocal %73 {approx = true} : vector<16x1xf32> -> vector<16x1xf32>
    %75 = vector.broadcast %74 : vector<16x1xf32> to vector<16x16xf32>
    %76 = arith.mulf %71, %75 : vector<16x16xf32>
    %77 = arith.truncf %76 : vector<16x16xf32> to vector<16x16xbf16>
    %78 = vector.extract_strided_slice %36 {offsets = [0, 8], sizes = [16, 8], strides = [1, 1]} : vector<16x32xf32> to vector<16x8xf32>
    %79 = arith.truncf %78 : vector<16x8xf32> to vector<16x8xbf16>
    %cst_27 = arith.constant dense<0.000000e+00> : vector<16x8xf32>
    %80 = tpu.matmul %77, %79, %cst_27 {dimension_numbers = #tpu.dot_dimension_numbers<[1], [0], [0], [1], [0, 0, 1, 1], [], []>} : vector<16x16xbf16>, vector<16x8xbf16>, vector<16x8xf32> -> vector<16x8xf32>
    %81 = vector.extract_strided_slice %34 {offsets = [0, 16], sizes = [16, 8], strides = [1, 1]} : vector<16x32xf32> to vector<16x8xf32>
    %cst_28 = arith.constant 0.353553385 : f32
    %82 = vector.broadcast %cst_28 : f32 to vector<16x8xf32>
    %83 = arith.mulf %81, %82 : vector<16x8xf32>
    %84 = arith.truncf %83 : vector<16x8xf32> to vector<16x8xbf16>
    %85 = vector.extract_strided_slice %35 {offsets = [0, 16], sizes = [16, 8], strides = [1, 1]} : vector<16x32xf32> to vector<16x8xf32>
    %86 = arith.truncf %85 : vector<16x8xf32> to vector<16x8xbf16>
    %cst_29 = arith.constant dense<0.000000e+00> : vector<16x16xf32>
    %87 = tpu.matmul %84, %86, %cst_29 {dimension_numbers = #tpu.dot_dimension_numbers<[1], [1], [0], [0], [0, 0, 1, 0], [], []>} : vector<16x8xbf16>, vector<16x8xbf16>, vector<16x16xf32> -> vector<16x16xf32>
    %88 = arith.addf %87, %25 : vector<16x16xf32>
    %cst_30 = arith.constant dense<0xFF800000> : vector<16xf32>
    %89 = vector.multi_reduction <maximumf>, %88, %cst_30 [1] : vector<16x16xf32> to vector<16xf32>
    %90 = vector.shape_cast %89 : vector<16xf32> to vector<16x1xf32>
    %91 = vector.broadcast %90 : vector<16x1xf32> to vector<16x16xf32>
    %92 = arith.subf %88, %91 : vector<16x16xf32>
    %93 = math.exp %92 : vector<16x16xf32>
    %cst_31 = arith.constant dense<0.000000e+00> : vector<16xf32>
    %94 = vector.multi_reduction <add>, %93, %cst_31 [1] : vector<16x16xf32> to vector<16xf32>
    %95 = vector.shape_cast %94 : vector<16xf32> to vector<16x1xf32>
    %96 = tpu.reciprocal %95 {approx = true} : vector<16x1xf32> -> vector<16x1xf32>
    %97 = vector.broadcast %96 : vector<16x1xf32> to vector<16x16xf32>
    %98 = arith.mulf %93, %97 : vector<16x16xf32>
    %99 = arith.truncf %98 : vector<16x16xf32> to vector<16x16xbf16>
    %100 = vector.extract_strided_slice %36 {offsets = [0, 16], sizes = [16, 8], strides = [1, 1]} : vector<16x32xf32> to vector<16x8xf32>
    %101 = arith.truncf %100 : vector<16x8xf32> to vector<16x8xbf16>
    %cst_32 = arith.constant dense<0.000000e+00> : vector<16x8xf32>
    %102 = tpu.matmul %99, %101, %cst_32 {dimension_numbers = #tpu.dot_dimension_numbers<[1], [0], [0], [1], [0, 0, 1, 1], [], []>} : vector<16x16xbf16>, vector<16x8xbf16>, vector<16x8xf32> -> vector<16x8xf32>
    %103 = vector.extract_strided_slice %34 {offsets = [0, 24], sizes = [16, 8], strides = [1, 1]} : vector<16x32xf32> to vector<16x8xf32>
    %cst_33 = arith.constant 0.353553385 : f32
    %104 = vector.broadcast %cst_33 : f32 to vector<16x8xf32>
    %105 = arith.mulf %103, %104 : vector<16x8xf32>
    %106 = arith.truncf %105 : vector<16x8xf32> to vector<16x8xbf16>
    %107 = vector.extract_strided_slice %35 {offsets = [0, 24], sizes = [16, 8], strides = [1, 1]} : vector<16x32xf32> to vector<16x8xf32>
    %108 = arith.truncf %107 : vector<16x8xf32> to vector<16x8xbf16>
    %cst_34 = arith.constant dense<0.000000e+00> : vector<16x16xf32>
    %109 = tpu.matmul %106, %108, %cst_34 {dimension_numbers = #tpu.dot_dimension_numbers<[1], [1], [0], [0], [0, 0, 1, 0], [], []>} : vector<16x8xbf16>, vector<16x8xbf16>, vector<16x16xf32> -> vector<16x16xf32>
    %110 = arith.addf %109, %25 : vector<16x16xf32>
    %cst_35 = arith.constant dense<0xFF800000> : vector<16xf32>
    %111 = vector.multi_reduction <maximumf>, %110, %cst_35 [1] : vector<16x16xf32> to vector<16xf32>
    %112 = vector.shape_cast %111 : vector<16xf32> to vector<16x1xf32>
    %113 = vector.broadcast %112 : vector<16x1xf32> to vector<16x16xf32>
    %114 = arith.subf %110, %113 : vector<16x16xf32>
    %115 = math.exp %114 : vector<16x16xf32>
    %cst_36 = arith.constant dense<0.000000e+00> : vector<16xf32>
    %116 = vector.multi_reduction <add>, %115, %cst_36 [1] : vector<16x16xf32> to vector<16xf32>
    %117 = vector.shape_cast %116 : vector<16xf32> to vector<16x1xf32>
    %118 = tpu.reciprocal %117 {approx = true} : vector<16x1xf32> -> vector<16x1xf32>
    %119 = vector.broadcast %118 : vector<16x1xf32> to vector<16x16xf32>
    %120 = arith.mulf %115, %119 : vector<16x16xf32>
    %121 = arith.truncf %120 : vector<16x16xf32> to vector<16x16xbf16>
    %122 = vector.extract_strided_slice %36 {offsets = [0, 24], sizes = [16, 8], strides = [1, 1]} : vector<16x32xf32> to vector<16x8xf32>
    %123 = arith.truncf %122 : vector<16x8xf32> to vector<16x8xbf16>
    %cst_37 = arith.constant dense<0.000000e+00> : vector<16x8xf32>
    %124 = tpu.matmul %121, %123, %cst_37 {dimension_numbers = #tpu.dot_dimension_numbers<[1], [0], [0], [1], [0, 0, 1, 1], [], []>} : vector<16x16xbf16>, vector<16x8xbf16>, vector<16x8xf32> -> vector<16x8xf32>
    %125 = tpu.concatenate %58, %80, %102, %124 in 1 : vector<16x8xf32>, vector<16x8xf32>, vector<16x8xf32>, vector<16x8xf32> -> vector<16x32xf32>
    %126 = arith.truncf %125 : vector<16x32xf32> to vector<16x32xbf16>
    %c0_38 = arith.constant 0 : index
    %c0_39 = arith.constant 0 : index
    %c0_40 = arith.constant 0 : index
    %127 = vector.load %arg9[%c0_38, %c0_39, %c0_40] : memref<2x32x32xbf16, #tpu.memory_space<vmem>>, vector<1x32x32xbf16>
    %128 = vector.shape_cast %127 : vector<1x32x32xbf16> to vector<32x32xbf16>
    %cst_41 = arith.constant dense<0.000000e+00> : vector<16x32xf32>
    %129 = tpu.matmul %126, %128, %cst_41 {dimension_numbers = #tpu.dot_dimension_numbers<[1], [0], [0], [1], [0, 0, 1, 1], [], []>} : vector<16x32xbf16>, vector<32x32xbf16>, vector<16x32xf32> -> vector<16x32xf32>
    %c0_42 = arith.constant 0 : index
    %c0_43 = arith.constant 0 : index
    %c0_44 = arith.constant 0 : index
    %130 = vector.load %arg10[%c0_42, %c0_43, %c0_44] : memref<2x1x32xf32, #tpu.memory_space<vmem>>, vector<1x1x32xf32>
    %131 = vector.shape_cast %130 : vector<1x1x32xf32> to vector<1x32xf32>
    %132 = vector.broadcast %131 : vector<1x32xf32> to vector<16x32xf32>
    %133 = arith.addf %129, %132 : vector<16x32xf32>
    %134 = arith.addf %133, %24 : vector<16x32xf32>
    %c0_45 = arith.constant 0 : index
    %c0_46 = arith.constant 0 : index
    %c0_47 = arith.constant 0 : index
    %135 = vector.load %arg11[%c0_45, %c0_46, %c0_47] : memref<2x1x32xf32, #tpu.memory_space<vmem>>, vector<1x1x32xf32>
    %136 = vector.shape_cast %135 : vector<1x1x32xf32> to vector<1x32xf32>
    %c0_48 = arith.constant 0 : index
    %c0_49 = arith.constant 0 : index
    %c0_50 = arith.constant 0 : index
    %137 = vector.load %arg12[%c0_48, %c0_49, %c0_50] : memref<2x1x32xf32, #tpu.memory_space<vmem>>, vector<1x1x32xf32>
    %138 = vector.shape_cast %137 : vector<1x1x32xf32> to vector<1x32xf32>
    %cst_51 = arith.constant dense<0.000000e+00> : vector<16xf32>
    %139 = vector.multi_reduction <add>, %134, %cst_51 [1] : vector<16x32xf32> to vector<16xf32>
    %140 = vector.shape_cast %139 : vector<16xf32> to vector<16x1xf32>
    %cst_52 = arith.constant 3.200000e+01 : f32
    %141 = vector.broadcast %cst_52 : f32 to vector<16x1xf32>
    %142 = arith.divf %140, %141 : vector<16x1xf32>
    %143 = vector.broadcast %142 : vector<16x1xf32> to vector<16x32xf32>
    %144 = arith.subf %134, %143 : vector<16x32xf32>
    %145 = arith.mulf %144, %144 : vector<16x32xf32>
    %cst_53 = arith.constant dense<0.000000e+00> : vector<16xf32>
    %146 = vector.multi_reduction <add>, %145, %cst_53 [1] : vector<16x32xf32> to vector<16xf32>
    %147 = vector.shape_cast %146 : vector<16xf32> to vector<16x1xf32>
    %cst_54 = arith.constant 3.200000e+01 : f32
    %148 = vector.broadcast %cst_54 : f32 to vector<16x1xf32>
    %149 = arith.divf %147, %148 : vector<16x1xf32>
    %150 = vector.broadcast %142 : vector<16x1xf32> to vector<16x32xf32>
    %151 = arith.subf %134, %150 : vector<16x32xf32>
    %cst_55 = arith.constant 9.99999996E-13 : f32
    %152 = vector.broadcast %cst_55 : f32 to vector<16x1xf32>
    %153 = arith.addf %149, %152 : vector<16x1xf32>
    %154 = math.rsqrt %153 : vector<16x1xf32>
    %155 = vector.broadcast %154 : vector<16x1xf32> to vector<16x32xf32>
    %156 = arith.mulf %151, %155 : vector<16x32xf32>
    %157 = vector.broadcast %136 : vector<1x32xf32> to vector<16x32xf32>
    %158 = arith.mulf %156, %157 : vector<16x32xf32>
    %159 = vector.broadcast %138 : vector<1x32xf32> to vector<16x32xf32>
    %160 = arith.addf %158, %159 : vector<16x32xf32>
    %161 = arith.truncf %160 : vector<16x32xf32> to vector<16x32xbf16>
    %c0_56 = arith.constant 0 : index
    %c0_57 = arith.constant 0 : index
    %c0_58 = arith.constant 0 : index
    %162 = vector.load %arg13[%c0_56, %c0_57, %c0_58] : memref<2x32x64xbf16, #tpu.memory_space<vmem>>, vector<1x32x64xbf16>
    %163 = vector.shape_cast %162 : vector<1x32x64xbf16> to vector<32x64xbf16>
    %cst_59 = arith.constant dense<0.000000e+00> : vector<16x64xf32>
    %164 = tpu.matmul %161, %163, %cst_59 {dimension_numbers = #tpu.dot_dimension_numbers<[1], [0], [0], [1], [0, 0, 1, 1], [], []>} : vector<16x32xbf16>, vector<32x64xbf16>, vector<16x64xf32> -> vector<16x64xf32>
    %c0_60 = arith.constant 0 : index
    %c0_61 = arith.constant 0 : index
    %c0_62 = arith.constant 0 : index
    %165 = vector.load %arg14[%c0_60, %c0_61, %c0_62] : memref<2x1x64xf32, #tpu.memory_space<vmem>>, vector<1x1x64xf32>
    %166 = vector.shape_cast %165 : vector<1x1x64xf32> to vector<1x64xf32>
    %167 = vector.broadcast %166 : vector<1x64xf32> to vector<16x64xf32>
    %168 = arith.addf %164, %167 : vector<16x64xf32>
    %cst_63 = arith.constant 5.000000e-01 : f32
    %169 = vector.broadcast %cst_63 : f32 to vector<16x64xf32>
    %170 = arith.mulf %169, %168 : vector<16x64xf32>
    %cst_64 = arith.constant 0.707106769 : f32
    %171 = vector.broadcast %cst_64 : f32 to vector<16x64xf32>
    %172 = arith.mulf %168, %171 : vector<16x64xf32>
    %173 = math.erf %172 : vector<16x64xf32>
    %cst_65 = arith.constant 1.000000e+00 : f32
    %174 = vector.broadcast %cst_65 : f32 to vector<16x64xf32>
    %175 = arith.addf %174, %173 : vector<16x64xf32>
    %176 = arith.mulf %170, %175 : vector<16x64xf32>
    %177 = arith.truncf %176 : vector<16x64xf32> to vector<16x64xbf16>
    %c0_66 = arith.constant 0 : index
    %c0_67 = arith.constant 0 : index
    %c0_68 = arith.constant 0 : index
    %178 = vector.load %arg15[%c0_66, %c0_67, %c0_68] : memref<2x64x32xbf16, #tpu.memory_space<vmem>>, vector<1x64x32xbf16>
    %179 = vector.shape_cast %178 : vector<1x64x32xbf16> to vector<64x32xbf16>
    %cst_69 = arith.constant dense<0.000000e+00> : vector<16x32xf32>
    %180 = tpu.matmul %177, %179, %cst_69 {dimension_numbers = #tpu.dot_dimension_numbers<[1], [0], [0], [1], [0, 0, 1, 1], [], []>} : vector<16x64xbf16>, vector<64x32xbf16>, vector<16x32xf32> -> vector<16x32xf32>
    %c0_70 = arith.constant 0 : index
    %c0_71 = arith.constant 0 : index
    %c0_72 = arith.constant 0 : index
    %181 = vector.load %arg16[%c0_70, %c0_71, %c0_72] : memref<2x1x32xf32, #tpu.memory_space<vmem>>, vector<1x1x32xf32>
    %182 = vector.shape_cast %181 : vector<1x1x32xf32> to vector<1x32xf32>
    %183 = vector.broadcast %182 : vector<1x32xf32> to vector<16x32xf32>
    %184 = arith.addf %180, %183 : vector<16x32xf32>
    %185 = arith.addf %184, %160 : vector<16x32xf32>
    %c0_73 = arith.constant 0 : index
    %c0_74 = arith.constant 0 : index
    %c0_75 = arith.constant 0 : index
    %186 = vector.load %arg17[%c0_73, %c0_74, %c0_75] : memref<2x1x32xf32, #tpu.memory_space<vmem>>, vector<1x1x32xf32>
    %187 = vector.shape_cast %186 : vector<1x1x32xf32> to vector<1x32xf32>
    %c0_76 = arith.constant 0 : index
    %c0_77 = arith.constant 0 : index
    %c0_78 = arith.constant 0 : index
    %188 = vector.load %arg18[%c0_76, %c0_77, %c0_78] : memref<2x1x32xf32, #tpu.memory_space<vmem>>, vector<1x1x32xf32>
    %189 = vector.shape_cast %188 : vector<1x1x32xf32> to vector<1x32xf32>
    %cst_79 = arith.constant dense<0.000000e+00> : vector<16xf32>
    %190 = vector.multi_reduction <add>, %185, %cst_79 [1] : vector<16x32xf32> to vector<16xf32>
    %191 = vector.shape_cast %190 : vector<16xf32> to vector<16x1xf32>
    %cst_80 = arith.constant 3.200000e+01 : f32
    %192 = vector.broadcast %cst_80 : f32 to vector<16x1xf32>
    %193 = arith.divf %191, %192 : vector<16x1xf32>
    %194 = vector.broadcast %193 : vector<16x1xf32> to vector<16x32xf32>
    %195 = arith.subf %185, %194 : vector<16x32xf32>
    %196 = arith.mulf %195, %195 : vector<16x32xf32>
    %cst_81 = arith.constant dense<0.000000e+00> : vector<16xf32>
    %197 = vector.multi_reduction <add>, %196, %cst_81 [1] : vector<16x32xf32> to vector<16xf32>
    %198 = vector.shape_cast %197 : vector<16xf32> to vector<16x1xf32>
    %cst_82 = arith.constant 3.200000e+01 : f32
    %199 = vector.broadcast %cst_82 : f32 to vector<16x1xf32>
    %200 = arith.divf %198, %199 : vector<16x1xf32>
    %201 = vector.broadcast %193 : vector<16x1xf32> to vector<16x32xf32>
    %202 = arith.subf %185, %201 : vector<16x32xf32>
    %cst_83 = arith.constant 9.99999996E-13 : f32
    %203 = vector.broadcast %cst_83 : f32 to vector<16x1xf32>
    %204 = arith.addf %200, %203 : vector<16x1xf32>
    %205 = math.rsqrt %204 : vector<16x1xf32>
    %206 = vector.broadcast %205 : vector<16x1xf32> to vector<16x32xf32>
    %207 = arith.mulf %202, %206 : vector<16x32xf32>
    %208 = vector.broadcast %187 : vector<1x32xf32> to vector<16x32xf32>
    %209 = arith.mulf %207, %208 : vector<16x32xf32>
    %210 = vector.broadcast %189 : vector<1x32xf32> to vector<16x32xf32>
    %211 = arith.addf %209, %210 : vector<16x32xf32>
    %212 = arith.truncf %211 : vector<16x32xf32> to vector<16x32xbf16>
    %c1 = arith.constant 1 : index
    %c0_84 = arith.constant 0 : index
    %c0_85 = arith.constant 0 : index
    %213 = vector.load %arg7[%c1, %c0_84, %c0_85] : memref<2x32x96xbf16, #tpu.memory_space<vmem>>, vector<1x32x96xbf16>
    %214 = vector.shape_cast %213 : vector<1x32x96xbf16> to vector<32x96xbf16>
    %cst_86 = arith.constant dense<0.000000e+00> : vector<16x96xf32>
    %215 = tpu.matmul %212, %214, %cst_86 {dimension_numbers = #tpu.dot_dimension_numbers<[1], [0], [0], [1], [0, 0, 1, 1], [], []>} : vector<16x32xbf16>, vector<32x96xbf16>, vector<16x96xf32> -> vector<16x96xf32>
    %c1_87 = arith.constant 1 : index
    %c0_88 = arith.constant 0 : index
    %c0_89 = arith.constant 0 : index
    %216 = vector.load %arg8[%c1_87, %c0_88, %c0_89] : memref<2x1x96xf32, #tpu.memory_space<vmem>>, vector<1x1x96xf32>
    %217 = vector.shape_cast %216 : vector<1x1x96xf32> to vector<1x96xf32>
    %218 = vector.broadcast %217 : vector<1x96xf32> to vector<16x96xf32>
    %219 = arith.addf %215, %218 : vector<16x96xf32>
    %220 = vector.extract_strided_slice %219 {offsets = [0, 0], sizes = [16, 32], strides = [1, 1]} : vector<16x96xf32> to vector<16x32xf32>
    %221 = vector.extract_strided_slice %219 {offsets = [0, 32], sizes = [16, 32], strides = [1, 1]} : vector<16x96xf32> to vector<16x32xf32>
    %222 = vector.extract_strided_slice %219 {offsets = [0, 64], sizes = [16, 32], strides = [1, 1]} : vector<16x96xf32> to vector<16x32xf32>
    %223 = vector.extract_strided_slice %220 {offsets = [0, 0], sizes = [16, 8], strides = [1, 1]} : vector<16x32xf32> to vector<16x8xf32>
    %cst_90 = arith.constant 0.353553385 : f32
    %224 = vector.broadcast %cst_90 : f32 to vector<16x8xf32>
    %225 = arith.mulf %223, %224 : vector<16x8xf32>
    %226 = arith.truncf %225 : vector<16x8xf32> to vector<16x8xbf16>
    %227 = vector.extract_strided_slice %221 {offsets = [0, 0], sizes = [16, 8], strides = [1, 1]} : vector<16x32xf32> to vector<16x8xf32>
    %228 = arith.truncf %227 : vector<16x8xf32> to vector<16x8xbf16>
    %cst_91 = arith.constant dense<0.000000e+00> : vector<16x16xf32>
    %229 = tpu.matmul %226, %228, %cst_91 {dimension_numbers = #tpu.dot_dimension_numbers<[1], [1], [0], [0], [0, 0, 1, 0], [], []>} : vector<16x8xbf16>, vector<16x8xbf16>, vector<16x16xf32> -> vector<16x16xf32>
    %230 = arith.addf %229, %25 : vector<16x16xf32>
    %cst_92 = arith.constant dense<0xFF800000> : vector<16xf32>
    %231 = vector.multi_reduction <maximumf>, %230, %cst_92 [1] : vector<16x16xf32> to vector<16xf32>
    %232 = vector.shape_cast %231 : vector<16xf32> to vector<16x1xf32>
    %233 = vector.broadcast %232 : vector<16x1xf32> to vector<16x16xf32>
    %234 = arith.subf %230, %233 : vector<16x16xf32>
    %235 = math.exp %234 : vector<16x16xf32>
    %cst_93 = arith.constant dense<0.000000e+00> : vector<16xf32>
    %236 = vector.multi_reduction <add>, %235, %cst_93 [1] : vector<16x16xf32> to vector<16xf32>
    %237 = vector.shape_cast %236 : vector<16xf32> to vector<16x1xf32>
    %238 = tpu.reciprocal %237 {approx = true} : vector<16x1xf32> -> vector<16x1xf32>
    %239 = vector.broadcast %238 : vector<16x1xf32> to vector<16x16xf32>
    %240 = arith.mulf %235, %239 : vector<16x16xf32>
    %241 = arith.truncf %240 : vector<16x16xf32> to vector<16x16xbf16>
    %242 = vector.extract_strided_slice %222 {offsets = [0, 0], sizes = [16, 8], strides = [1, 1]} : vector<16x32xf32> to vector<16x8xf32>
    %243 = arith.truncf %242 : vector<16x8xf32> to vector<16x8xbf16>
    %cst_94 = arith.constant dense<0.000000e+00> : vector<16x8xf32>
    %244 = tpu.matmul %241, %243, %cst_94 {dimension_numbers = #tpu.dot_dimension_numbers<[1], [0], [0], [1], [0, 0, 1, 1], [], []>} : vector<16x16xbf16>, vector<16x8xbf16>, vector<16x8xf32> -> vector<16x8xf32>
    %245 = vector.extract_strided_slice %220 {offsets = [0, 8], sizes = [16, 8], strides = [1, 1]} : vector<16x32xf32> to vector<16x8xf32>
    %cst_95 = arith.constant 0.353553385 : f32
    %246 = vector.broadcast %cst_95 : f32 to vector<16x8xf32>
    %247 = arith.mulf %245, %246 : vector<16x8xf32>
    %248 = arith.truncf %247 : vector<16x8xf32> to vector<16x8xbf16>
    %249 = vector.extract_strided_slice %221 {offsets = [0, 8], sizes = [16, 8], strides = [1, 1]} : vector<16x32xf32> to vector<16x8xf32>
    %250 = arith.truncf %249 : vector<16x8xf32> to vector<16x8xbf16>
    %cst_96 = arith.constant dense<0.000000e+00> : vector<16x16xf32>
    %251 = tpu.matmul %248, %250, %cst_96 {dimension_numbers = #tpu.dot_dimension_numbers<[1], [1], [0], [0], [0, 0, 1, 0], [], []>} : vector<16x8xbf16>, vector<16x8xbf16>, vector<16x16xf32> -> vector<16x16xf32>
    %252 = arith.addf %251, %25 : vector<16x16xf32>
    %cst_97 = arith.constant dense<0xFF800000> : vector<16xf32>
    %253 = vector.multi_reduction <maximumf>, %252, %cst_97 [1] : vector<16x16xf32> to vector<16xf32>
    %254 = vector.shape_cast %253 : vector<16xf32> to vector<16x1xf32>
    %255 = vector.broadcast %254 : vector<16x1xf32> to vector<16x16xf32>
    %256 = arith.subf %252, %255 : vector<16x16xf32>
    %257 = math.exp %256 : vector<16x16xf32>
    %cst_98 = arith.constant dense<0.000000e+00> : vector<16xf32>
    %258 = vector.multi_reduction <add>, %257, %cst_98 [1] : vector<16x16xf32> to vector<16xf32>
    %259 = vector.shape_cast %258 : vector<16xf32> to vector<16x1xf32>
    %260 = tpu.reciprocal %259 {approx = true} : vector<16x1xf32> -> vector<16x1xf32>
    %261 = vector.broadcast %260 : vector<16x1xf32> to vector<16x16xf32>
    %262 = arith.mulf %257, %261 : vector<16x16xf32>
    %263 = arith.truncf %262 : vector<16x16xf32> to vector<16x16xbf16>
    %264 = vector.extract_strided_slice %222 {offsets = [0, 8], sizes = [16, 8], strides = [1, 1]} : vector<16x32xf32> to vector<16x8xf32>
    %265 = arith.truncf %264 : vector<16x8xf32> to vector<16x8xbf16>
    %cst_99 = arith.constant dense<0.000000e+00> : vector<16x8xf32>
    %266 = tpu.matmul %263, %265, %cst_99 {dimension_numbers = #tpu.dot_dimension_numbers<[1], [0], [0], [1], [0, 0, 1, 1], [], []>} : vector<16x16xbf16>, vector<16x8xbf16>, vector<16x8xf32> -> vector<16x8xf32>
    %267 = vector.extract_strided_slice %220 {offsets = [0, 16], sizes = [16, 8], strides = [1, 1]} : vector<16x32xf32> to vector<16x8xf32>
    %cst_100 = arith.constant 0.353553385 : f32
    %268 = vector.broadcast %cst_100 : f32 to vector<16x8xf32>
    %269 = arith.mulf %267, %268 : vector<16x8xf32>
    %270 = arith.truncf %269 : vector<16x8xf32> to vector<16x8xbf16>
    %271 = vector.extract_strided_slice %221 {offsets = [0, 16], sizes = [16, 8], strides = [1, 1]} : vector<16x32xf32> to vector<16x8xf32>
    %272 = arith.truncf %271 : vector<16x8xf32> to vector<16x8xbf16>
    %cst_101 = arith.constant dense<0.000000e+00> : vector<16x16xf32>
    %273 = tpu.matmul %270, %272, %cst_101 {dimension_numbers = #tpu.dot_dimension_numbers<[1], [1], [0], [0], [0, 0, 1, 0], [], []>} : vector<16x8xbf16>, vector<16x8xbf16>, vector<16x16xf32> -> vector<16x16xf32>
    %274 = arith.addf %273, %25 : vector<16x16xf32>
    %cst_102 = arith.constant dense<0xFF800000> : vector<16xf32>
    %275 = vector.multi_reduction <maximumf>, %274, %cst_102 [1] : vector<16x16xf32> to vector<16xf32>
    %276 = vector.shape_cast %275 : vector<16xf32> to vector<16x1xf32>
    %277 = vector.broadcast %276 : vector<16x1xf32> to vector<16x16xf32>
    %278 = arith.subf %274, %277 : vector<16x16xf32>
    %279 = math.exp %278 : vector<16x16xf32>
    %cst_103 = arith.constant dense<0.000000e+00> : vector<16xf32>
    %280 = vector.multi_reduction <add>, %279, %cst_103 [1] : vector<16x16xf32> to vector<16xf32>
    %281 = vector.shape_cast %280 : vector<16xf32> to vector<16x1xf32>
    %282 = tpu.reciprocal %281 {approx = true} : vector<16x1xf32> -> vector<16x1xf32>
    %283 = vector.broadcast %282 : vector<16x1xf32> to vector<16x16xf32>
    %284 = arith.mulf %279, %283 : vector<16x16xf32>
    %285 = arith.truncf %284 : vector<16x16xf32> to vector<16x16xbf16>
    %286 = vector.extract_strided_slice %222 {offsets = [0, 16], sizes = [16, 8], strides = [1, 1]} : vector<16x32xf32> to vector<16x8xf32>
    %287 = arith.truncf %286 : vector<16x8xf32> to vector<16x8xbf16>
    %cst_104 = arith.constant dense<0.000000e+00> : vector<16x8xf32>
    %288 = tpu.matmul %285, %287, %cst_104 {dimension_numbers = #tpu.dot_dimension_numbers<[1], [0], [0], [1], [0, 0, 1, 1], [], []>} : vector<16x16xbf16>, vector<16x8xbf16>, vector<16x8xf32> -> vector<16x8xf32>
    %289 = vector.extract_strided_slice %220 {offsets = [0, 24], sizes = [16, 8], strides = [1, 1]} : vector<16x32xf32> to vector<16x8xf32>
    %cst_105 = arith.constant 0.353553385 : f32
    %290 = vector.broadcast %cst_105 : f32 to vector<16x8xf32>
    %291 = arith.mulf %289, %290 : vector<16x8xf32>
    %292 = arith.truncf %291 : vector<16x8xf32> to vector<16x8xbf16>
    %293 = vector.extract_strided_slice %221 {offsets = [0, 24], sizes = [16, 8], strides = [1, 1]} : vector<16x32xf32> to vector<16x8xf32>
    %294 = arith.truncf %293 : vector<16x8xf32> to vector<16x8xbf16>
    %cst_106 = arith.constant dense<0.000000e+00> : vector<16x16xf32>
    %295 = tpu.matmul %292, %294, %cst_106 {dimension_numbers = #tpu.dot_dimension_numbers<[1], [1], [0], [0], [0, 0, 1, 0], [], []>} : vector<16x8xbf16>, vector<16x8xbf16>, vector<16x16xf32> -> vector<16x16xf32>
    %296 = arith.addf %295, %25 : vector<16x16xf32>
    %cst_107 = arith.constant dense<0xFF800000> : vector<16xf32>
    %297 = vector.multi_reduction <maximumf>, %296, %cst_107 [1] : vector<16x16xf32> to vector<16xf32>
    %298 = vector.shape_cast %297 : vector<16xf32> to vector<16x1xf32>
    %299 = vector.broadcast %298 : vector<16x1xf32> to vector<16x16xf32>
    %300 = arith.subf %296, %299 : vector<16x16xf32>
    %301 = math.exp %300 : vector<16x16xf32>
    %cst_108 = arith.constant dense<0.000000e+00> : vector<16xf32>
    %302 = vector.multi_reduction <add>, %301, %cst_108 [1] : vector<16x16xf32> to vector<16xf32>
    %303 = vector.shape_cast %302 : vector<16xf32> to vector<16x1xf32>
    %304 = tpu.reciprocal %303 {approx = true} : vector<16x1xf32> -> vector<16x1xf32>
    %305 = vector.broadcast %304 : vector<16x1xf32> to vector<16x16xf32>
    %306 = arith.mulf %301, %305 : vector<16x16xf32>
    %307 = arith.truncf %306 : vector<16x16xf32> to vector<16x16xbf16>
    %308 = vector.extract_strided_slice %222 {offsets = [0, 24], sizes = [16, 8], strides = [1, 1]} : vector<16x32xf32> to vector<16x8xf32>
    %309 = arith.truncf %308 : vector<16x8xf32> to vector<16x8xbf16>
    %cst_109 = arith.constant dense<0.000000e+00> : vector<16x8xf32>
    %310 = tpu.matmul %307, %309, %cst_109 {dimension_numbers = #tpu.dot_dimension_numbers<[1], [0], [0], [1], [0, 0, 1, 1], [], []>} : vector<16x16xbf16>, vector<16x8xbf16>, vector<16x8xf32> -> vector<16x8xf32>
    %311 = tpu.concatenate %244, %266, %288, %310 in 1 : vector<16x8xf32>, vector<16x8xf32>, vector<16x8xf32>, vector<16x8xf32> -> vector<16x32xf32>
    %312 = arith.truncf %311 : vector<16x32xf32> to vector<16x32xbf16>
    %c1_110 = arith.constant 1 : index
    %c0_111 = arith.constant 0 : index
    %c0_112 = arith.constant 0 : index
    %313 = vector.load %arg9[%c1_110, %c0_111, %c0_112] : memref<2x32x32xbf16, #tpu.memory_space<vmem>>, vector<1x32x32xbf16>
    %314 = vector.shape_cast %313 : vector<1x32x32xbf16> to vector<32x32xbf16>
    %cst_113 = arith.constant dense<0.000000e+00> : vector<16x32xf32>
    %315 = tpu.matmul %312, %314, %cst_113 {dimension_numbers = #tpu.dot_dimension_numbers<[1], [0], [0], [1], [0, 0, 1, 1], [], []>} : vector<16x32xbf16>, vector<32x32xbf16>, vector<16x32xf32> -> vector<16x32xf32>
    %c1_114 = arith.constant 1 : index
    %c0_115 = arith.constant 0 : index
    %c0_116 = arith.constant 0 : index
    %316 = vector.load %arg10[%c1_114, %c0_115, %c0_116] : memref<2x1x32xf32, #tpu.memory_space<vmem>>, vector<1x1x32xf32>
    %317 = vector.shape_cast %316 : vector<1x1x32xf32> to vector<1x32xf32>
    %318 = vector.broadcast %317 : vector<1x32xf32> to vector<16x32xf32>
    %319 = arith.addf %315, %318 : vector<16x32xf32>
    %320 = arith.addf %319, %211 : vector<16x32xf32>
    %c1_117 = arith.constant 1 : index
    %c0_118 = arith.constant 0 : index
    %c0_119 = arith.constant 0 : index
    %321 = vector.load %arg11[%c1_117, %c0_118, %c0_119] : memref<2x1x32xf32, #tpu.memory_space<vmem>>, vector<1x1x32xf32>
    %322 = vector.shape_cast %321 : vector<1x1x32xf32> to vector<1x32xf32>
    %c1_120 = arith.constant 1 : index
    %c0_121 = arith.constant 0 : index
    %c0_122 = arith.constant 0 : index
    %323 = vector.load %arg12[%c1_120, %c0_121, %c0_122] : memref<2x1x32xf32, #tpu.memory_space<vmem>>, vector<1x1x32xf32>
    %324 = vector.shape_cast %323 : vector<1x1x32xf32> to vector<1x32xf32>
    %cst_123 = arith.constant dense<0.000000e+00> : vector<16xf32>
    %325 = vector.multi_reduction <add>, %320, %cst_123 [1] : vector<16x32xf32> to vector<16xf32>
    %326 = vector.shape_cast %325 : vector<16xf32> to vector<16x1xf32>
    %cst_124 = arith.constant 3.200000e+01 : f32
    %327 = vector.broadcast %cst_124 : f32 to vector<16x1xf32>
    %328 = arith.divf %326, %327 : vector<16x1xf32>
    %329 = vector.broadcast %328 : vector<16x1xf32> to vector<16x32xf32>
    %330 = arith.subf %320, %329 : vector<16x32xf32>
    %331 = arith.mulf %330, %330 : vector<16x32xf32>
    %cst_125 = arith.constant dense<0.000000e+00> : vector<16xf32>
    %332 = vector.multi_reduction <add>, %331, %cst_125 [1] : vector<16x32xf32> to vector<16xf32>
    %333 = vector.shape_cast %332 : vector<16xf32> to vector<16x1xf32>
    %cst_126 = arith.constant 3.200000e+01 : f32
    %334 = vector.broadcast %cst_126 : f32 to vector<16x1xf32>
    %335 = arith.divf %333, %334 : vector<16x1xf32>
    %336 = vector.broadcast %328 : vector<16x1xf32> to vector<16x32xf32>
    %337 = arith.subf %320, %336 : vector<16x32xf32>
    %cst_127 = arith.constant 9.99999996E-13 : f32
    %338 = vector.broadcast %cst_127 : f32 to vector<16x1xf32>
    %339 = arith.addf %335, %338 : vector<16x1xf32>
    %340 = math.rsqrt %339 : vector<16x1xf32>
    %341 = vector.broadcast %340 : vector<16x1xf32> to vector<16x32xf32>
    %342 = arith.mulf %337, %341 : vector<16x32xf32>
    %343 = vector.broadcast %322 : vector<1x32xf32> to vector<16x32xf32>
    %344 = arith.mulf %342, %343 : vector<16x32xf32>
    %345 = vector.broadcast %324 : vector<1x32xf32> to vector<16x32xf32>
    %346 = arith.addf %344, %345 : vector<16x32xf32>
    %347 = arith.truncf %346 : vector<16x32xf32> to vector<16x32xbf16>
    %c1_128 = arith.constant 1 : index
    %c0_129 = arith.constant 0 : index
    %c0_130 = arith.constant 0 : index
    %348 = vector.load %arg13[%c1_128, %c0_129, %c0_130] : memref<2x32x64xbf16, #tpu.memory_space<vmem>>, vector<1x32x64xbf16>
    %349 = vector.shape_cast %348 : vector<1x32x64xbf16> to vector<32x64xbf16>
    %cst_131 = arith.constant dense<0.000000e+00> : vector<16x64xf32>
    %350 = tpu.matmul %347, %349, %cst_131 {dimension_numbers = #tpu.dot_dimension_numbers<[1], [0], [0], [1], [0, 0, 1, 1], [], []>} : vector<16x32xbf16>, vector<32x64xbf16>, vector<16x64xf32> -> vector<16x64xf32>
    %c1_132 = arith.constant 1 : index
    %c0_133 = arith.constant 0 : index
    %c0_134 = arith.constant 0 : index
    %351 = vector.load %arg14[%c1_132, %c0_133, %c0_134] : memref<2x1x64xf32, #tpu.memory_space<vmem>>, vector<1x1x64xf32>
    %352 = vector.shape_cast %351 : vector<1x1x64xf32> to vector<1x64xf32>
    %353 = vector.broadcast %352 : vector<1x64xf32> to vector<16x64xf32>
    %354 = arith.addf %350, %353 : vector<16x64xf32>
    %cst_135 = arith.constant 5.000000e-01 : f32
    %355 = vector.broadcast %cst_135 : f32 to vector<16x64xf32>
    %356 = arith.mulf %355, %354 : vector<16x64xf32>
    %cst_136 = arith.constant 0.707106769 : f32
    %357 = vector.broadcast %cst_136 : f32 to vector<16x64xf32>
    %358 = arith.mulf %354, %357 : vector<16x64xf32>
    %359 = math.erf %358 : vector<16x64xf32>
    %cst_137 = arith.constant 1.000000e+00 : f32
    %360 = vector.broadcast %cst_137 : f32 to vector<16x64xf32>
    %361 = arith.addf %360, %359 : vector<16x64xf32>
    %362 = arith.mulf %356, %361 : vector<16x64xf32>
    %363 = arith.truncf %362 : vector<16x64xf32> to vector<16x64xbf16>
    %c1_138 = arith.constant 1 : index
    %c0_139 = arith.constant 0 : index
    %c0_140 = arith.constant 0 : index
    %364 = vector.load %arg15[%c1_138, %c0_139, %c0_140] : memref<2x64x32xbf16, #tpu.memory_space<vmem>>, vector<1x64x32xbf16>
    %365 = vector.shape_cast %364 : vector<1x64x32xbf16> to vector<64x32xbf16>
    %cst_141 = arith.constant dense<0.000000e+00> : vector<16x32xf32>
    %366 = tpu.matmul %363, %365, %cst_141 {dimension_numbers = #tpu.dot_dimension_numbers<[1], [0], [0], [1], [0, 0, 1, 1], [], []>} : vector<16x64xbf16>, vector<64x32xbf16>, vector<16x32xf32> -> vector<16x32xf32>
    %c1_142 = arith.constant 1 : index
    %c0_143 = arith.constant 0 : index
    %c0_144 = arith.constant 0 : index
    %367 = vector.load %arg16[%c1_142, %c0_143, %c0_144] : memref<2x1x32xf32, #tpu.memory_space<vmem>>, vector<1x1x32xf32>
    %368 = vector.shape_cast %367 : vector<1x1x32xf32> to vector<1x32xf32>
    %369 = vector.broadcast %368 : vector<1x32xf32> to vector<16x32xf32>
    %370 = arith.addf %366, %369 : vector<16x32xf32>
    %371 = arith.addf %370, %346 : vector<16x32xf32>
    %c1_145 = arith.constant 1 : index
    %c0_146 = arith.constant 0 : index
    %c0_147 = arith.constant 0 : index
    %372 = vector.load %arg17[%c1_145, %c0_146, %c0_147] : memref<2x1x32xf32, #tpu.memory_space<vmem>>, vector<1x1x32xf32>
    %373 = vector.shape_cast %372 : vector<1x1x32xf32> to vector<1x32xf32>
    %c1_148 = arith.constant 1 : index
    %c0_149 = arith.constant 0 : index
    %c0_150 = arith.constant 0 : index
    %374 = vector.load %arg18[%c1_148, %c0_149, %c0_150] : memref<2x1x32xf32, #tpu.memory_space<vmem>>, vector<1x1x32xf32>
    %375 = vector.shape_cast %374 : vector<1x1x32xf32> to vector<1x32xf32>
    %cst_151 = arith.constant dense<0.000000e+00> : vector<16xf32>
    %376 = vector.multi_reduction <add>, %371, %cst_151 [1] : vector<16x32xf32> to vector<16xf32>
    %377 = vector.shape_cast %376 : vector<16xf32> to vector<16x1xf32>
    %cst_152 = arith.constant 3.200000e+01 : f32
    %378 = vector.broadcast %cst_152 : f32 to vector<16x1xf32>
    %379 = arith.divf %377, %378 : vector<16x1xf32>
    %380 = vector.broadcast %379 : vector<16x1xf32> to vector<16x32xf32>
    %381 = arith.subf %371, %380 : vector<16x32xf32>
    %382 = arith.mulf %381, %381 : vector<16x32xf32>
    %cst_153 = arith.constant dense<0.000000e+00> : vector<16xf32>
    %383 = vector.multi_reduction <add>, %382, %cst_153 [1] : vector<16x32xf32> to vector<16xf32>
    %384 = vector.shape_cast %383 : vector<16xf32> to vector<16x1xf32>
    %cst_154 = arith.constant 3.200000e+01 : f32
    %385 = vector.broadcast %cst_154 : f32 to vector<16x1xf32>
    %386 = arith.divf %384, %385 : vector<16x1xf32>
    %387 = vector.broadcast %379 : vector<16x1xf32> to vector<16x32xf32>
    %388 = arith.subf %371, %387 : vector<16x32xf32>
    %cst_155 = arith.constant 9.99999996E-13 : f32
    %389 = vector.broadcast %cst_155 : f32 to vector<16x1xf32>
    %390 = arith.addf %386, %389 : vector<16x1xf32>
    %391 = math.rsqrt %390 : vector<16x1xf32>
    %392 = vector.broadcast %391 : vector<16x1xf32> to vector<16x32xf32>
    %393 = arith.mulf %388, %392 : vector<16x32xf32>
    %394 = vector.broadcast %373 : vector<1x32xf32> to vector<16x32xf32>
    %395 = arith.mulf %393, %394 : vector<16x32xf32>
    %396 = vector.broadcast %375 : vector<1x32xf32> to vector<16x32xf32>
    %397 = arith.addf %395, %396 : vector<16x32xf32>
    %c0_156 = arith.constant 0 : index
    %c0_157 = arith.constant 0 : index
    %398 = vector.load %arg3[%c0_156, %c0_157] : memref<16x1xf32, #tpu.memory_space<vmem>>, vector<16x1xf32>
    %399 = arith.truncf %397 : vector<16x32xf32> to vector<16x32xbf16>
    %c0_158 = arith.constant 0 : index
    %c0_159 = arith.constant 0 : index
    %400 = vector.load %arg19[%c0_158, %c0_159] : memref<32x32xbf16, #tpu.memory_space<vmem>>, vector<32x32xbf16>
    %cst_160 = arith.constant dense<0.000000e+00> : vector<16x32xf32>
    %401 = tpu.matmul %399, %400, %cst_160 {dimension_numbers = #tpu.dot_dimension_numbers<[1], [0], [0], [1], [0, 0, 1, 1], [], []>} : vector<16x32xbf16>, vector<32x32xbf16>, vector<16x32xf32> -> vector<16x32xf32>
    %c0_161 = arith.constant 0 : index
    %c0_162 = arith.constant 0 : index
    %402 = vector.load %arg20[%c0_161, %c0_162] : memref<1x32xf32, #tpu.memory_space<vmem>>, vector<1x32xf32>
    %403 = vector.broadcast %402 : vector<1x32xf32> to vector<16x32xf32>
    %404 = arith.addf %401, %403 : vector<16x32xf32>
    %cst_163 = arith.constant 0.000000e+00 : f32
    %405 = vector.broadcast %cst_163 : f32 to vector<16x32xf32>
    %406 = arith.maximumf %404, %405 : vector<16x32xf32>
    %407 = arith.truncf %406 : vector<16x32xf32> to vector<16x32xbf16>
    %c0_164 = arith.constant 0 : index
    %c0_165 = arith.constant 0 : index
    %408 = vector.load %arg21[%c0_164, %c0_165] : memref<32x2xbf16, #tpu.memory_space<vmem>>, vector<32x2xbf16>
    %cst_166 = arith.constant dense<0.000000e+00> : vector<16x2xf32>
    %409 = tpu.matmul %407, %408, %cst_166 {dimension_numbers = #tpu.dot_dimension_numbers<[1], [0], [0], [1], [0, 0, 1, 1], [], []>} : vector<16x32xbf16>, vector<32x2xbf16>, vector<16x2xf32> -> vector<16x2xf32>
    %c0_167 = arith.constant 0 : index
    %c0_168 = arith.constant 0 : index
    %410 = vector.load %arg22[%c0_167, %c0_168] : memref<1x2xf32, #tpu.memory_space<vmem>>, vector<1x2xf32>
    %411 = vector.broadcast %410 : vector<1x2xf32> to vector<16x2xf32>
    %412 = arith.addf %409, %411 : vector<16x2xf32>
    %cst_169 = arith.constant dense<0xFF800000> : vector<16xf32>
    %413 = vector.multi_reduction <maximumf>, %412, %cst_169 [1] : vector<16x2xf32> to vector<16xf32>
    %414 = vector.shape_cast %413 : vector<16xf32> to vector<16x1xf32>
    %415 = vector.broadcast %414 : vector<16x1xf32> to vector<16x2xf32>
    %416 = arith.cmpf oge, %412, %415 : vector<16x2xf32>
    %417 = arith.extui %416 : vector<16x2xi1> to vector<16x2xi32>
    %418 = arith.sitofp %417 : vector<16x2xi32> to vector<16x2xf32>
    %419 = tpu.iota {dimensions = array<i32: 1>} : vector<16x2xi32>
    %c1_i32 = arith.constant 1 : i32
    %420 = vector.broadcast %c1_i32 : i32 to vector<16x2xi32>
    %421 = arith.cmpi eq, %419, %420 : vector<16x2xi32>
    %422 = arith.extui %421 : vector<16x2xi1> to vector<16x2xi32>
    %423 = arith.sitofp %422 : vector<16x2xi32> to vector<16x2xf32>
    %424 = vector.broadcast %398 : vector<16x1xf32> to vector<16x2xf32>
    %425 = arith.mulf %418, %424 : vector<16x2xf32>
    %cst_170 = arith.constant 1.000000e+00 : f32
    %426 = vector.broadcast %cst_170 : f32 to vector<16x1xf32>
    %427 = arith.subf %426, %398 : vector<16x1xf32>
    %428 = vector.broadcast %427 : vector<16x1xf32> to vector<16x2xf32>
    %429 = arith.mulf %428, %423 : vector<16x2xf32>
    %430 = arith.addf %425, %429 : vector<16x2xf32>
    %c0_171 = arith.constant 0 : index
    %c0_172 = arith.constant 0 : index
    %431 = vector.load %arg38[%c0_171, %c0_172] : memref<16x2xf32, #tpu.memory_space<vmem>>, vector<16x2xf32>
    tpu.vector_store %arg38[%c0_171, %c0_172], %430 {strides = array<i32>} : memref<16x2xf32, #tpu.memory_space<vmem>>, vector<16x2xf32>,
    %432 = vector.extract_strided_slice %430 {offsets = [0, 0], sizes = [16, 1], strides = [1, 1]} : vector<16x2xf32> to vector<16x1xf32>
    %433 = vector.broadcast %432 : vector<16x1xf32> to vector<16x32xf32>
    %434 = arith.mulf %397, %433 : vector<16x32xf32>
    %c0_173 = arith.constant 0 : index
    %c0_174 = arith.constant 0 : index
    %435 = vector.load %arg23[%c0_173, %c0_174] : memref<32x100xbf16, #tpu.memory_space<vmem>>, vector<32x100xbf16>
    %c0_175 = arith.constant 0 : index
    %c0_176 = arith.constant 0 : index
    %436 = vector.load %arg24[%c0_175, %c0_176] : memref<1x100xf32, #tpu.memory_space<vmem>>, vector<1x100xf32>
    %c0_177 = arith.constant 0 : index
    %c0_178 = arith.constant 0 : index
    %437 = vector.load %arg25[%c0_177, %c0_178] : memref<100x10xbf16, #tpu.memory_space<vmem>>, vector<100x10xbf16>
    %c0_179 = arith.constant 0 : index
    %c0_180 = arith.constant 0 : index
    %438 = vector.load %arg26[%c0_179, %c0_180] : memref<1x10xf32, #tpu.memory_space<vmem>>, vector<1x10xf32>
    %c0_181 = arith.constant 0 : index
    %c0_182 = arith.constant 0 : index
    %439 = vector.load %arg27[%c0_181, %c0_182] : memref<10x2xbf16, #tpu.memory_space<vmem>>, vector<10x2xbf16>
    %c0_183 = arith.constant 0 : index
    %c0_184 = arith.constant 0 : index
    %440 = vector.load %arg28[%c0_183, %c0_184] : memref<1x2xf32, #tpu.memory_space<vmem>>, vector<1x2xf32>
    %441 = arith.truncf %434 : vector<16x32xf32> to vector<16x32xbf16>
    %cst_185 = arith.constant dense<0.000000e+00> : vector<16x100xf32>
    %442 = tpu.matmul %441, %435, %cst_185 {dimension_numbers = #tpu.dot_dimension_numbers<[1], [0], [0], [1], [0, 0, 1, 1], [], []>} : vector<16x32xbf16>, vector<32x100xbf16>, vector<16x100xf32> -> vector<16x100xf32>
    %443 = vector.broadcast %436 : vector<1x100xf32> to vector<16x100xf32>
    %444 = arith.addf %442, %443 : vector<16x100xf32>
    %445 = vector.extract_strided_slice %444 {offsets = [0, 0], sizes = [8, 100], strides = [1, 1]} : vector<16x100xf32> to vector<8x100xf32>
    %cst_186 = arith.constant dense<0xFF800000> : vector<100xf32>
    %446 = vector.multi_reduction <maximumf>, %445, %cst_186 [0] : vector<8x100xf32> to vector<100xf32>
    %447 = vector.shape_cast %446 : vector<100xf32> to vector<1x100xf32>
    %448 = vector.extract_strided_slice %444 {offsets = [8, 0], sizes = [8, 100], strides = [1, 1]} : vector<16x100xf32> to vector<8x100xf32>
    %cst_187 = arith.constant dense<0xFF800000> : vector<100xf32>
    %449 = vector.multi_reduction <maximumf>, %448, %cst_187 [0] : vector<8x100xf32> to vector<100xf32>
    %450 = vector.shape_cast %449 : vector<100xf32> to vector<1x100xf32>
    %451 = tpu.concatenate %447, %450 in 0 : vector<1x100xf32>, vector<1x100xf32> -> vector<2x100xf32>
    %452 = arith.truncf %451 : vector<2x100xf32> to vector<2x100xbf16>
    %cst_188 = arith.constant dense<0.000000e+00> : vector<2x10xf32>
    %453 = tpu.matmul %452, %437, %cst_188 {dimension_numbers = #tpu.dot_dimension_numbers<[1], [0], [0], [1], [0, 0, 1, 1], [], []>} : vector<2x100xbf16>, vector<100x10xbf16>, vector<2x10xf32> -> vector<2x10xf32>
    %454 = vector.broadcast %438 : vector<1x10xf32> to vector<2x10xf32>
    %455 = arith.addf %453, %454 : vector<2x10xf32>
    %456 = math.tanh %455 : vector<2x10xf32>
    %457 = arith.truncf %456 : vector<2x10xf32> to vector<2x10xbf16>
    %cst_189 = arith.constant dense<0.000000e+00> : vector<2x2xf32>
    %458 = tpu.matmul %457, %439, %cst_189 {dimension_numbers = #tpu.dot_dimension_numbers<[1], [0], [0], [1], [0, 0, 1, 1], [], []>} : vector<2x10xbf16>, vector<10x2xbf16>, vector<2x2xf32> -> vector<2x2xf32>
    %459 = vector.broadcast %440 : vector<1x2xf32> to vector<2x2xf32>
    %460 = arith.addf %458, %459 : vector<2x2xf32>
    %c0_190 = arith.constant 0 : index
    %c0_191 = arith.constant 0 : index
    %461 = vector.load %arg36[%c0_190, %c0_191] : memref<2x2xf32, #tpu.memory_space<vmem>>, vector<2x2xf32>
    tpu.vector_store %arg36[%c0_190, %c0_191], %460 {strides = array<i32>} : memref<2x2xf32, #tpu.memory_space<vmem>>, vector<2x2xf32>,
    %c0_192 = arith.constant 0 : index
    %c0_193 = arith.constant 0 : index
    %462 = vector.load %arg4[%c0_192, %c0_193] : memref<2x1xf32, #tpu.memory_space<vmem>>, vector<2x1xf32>
    %c0_194 = arith.constant 0 : index
    %c0_195 = arith.constant 0 : index
    %463 = vector.load %arg29[%c0_194, %c0_195] : memref<1x100xf32, #tpu.memory_space<vmem>>, vector<1x100xf32>
    %464 = vector.broadcast %462 : vector<2x1xf32> to vector<2x100xf32>
    %465 = vector.broadcast %463 : vector<1x100xf32> to vector<2x100xf32>
    %466 = arith.mulf %464, %465 : vector<2x100xf32>
    %c0_196 = arith.constant 0 : index
    %c0_197 = arith.constant 0 : index
    %467 = vector.load %arg30[%c0_196, %c0_197] : memref<32x100xbf16, #tpu.memory_space<vmem>>, vector<32x100xbf16>
    %c0_198 = arith.constant 0 : index
    %c0_199 = arith.constant 0 : index
    %468 = vector.load %arg31[%c0_198, %c0_199] : memref<1x100xf32, #tpu.memory_space<vmem>>, vector<1x100xf32>
    %c0_200 = arith.constant 0 : index
    %c0_201 = arith.constant 0 : index
    %469 = vector.load %arg32[%c0_200, %c0_201] : memref<100x10xbf16, #tpu.memory_space<vmem>>, vector<100x10xbf16>
    %c0_202 = arith.constant 0 : index
    %c0_203 = arith.constant 0 : index
    %470 = vector.load %arg33[%c0_202, %c0_203] : memref<1x10xf32, #tpu.memory_space<vmem>>, vector<1x10xf32>
    %c0_204 = arith.constant 0 : index
    %c0_205 = arith.constant 0 : index
    %471 = vector.load %arg34[%c0_204, %c0_205] : memref<10x2xbf16, #tpu.memory_space<vmem>>, vector<10x2xbf16>
    %c0_206 = arith.constant 0 : index
    %c0_207 = arith.constant 0 : index
    %472 = vector.load %arg35[%c0_206, %c0_207] : memref<1x2xf32, #tpu.memory_space<vmem>>, vector<1x2xf32>
    %473 = arith.truncf %434 : vector<16x32xf32> to vector<16x32xbf16>
    %cst_208 = arith.constant dense<0.000000e+00> : vector<16x100xf32>
    %474 = tpu.matmul %473, %467, %cst_208 {dimension_numbers = #tpu.dot_dimension_numbers<[1], [0], [0], [1], [0, 0, 1, 1], [], []>} : vector<16x32xbf16>, vector<32x100xbf16>, vector<16x100xf32> -> vector<16x100xf32>
    %475 = vector.broadcast %468 : vector<1x100xf32> to vector<16x100xf32>
    %476 = arith.addf %474, %475 : vector<16x100xf32>
    %477 = vector.extract_strided_slice %476 {offsets = [0, 0], sizes = [8, 100], strides = [1, 1]} : vector<16x100xf32> to vector<8x100xf32>
    %cst_209 = arith.constant dense<0xFF800000> : vector<100xf32>
    %478 = vector.multi_reduction <maximumf>, %477, %cst_209 [0] : vector<8x100xf32> to vector<100xf32>
    %479 = vector.shape_cast %478 : vector<100xf32> to vector<1x100xf32>
    %480 = vector.extract_strided_slice %476 {offsets = [8, 0], sizes = [8, 100], strides = [1, 1]} : vector<16x100xf32> to vector<8x100xf32>
    %cst_210 = arith.constant dense<0xFF800000> : vector<100xf32>
    %481 = vector.multi_reduction <maximumf>, %480, %cst_210 [0] : vector<8x100xf32> to vector<100xf32>
    %482 = vector.shape_cast %481 : vector<100xf32> to vector<1x100xf32>
    %483 = tpu.concatenate %479, %482 in 0 : vector<1x100xf32>, vector<1x100xf32> -> vector<2x100xf32>
    %484 = arith.addf %483, %466 : vector<2x100xf32>
    %485 = arith.truncf %484 : vector<2x100xf32> to vector<2x100xbf16>
    %cst_211 = arith.constant dense<0.000000e+00> : vector<2x10xf32>
    %486 = tpu.matmul %485, %469, %cst_211 {dimension_numbers = #tpu.dot_dimension_numbers<[1], [0], [0], [1], [0, 0, 1, 1], [], []>} : vector<2x100xbf16>, vector<100x10xbf16>, vector<2x10xf32> -> vector<2x10xf32>
    %487 = vector.broadcast %470 : vector<1x10xf32> to vector<2x10xf32>
    %488 = arith.addf %486, %487 : vector<2x10xf32>
    %489 = math.tanh %488 : vector<2x10xf32>
    %490 = arith.truncf %489 : vector<2x10xf32> to vector<2x10xbf16>
    %cst_212 = arith.constant dense<0.000000e+00> : vector<2x2xf32>
    %491 = tpu.matmul %490, %471, %cst_212 {dimension_numbers = #tpu.dot_dimension_numbers<[1], [0], [0], [1], [0, 0, 1, 1], [], []>} : vector<2x10xbf16>, vector<10x2xbf16>, vector<2x2xf32> -> vector<2x2xf32>
    %492 = vector.broadcast %472 : vector<1x2xf32> to vector<2x2xf32>
    %493 = arith.addf %491, %492 : vector<2x2xf32>
    %c0_213 = arith.constant 0 : index
    %c0_214 = arith.constant 0 : index
    %494 = vector.load %arg37[%c0_213, %c0_214] : memref<2x2xf32, #tpu.memory_space<vmem>>, vector<2x2xf32>
    tpu.vector_store %arg37[%c0_213, %c0_214], %493 {strides = array<i32>} : memref<2x2xf32, #tpu.memory_space<vmem>>, vector<2x2xf32>,
    return
  }
  func.func @transform_0(%arg0: i32) -> (i32, i32) {
    %c0_i32 = arith.constant 0 : i32
    %c0_i32_0 = arith.constant 0 : i32
    %c0_i32_1 = arith.constant 0 : i32
    return %c0_i32, %c0_i32_0 : i32, i32
  }
  func.func @transform_1(%arg0: i32) -> (i32, i32) {
    %c0_i32 = arith.constant 0 : i32
    %c0_i32_0 = arith.constant 0 : i32
    %c0_i32_1 = arith.constant 0 : i32
    return %c0_i32, %c0_i32_0 : i32, i32
  }
  func.func @transform_2(%arg0: i32) -> (i32, i32) {
    %c0_i32 = arith.constant 0 : i32
    %c0_i32_0 = arith.constant 0 : i32
    %c0_i32_1 = arith.constant 0 : i32
    return %c0_i32, %c0_i32_0 : i32, i32
  }
  func.func @transform_3(%arg0: i32) -> (i32, i32) {
    %c0_i32 = arith.constant 0 : i32
    %c0_i32_0 = arith.constant 0 : i32
    %c0_i32_1 = arith.constant 0 : i32
    return %c0_i32, %c0_i32_0 : i32, i32
  }
  func.func @transform_4(%arg0: i32) -> (i32, i32) {
    %c0_i32 = arith.constant 0 : i32
    %c0_i32_0 = arith.constant 0 : i32
    %c0_i32_1 = arith.constant 0 : i32
    return %c0_i32, %c0_i32_0 : i32, i32
  }
  func.func @transform_5(%arg0: i32) -> (i32, i32) {
    %c0_i32 = arith.constant 0 : i32
    %c0_i32_0 = arith.constant 0 : i32
    %c0_i32_1 = arith.constant 0 : i32
    return %c0_i32, %c0_i32_0 : i32, i32
  }
  func.func @transform_6(%arg0: i32) -> (i32, i32, i32) {
    %c0_i32 = arith.constant 0 : i32
    %c0_i32_0 = arith.constant 0 : i32
    %c0_i32_1 = arith.constant 0 : i32
    %c0_i32_2 = arith.constant 0 : i32
    return %c0_i32, %c0_i32_0, %c0_i32_1 : i32, i32, i32
  }
  func.func @transform_7(%arg0: i32) -> (i32, i32, i32) {
    %c0_i32 = arith.constant 0 : i32
    %c0_i32_0 = arith.constant 0 : i32
    %c0_i32_1 = arith.constant 0 : i32
    %c0_i32_2 = arith.constant 0 : i32
    return %c0_i32, %c0_i32_0, %c0_i32_1 : i32, i32, i32
  }
  func.func @transform_8(%arg0: i32) -> (i32, i32, i32) {
    %c0_i32 = arith.constant 0 : i32
    %c0_i32_0 = arith.constant 0 : i32
    %c0_i32_1 = arith.constant 0 : i32
    %c0_i32_2 = arith.constant 0 : i32
    return %c0_i32, %c0_i32_0, %c0_i32_1 : i32, i32, i32
  }
  func.func @transform_9(%arg0: i32) -> (i32, i32, i32) {
    %c0_i32 = arith.constant 0 : i32
    %c0_i32_0 = arith.constant 0 : i32
    %c0_i32_1 = arith.constant 0 : i32
    %c0_i32_2 = arith.constant 0 : i32
    return %c0_i32, %c0_i32_0, %c0_i32_1 : i32, i32, i32
  }
  func.func @transform_10(%arg0: i32) -> (i32, i32, i32) {
    %c0_i32 = arith.constant 0 : i32
    %c0_i32_0 = arith.constant 0 : i32
    %c0_i32_1 = arith.constant 0 : i32
    %c0_i32_2 = arith.constant 0 : i32
    return %c0_i32, %c0_i32_0, %c0_i32_1 : i32, i32, i32
  }
  func.func @transform_11(%arg0: i32) -> (i32, i32, i32) {
    %c0_i32 = arith.constant 0 : i32
    %c0_i32_0 = arith.constant 0 : i32
    %c0_i32_1 = arith.constant 0 : i32
    %c0_i32_2 = arith.constant 0 : i32
    return %c0_i32, %c0_i32_0, %c0_i32_1 : i32, i32, i32
  }
  func.func @transform_12(%arg0: i32) -> (i32, i32, i32) {
    %c0_i32 = arith.constant 0 : i32
    %c0_i32_0 = arith.constant 0 : i32
    %c0_i32_1 = arith.constant 0 : i32
    %c0_i32_2 = arith.constant 0 : i32
    return %c0_i32, %c0_i32_0, %c0_i32_1 : i32, i32, i32
  }
  func.func @transform_13(%arg0: i32) -> (i32, i32, i32) {
    %c0_i32 = arith.constant 0 : i32
    %c0_i32_0 = arith.constant 0 : i32
    %c0_i32_1 = arith.constant 0 : i32
    %c0_i32_2 = arith.constant 0 : i32
    return %c0_i32, %c0_i32_0, %c0_i32_1 : i32, i32, i32
  }
  func.func @transform_14(%arg0: i32) -> (i32, i32, i32) {
    %c0_i32 = arith.constant 0 : i32
    %c0_i32_0 = arith.constant 0 : i32
    %c0_i32_1 = arith.constant 0 : i32
    %c0_i32_2 = arith.constant 0 : i32
    return %c0_i32, %c0_i32_0, %c0_i32_1 : i32, i32, i32
  }
  func.func @transform_15(%arg0: i32) -> (i32, i32, i32) {
    %c0_i32 = arith.constant 0 : i32
    %c0_i32_0 = arith.constant 0 : i32
    %c0_i32_1 = arith.constant 0 : i32
    %c0_i32_2 = arith.constant 0 : i32
    return %c0_i32, %c0_i32_0, %c0_i32_1 : i32, i32, i32
  }
  func.func @transform_16(%arg0: i32) -> (i32, i32, i32) {
    %c0_i32 = arith.constant 0 : i32
    %c0_i32_0 = arith.constant 0 : i32
    %c0_i32_1 = arith.constant 0 : i32
    %c0_i32_2 = arith.constant 0 : i32
    return %c0_i32, %c0_i32_0, %c0_i32_1 : i32, i32, i32
  }
  func.func @transform_17(%arg0: i32) -> (i32, i32, i32) {
    %c0_i32 = arith.constant 0 : i32
    %c0_i32_0 = arith.constant 0 : i32
    %c0_i32_1 = arith.constant 0 : i32
    %c0_i32_2 = arith.constant 0 : i32
    return %c0_i32, %c0_i32_0, %c0_i32_1 : i32, i32, i32
  }
  func.func @transform_18(%arg0: i32) -> (i32, i32) {
    %c0_i32 = arith.constant 0 : i32
    %c0_i32_0 = arith.constant 0 : i32
    %c0_i32_1 = arith.constant 0 : i32
    return %c0_i32, %c0_i32_0 : i32, i32
  }
  func.func @transform_19(%arg0: i32) -> (i32, i32) {
    %c0_i32 = arith.constant 0 : i32
    %c0_i32_0 = arith.constant 0 : i32
    %c0_i32_1 = arith.constant 0 : i32
    return %c0_i32, %c0_i32_0 : i32, i32
  }
  func.func @transform_20(%arg0: i32) -> (i32, i32) {
    %c0_i32 = arith.constant 0 : i32
    %c0_i32_0 = arith.constant 0 : i32
    %c0_i32_1 = arith.constant 0 : i32
    return %c0_i32, %c0_i32_0 : i32, i32
  }
  func.func @transform_21(%arg0: i32) -> (i32, i32) {
    %c0_i32 = arith.constant 0 : i32
    %c0_i32_0 = arith.constant 0 : i32
    %c0_i32_1 = arith.constant 0 : i32
    return %c0_i32, %c0_i32_0 : i32, i32
  }
  func.func @transform_22(%arg0: i32) -> (i32, i32) {
    %c0_i32 = arith.constant 0 : i32
    %c0_i32_0 = arith.constant 0 : i32
    %c0_i32_1 = arith.constant 0 : i32
    return %c0_i32, %c0_i32_0 : i32, i32
  }
  func.func @transform_23(%arg0: i32) -> (i32, i32) {
    %c0_i32 = arith.constant 0 : i32
    %c0_i32_0 = arith.constant 0 : i32
    %c0_i32_1 = arith.constant 0 : i32
    return %c0_i32, %c0_i32_0 : i32, i32
  }
  func.func @transform_24(%arg0: i32) -> (i32, i32) {
    %c0_i32 = arith.constant 0 : i32
    %c0_i32_0 = arith.constant 0 : i32
    %c0_i32_1 = arith.constant 0 : i32
    return %c0_i32, %c0_i32_0 : i32, i32
  }
  func.func @transform_25(%arg0: i32) -> (i32, i32) {
    %c0_i32 = arith.constant 0 : i32
    %c0_i32_0 = arith.constant 0 : i32
    %c0_i32_1 = arith.constant 0 : i32
    return %c0_i32, %c0_i32_0 : i32, i32
  }
  func.func @transform_26(%arg0: i32) -> (i32, i32) {
    %c0_i32 = arith.constant 0 : i32
    %c0_i32_0 = arith.constant 0 : i32
    %c0_i32_1 = arith.constant 0 : i32
    return %c0_i32, %c0_i32_0 : i32, i32
  }
  func.func @transform_27(%arg0: i32) -> (i32, i32) {
    %c0_i32 = arith.constant 0 : i32
    %c0_i32_0 = arith.constant 0 : i32
    %c0_i32_1 = arith.constant 0 : i32
    return %c0_i32, %c0_i32_0 : i32, i32
  }
  func.func @transform_28(%arg0: i32) -> (i32, i32) {
    %c0_i32 = arith.constant 0 : i32
    %c0_i32_0 = arith.constant 0 : i32
    %c0_i32_1 = arith.constant 0 : i32
    return %c0_i32, %c0_i32_0 : i32, i32
  }
  func.func @transform_29(%arg0: i32) -> (i32, i32) {
    %c0_i32 = arith.constant 0 : i32
    %c0_i32_0 = arith.constant 0 : i32
    %c0_i32_1 = arith.constant 0 : i32
    return %c0_i32, %c0_i32_0 : i32, i32
  }
  func.func @transform_30(%arg0: i32) -> (i32, i32) {
    %c0_i32 = arith.constant 0 : i32
    %c0_i32_0 = arith.constant 0 : i32
    %c0_i32_1 = arith.constant 0 : i32
    return %c0_i32, %c0_i32_0 : i32, i32
  }
  func.func @transform_31(%arg0: i32) -> (i32, i32) {
    %c0_i32 = arith.constant 0 : i32
    %c0_i32_0 = arith.constant 0 : i32
    %c0_i32_1 = arith.constant 0 : i32
    return %c0_i32, %c0_i32_0 : i32, i32
  }
  func.func @transform_32(%arg0: i32) -> (i32, i32) {
    %c0_i32 = arith.constant 0 : i32
    %c0_i32_0 = arith.constant 0 : i32
    %c0_i32_1 = arith.constant 0 : i32
    return %c0_i32, %c0_i32_0 : i32, i32
  }
  func.func @transform_33(%arg0: i32) -> (i32, i32) {
    %c0_i32 = arith.constant 0 : i32
    %c0_i32_0 = arith.constant 0 : i32
    %c0_i32_1 = arith.constant 0 : i32
    return %c0_i32, %c0_i32_0 : i32, i32
  }
  func.func @transform_34(%arg0: i32) -> (i32, i32) {
    %c0_i32 = arith.constant 0 : i32
    %c0_i32_0 = arith.constant 0 : i32
    %c0_i32_1 = arith.constant 0 : i32
    return %c0_i32, %c0_i32_0 : i32, i32
  }
  func.func @transform_35(%arg0: i32) -> (i32, i32) {
    %c0_i32 = arith.constant 0 : i32
    %c0_i32_0 = arith.constant 0 : i32
    %c0_i32_1 = arith.constant 0 : i32
    return %c0_i32, %c0_i32_0 : i32, i32
  }
  func.func @transform_36(%arg0: i32) -> (i32, i32) {
    %c0_i32 = arith.constant 0 : i32
    %c0_i32_0 = arith.constant 0 : i32
    %c0_i32_1 = arith.constant 0 : i32
    return %c0_i32, %c0_i32_0 : i32, i32
  }
  func.func @transform_37(%arg0: i32) -> (i32, i32) {
    %c0_i32 = arith.constant 0 : i32
    %c0_i32_0 = arith.constant 0 : i32
    %c0_i32_1 = arith.constant 0 : i32
    return %c0_i32, %c0_i32_0 : i32, i32
  }
}

</mosaic_0001>

<llo_original>
// kernel: causal_inference_forward.1
$region0: #{causal_inference_forward.1}
  #allocation0 [shape = 'u32[]', space=smem, size = 0x4, offset = 0x4, fixed_abs, tag = 'smem constant byte address 0x4 - core index']
  #allocation1 [shape = 'u32[72,128]{1,0:T(1,128)}', space=vmem, size = 0x9000, scoped, tag = 'internal scratch']
  %s0 = inlined_call_operand.smem [shape: u32[38], index: -1, kind: input, shape index: {}]
  %s1 = sld [smem:[%s0]]
  %s2 = scalar_lea.smem %s0, 1
  %s3 = sld [smem:[%s2]]
  %s4 = scalar_lea.smem %s0, 2
  %s5 = sld [smem:[%s4]]
  %s6 = scalar_lea.smem %s0, 3
  %s7 = sld [smem:[%s6]]
  %s8 = scalar_lea.smem %s0, 4
  %s9 = sld [smem:[%s8]]
  %s10 = scalar_lea.smem %s0, 5
  %s11 = sld [smem:[%s10]]
  %s12 = scalar_lea.smem %s0, 6
  %s13 = sld [smem:[%s12]]
  %s14 = scalar_lea.smem %s0, 7
  %s15 = sld [smem:[%s14]]
  %s16 = scalar_lea.smem %s0, 8
  %s17 = sld [smem:[%s16]]
  %s18 = scalar_lea.smem %s0, 9
  %s19 = sld [smem:[%s18]]
  %s20 = scalar_lea.smem %s0, 10
  %s21 = sld [smem:[%s20]]
  %s22 = scalar_lea.smem %s0, 11
  %s23 = sld [smem:[%s22]]
  %s24 = scalar_lea.smem %s0, 12
  %s25 = sld [smem:[%s24]]
  %s26 = scalar_lea.smem %s0, 13
  %s27 = sld [smem:[%s26]]
  %s28 = scalar_lea.smem %s0, 14
  %s29 = sld [smem:[%s28]]
  %s30 = scalar_lea.smem %s0, 15
  %s31 = sld [smem:[%s30]]
  %s32 = scalar_lea.smem %s0, 16
  %s33 = sld [smem:[%s32]]
  %s34 = scalar_lea.smem %s0, 17
  %s35 = sld [smem:[%s34]]
  %s36 = scalar_lea.smem %s0, 18
  %s37 = sld [smem:[%s36]]
  %s38 = scalar_lea.smem %s0, 19
  %s39 = sld [smem:[%s38]]
  %s40 = scalar_lea.smem %s0, 20
  %s41 = sld [smem:[%s40]]
  %s42 = scalar_lea.smem %s0, 21
  %s43 = sld [smem:[%s42]]
  %s44 = scalar_lea.smem %s0, 22
  %s45 = sld [smem:[%s44]]
  %s46 = scalar_lea.smem %s0, 23
  %s47 = sld [smem:[%s46]]
  %s48 = scalar_lea.smem %s0, 24
  %s49 = sld [smem:[%s48]]
  %s50 = scalar_lea.smem %s0, 25
  %s51 = sld [smem:[%s50]]
  %s52 = scalar_lea.smem %s0, 26
  %s53 = sld [smem:[%s52]]
  %s54 = scalar_lea.smem %s0, 27
  %s55 = sld [smem:[%s54]]
  %s56 = scalar_lea.smem %s0, 28
  %s57 = sld [smem:[%s56]]
  %s58 = scalar_lea.smem %s0, 29
  %s59 = sld [smem:[%s58]]
  %s60 = scalar_lea.smem %s0, 30
  %s61 = sld [smem:[%s60]]
  %s62 = scalar_lea.smem %s0, 31
  %s63 = sld [smem:[%s62]]
  %s64 = scalar_lea.smem %s0, 32
  %s65 = sld [smem:[%s64]]
  %s66 = scalar_lea.smem %s0, 33
  %s67 = sld [smem:[%s66]]
  %s68 = scalar_lea.smem %s0, 34
  %s69 = sld [smem:[%s68]]
  %s70 = scalar_lea.smem %s0, 35
  %s71 = sld [smem:[%s70]]
  %s72 = scalar_lea.smem %s0, 36
  %s73 = sld [smem:[%s72]]
  %s74 = scalar_lea.smem %s0, 37
  %s75 = sld [smem:[%s74]]
  %76 = xla_tuple %s71, %s73, %s75
  %s77 = sld [smem:[#allocation0]]
  $region166: #{causal_inference_forward.1} parent=0
    _
  %s79 = ssub.s32 1, %s77
  %s80 = scalar_select 0, %s79, %s77
  $region1: #{causal_inference_forward.1} parent=0
    #allocation2 [shape = 'u8[1024]{0}', space=vmem, size = 0x400, scoped, tag = 'output window, operand 0, single buffered']
    #allocation3 [shape = 's32[1]{0}', space=sflag, size = 0x4, scoped, tag = 'scoped memory for causal_inference_forward.1']
    #allocation4 [shape = 'u8[1024]{0}', space=vmem, size = 0x400, scoped, tag = 'output window, operand 1, single buffered']
    #allocation5 [shape = 's32[1]{0}', space=sflag, size = 0x4, scoped, tag = 'scoped memory for causal_inference_forward.1']
    %81 = vsyncpa [#allocation3], 0
    %82 = vsyncpa [#allocation5], 0
    // Predicated region
    $region2: #{causal_inference_forward.1} parent=1 // pred_check
      _
    $region3: #{causal_inference_forward.1} parent=1 // pred_check_branch
      %84 = sbr.rel (0) target = $region5
    $region4: #{causal_inference_forward.1} parent=1 // pred_region
      _
    $region5: #{causal_inference_forward.1} parent=1 // pred_fallthru
      _
    // Predicated region
    $region6: #{causal_inference_forward.1} parent=1 // pred_check
      _
    $region7: #{causal_inference_forward.1} parent=1 // pred_check_branch
      %86 = sbr.rel (0) target = $region9
    $region8: #{causal_inference_forward.1} parent=1 // pred_region
      _
    $region9: #{causal_inference_forward.1} parent=1 // pred_fallthru
      _
    // Predicated region
    $region10: #{causal_inference_forward.1} parent=1 // pred_check
      _
    $region11: #{causal_inference_forward.1} parent=1 // pred_check_branch
      %88 = sbr.rel (0) target = $region13
    $region12: #{causal_inference_forward.1} parent=1 // pred_region
      _
    $region13: #{causal_inference_forward.1} parent=1 // pred_fallthru
      _
    // Predicated region
    $region14: #{causal_inference_forward.1} parent=1 // pred_check
      _
    $region15: #{causal_inference_forward.1} parent=1 // pred_check_branch
      %90 = sbr.rel (0) target = $region17
    $region16: #{causal_inference_forward.1} parent=1 // pred_region
      _
    $region17: #{causal_inference_forward.1} parent=1 // pred_fallthru
      _
    // Predicated region
    $region18: #{causal_inference_forward.1} parent=1 // pred_check
      _
    $region19: #{causal_inference_forward.1} parent=1 // pred_check_branch
      %92 = sbr.rel (0) target = $region21
    $region20: #{causal_inference_forward.1} parent=1 // pred_region
      _
    $region21: #{causal_inference_forward.1} parent=1 // pred_fallthru
      _
    // Predicated region
    $region22: #{causal_inference_forward.1} parent=1 // pred_check
      _
    $region23: #{causal_inference_forward.1} parent=1 // pred_check_branch
      %94 = sbr.rel (0) target = $region25
    $region24: #{causal_inference_forward.1} parent=1 // pred_region
      _
    $region25: #{causal_inference_forward.1} parent=1 // pred_fallthru
      _
    // Predicated region
    $region26: #{causal_inference_forward.1} parent=1 // pred_check
      _
    $region27: #{causal_inference_forward.1} parent=1 // pred_check_branch
      %96 = sbr.rel (0) target = $region29
    $region28: #{causal_inference_forward.1} parent=1 // pred_region
      _
    $region29: #{causal_inference_forward.1} parent=1 // pred_fallthru
      _
    // Predicated region
    $region30: #{causal_inference_forward.1} parent=1 // pred_check
      _
    $region31: #{causal_inference_forward.1} parent=1 // pred_check_branch
      %98 = sbr.rel (0) target = $region33
    $region32: #{causal_inference_forward.1} parent=1 // pred_region
      _
    $region33: #{causal_inference_forward.1} parent=1 // pred_fallthru
      _
    // Predicated region
    $region34: #{causal_inference_forward.1} parent=1 // pred_check
      _
    $region35: #{causal_inference_forward.1} parent=1 // pred_check_branch
      %100 = sbr.rel (0) target = $region37
    $region36: #{causal_inference_forward.1} parent=1 // pred_region
      _
    $region37: #{causal_inference_forward.1} parent=1 // pred_fallthru
      _
    // Predicated region
    $region38: #{causal_inference_forward.1} parent=1 // pred_check
      _
    $region39: #{causal_inference_forward.1} parent=1 // pred_check_branch
      %102 = sbr.rel (0) target = $region41
    $region40: #{causal_inference_forward.1} parent=1 // pred_region
      _
    $region41: #{causal_inference_forward.1} parent=1 // pred_fallthru
      _
    // Predicated region
    $region42: #{causal_inference_forward.1} parent=1 // pred_check
      _
    $region43: #{causal_inference_forward.1} parent=1 // pred_check_branch
      %104 = sbr.rel (0) target = $region45
    $region44: #{causal_inference_forward.1} parent=1 // pred_region
      _
    $region45: #{causal_inference_forward.1} parent=1 // pred_fallthru
      _
    // Predicated region
    $region46: #{causal_inference_forward.1} parent=1 // pred_check
      _
    $region47: #{causal_inference_forward.1} parent=1 // pred_check_branch
      %106 = sbr.rel (0) target = $region49
    $region48: #{causal_inference_forward.1} parent=1 // pred_region
      _
    $region49: #{causal_inference_forward.1} parent=1 // pred_fallthru
      _
    // Predicated region
    $region50: #{causal_inference_forward.1} parent=1 // pred_check
      _
    $region51: #{causal_inference_forward.1} parent=1 // pred_check_branch
      %108 = sbr.rel (0) target = $region53
    $region52: #{causal_inference_forward.1} parent=1 // pred_region
      _
    $region53: #{causal_inference_forward.1} parent=1 // pred_fallthru
      _
    // Predicated region
    $region54: #{causal_inference_forward.1} parent=1 // pred_check
      _
    $region55: #{causal_inference_forward.1} parent=1 // pred_check_branch
      %110 = sbr.rel (0) target = $region57
    $region56: #{causal_inference_forward.1} parent=1 // pred_region
      _
    $region57: #{causal_inference_forward.1} parent=1 // pred_fallthru
      _
    // Predicated region
    $region58: #{causal_inference_forward.1} parent=1 // pred_check
      _
    $region59: #{causal_inference_forward.1} parent=1 // pred_check_branch
      %112 = sbr.rel (0) target = $region61
    $region60: #{causal_inference_forward.1} parent=1 // pred_region
      _
    $region61: #{causal_inference_forward.1} parent=1 // pred_fallthru
      _
    // Predicated region
    $region62: #{causal_inference_forward.1} parent=1 // pred_check
      _
    $region63: #{causal_inference_forward.1} parent=1 // pred_check_branch
      %114 = sbr.rel (0) target = $region65
    $region64: #{causal_inference_forward.1} parent=1 // pred_region
      _
    $region65: #{causal_inference_forward.1} parent=1 // pred_fallthru
      _
    // Predicated region
    $region66: #{causal_inference_forward.1} parent=1 // pred_check
      _
    $region67: #{causal_inference_forward.1} parent=1 // pred_check_branch
      %116 = sbr.rel (0) target = $region69
    $region68: #{causal_inference_forward.1} parent=1 // pred_region
      _
    $region69: #{causal_inference_forward.1} parent=1 // pred_fallthru
      _
    // Predicated region
    $region70: #{causal_inference_forward.1} parent=1 // pred_check
      _
    $region71: #{causal_inference_forward.1} parent=1 // pred_check_branch
      %118 = sbr.rel (0) target = $region73
    $region72: #{causal_inference_forward.1} parent=1 // pred_region
      _
    $region73: #{causal_inference_forward.1} parent=1 // pred_fallthru
      _
    // Predicated region
    $region74: #{causal_inference_forward.1} parent=1 // pred_check
      _
    $region75: #{causal_inference_forward.1} parent=1 // pred_check_branch
      %120 = sbr.rel (0) target = $region77
    $region76: #{causal_inference_forward.1} parent=1 // pred_region
      _
    $region77: #{causal_inference_forward.1} parent=1 // pred_fallthru
      _
    // Predicated region
    $region78: #{causal_inference_forward.1} parent=1 // pred_check
      _
    $region79: #{causal_inference_forward.1} parent=1 // pred_check_branch
      %122 = sbr.rel (0) target = $region81
    $region80: #{causal_inference_forward.1} parent=1 // pred_region
      _
    $region81: #{causal_inference_forward.1} parent=1 // pred_fallthru
      _
    // Predicated region
    $region82: #{causal_inference_forward.1} parent=1 // pred_check
      _
    $region83: #{causal_inference_forward.1} parent=1 // pred_check_branch
      %124 = sbr.rel (0) target = $region85
    $region84: #{causal_inference_forward.1} parent=1 // pred_region
      _
    $region85: #{causal_inference_forward.1} parent=1 // pred_fallthru
      _
    // Predicated region
    $region86: #{causal_inference_forward.1} parent=1 // pred_check
      _
    $region87: #{causal_inference_forward.1} parent=1 // pred_check_branch
      %126 = sbr.rel (0) target = $region89
    $region88: #{causal_inference_forward.1} parent=1 // pred_region
      _
    $region89: #{causal_inference_forward.1} parent=1 // pred_fallthru
      _
    // Predicated region
    $region90: #{causal_inference_forward.1} parent=1 // pred_check
      _
    $region91: #{causal_inference_forward.1} parent=1 // pred_check_branch
      %128 = sbr.rel (0) target = $region93
    $region92: #{causal_inference_forward.1} parent=1 // pred_region
      _
    $region93: #{causal_inference_forward.1} parent=1 // pred_fallthru
      _
    // Predicated region
    $region94: #{causal_inference_forward.1} parent=1 // pred_check
      _
    $region95: #{causal_inference_forward.1} parent=1 // pred_check_branch
      %130 = sbr.rel (0) target = $region97
    $region96: #{causal_inference_forward.1} parent=1 // pred_region
      _
    $region97: #{causal_inference_forward.1} parent=1 // pred_fallthru
      _
    // Predicated region
    $region98: #{causal_inference_forward.1} parent=1 // pred_check
      _
    $region99: #{causal_inference_forward.1} parent=1 // pred_check_branch
      %132 = sbr.rel (0) target = $region101
    $region100: #{causal_inference_forward.1} parent=1 // pred_region
      _
    $region101: #{causal_inference_forward.1} parent=1 // pred_fallthru
      _
    // Predicated region
    $region102: #{causal_inference_forward.1} parent=1 // pred_check
      _
    $region103: #{causal_inference_forward.1} parent=1 // pred_check_branch
      %134 = sbr.rel (0) target = $region105
    $region104: #{causal_inference_forward.1} parent=1 // pred_region
      _
    $region105: #{causal_inference_forward.1} parent=1 // pred_fallthru
      _
    // Predicated region
    $region106: #{causal_inference_forward.1} parent=1 // pred_check
      _
    $region107: #{causal_inference_forward.1} parent=1 // pred_check_branch
      %136 = sbr.rel (0) target = $region109
    $region108: #{causal_inference_forward.1} parent=1 // pred_region
      _
    $region109: #{causal_inference_forward.1} parent=1 // pred_fallthru
      _
    // Predicated region
    $region110: #{causal_inference_forward.1} parent=1 // pred_check
      _
    $region111: #{causal_inference_forward.1} parent=1 // pred_check_branch
      %138 = sbr.rel (0) target = $region113
    $region112: #{causal_inference_forward.1} parent=1 // pred_region
      _
    $region113: #{causal_inference_forward.1} parent=1 // pred_fallthru
      _
    // Predicated region
    $region114: #{causal_inference_forward.1} parent=1 // pred_check
      _
    $region115: #{causal_inference_forward.1} parent=1 // pred_check_branch
      %140 = sbr.rel (0) target = $region117
    $region116: #{causal_inference_forward.1} parent=1 // pred_region
      _
    $region117: #{causal_inference_forward.1} parent=1 // pred_fallthru
      _
    // Predicated region
    $region118: #{causal_inference_forward.1} parent=1 // pred_check
      _
    $region119: #{causal_inference_forward.1} parent=1 // pred_check_branch
      %142 = sbr.rel (0) target = $region121
    $region120: #{causal_inference_forward.1} parent=1 // pred_region
      _
    $region121: #{causal_inference_forward.1} parent=1 // pred_fallthru
      _
    // Predicated region
    $region122: #{causal_inference_forward.1} parent=1 // pred_check
      _
    $region123: #{causal_inference_forward.1} parent=1 // pred_check_branch
      %144 = sbr.rel (0) target = $region125
    $region124: #{causal_inference_forward.1} parent=1 // pred_region
      _
    $region125: #{causal_inference_forward.1} parent=1 // pred_fallthru
      _
    // Predicated region
    $region126: #{causal_inference_forward.1} parent=1 // pred_check
      _
    $region127: #{causal_inference_forward.1} parent=1 // pred_check_branch
      %146 = sbr.rel (0) target = $region129
    $region128: #{causal_inference_forward.1} parent=1 // pred_region
      _
    $region129: #{causal_inference_forward.1} parent=1 // pred_fallthru
      _
    // Predicated region
    $region130: #{causal_inference_forward.1} parent=1 // pred_check
      _
    $region131: #{causal_inference_forward.1} parent=1 // pred_check_branch
      %148 = sbr.rel (0) target = $region133
    $region132: #{causal_inference_forward.1} parent=1 // pred_region
      _
    $region133: #{causal_inference_forward.1} parent=1 // pred_fallthru
      _
    // Predicated region
    $region134: #{causal_inference_forward.1} parent=1 // pred_check
      _
    $region135: #{causal_inference_forward.1} parent=1 // pred_check_branch
      %150 = sbr.rel (0) target = $region137
    $region136: #{causal_inference_forward.1} parent=1 // pred_region
      _
    $region137: #{causal_inference_forward.1} parent=1 // pred_fallthru
      _
    // Predicated region
    $region138: #{causal_inference_forward.1} parent=1 // pred_check
      _
    $region139: #{causal_inference_forward.1} parent=1 // pred_check_branch
      %152 = sbr.rel (0) target = $region141
    $region140: #{causal_inference_forward.1} parent=1 // pred_region
      _
    $region141: #{causal_inference_forward.1} parent=1 // pred_fallthru
      _
    %v154 = vld [vmem:[%s1] sm:$0xff]
    %v155 = vld [vmem:[%s1 + $0x8] sm:$0xff]
    %v156 = vld [vmem:[%s9] sm:$0x1]
    %v157 = vld [vmem:[%s11] sm:$0x1]
    %vm158 = vcmask 261120
    %v159 = vsel %vm158, %v154, 0.0
    %160 = vadd.xlane.f32.xlu0 %v159
    %v161 = vpop.xlane.xlu0 %160
    %v162 = vsel %vm158, %v155, 0.0
    %163 = vadd.xlane.f32.xlu0 %v162
    %v164 = vpop.xlane.xlu0 %163
    %v165 = vrcp.pop 32.0
    %v166 = vmul.f32 32.0, %v165
    %v167 = vsub.f32 1.0, %v166
    %v168 = vmul.f32 %v165, %v167
    %v169 = vadd.f32 %v165, %v168
    %vm170 = vweird.f32 %v165
    %v171 = vsel %vm170, %v165, %v169
    %v172 = vmul.f32 %v161, %v171
    %v173 = vmul.f32 %v164, %v171
    %v174 = vsub.f32 %v154, %v172
    %v175 = vsub.f32 %v155, %v173
    %v176 = vmul.f32 %v174, %v174
    %v177 = vmul.f32 %v175, %v175
    %v178 = vsel %vm158, %v176, 0.0
    %179 = vadd.xlane.f32.xlu0 %v178
    %v180 = vpop.xlane.xlu0 %179
    %v181 = vsel %vm158, %v177, 0.0
    %182 = vadd.xlane.f32.xlu0 %v181
    %v183 = vpop.xlane.xlu0 %182
    %v184 = vmul.f32 %v180, %v171
    %v185 = vmul.f32 %v183, %v171
    %v186 = vadd.f32 %v184, 1e-12
    %v187 = vadd.f32 %v185, 1e-12
    %v188 = vrsqrt.pop %v186
    %v189 = vmul.f32 %v188, %v186
    %v190 = vmul.f32 %v189, %v188
    %v191 = vmul.f32 0.5, %v190
    %v192 = vsub.f32 1.5, %v191
    %v193 = vmul.f32 %v188, %v192
    %vm194 = vweird.f32 %v186
    %vm195 = vweird.f32 %v188
    %vm196 = vmor %vm194, %vm195
    %v197 = vsel %vm196, %v188, %v193
    %v198 = vrsqrt.pop %v187
    %v199 = vmul.f32 %v198, %v187
    %v200 = vmul.f32 %v199, %v198
    %v201 = vmul.f32 0.5, %v200
    %v202 = vsub.f32 1.5, %v201
    %v203 = vmul.f32 %v198, %v202
    %vm204 = vweird.f32 %v187
    %vm205 = vweird.f32 %v198
    %vm206 = vmor %vm204, %vm205
    %v207 = vsel %vm206, %v198, %v203
    %v208 = vmul.f32 %v174, %v197
    %v209 = vmul.f32 %v175, %v207
    %v211 = vperm.slane %v156, 0
    %v213 = vmul.f32 %v208, %v211
    %v214 = vmul.f32 %v209, %v211
    %v216 = vperm.slane %v157, 0
    %v218 = vadd.f32 %v213, %v216
    %v219 = vadd.f32 %v214, %v216
    %v220 = vld [vmem:[%s3] sm:$0xff]
    %v221 = vld [vmem:[%s3 + $0x8] sm:$0xff]
    %v222 = vpack.c.bf16 %v219, %v218
    %v223 = vld [vmem:[%s13] sm:$0xf]
    %v224 = vld [vmem:[%s13 + $0x4] sm:$0xf]
    %v225 = vld [vmem:[%s13 + $0x8] sm:$0xf]
    %v226 = vld [vmem:[%s13 + $0xc] sm:$0xf]
    %v227 = vld [vmem:[%s15] sm:$0x1]
    %v229 = vperm.slane %v227, 0
    %v235 = vunpack.c.l.b16 %v223
    %v236 = vunpack.c.l.b16 %v224
    %v237 = vunpack.c.l.b16 %v225
    %v238 = vunpack.c.l.b16 %v226
    %v239 = vpack.c.b16 %v236, %v235
    %v240 = vpack.c.b16 %v238, %v237
    %v244 = vsel %vm158, %v222, 0
    %246 = vmatpush.bf16.msra.mxu0 0
    %247 = vmatpush.bf16.msra.mxu0 0
    %248 = vmatpush.bf16.msra.mxu0 0
    %249 = vmatpush.bf16.msra.mxu0 0
    %250 = vmatpush.bf16.msra.mxu0 0
    %251 = vmatpush.bf16.msra.mxu0 0
    %252 = vmatpush.bf16.msra.mxu0 %v240
    %253 = vmatpush.bf16.msra.mxu0 %v239
    %254 = vmatmul.bf16.gmra.mxu0 %v244
    %v255 = vpop.f32.mrf.mxu0
    %v256 = vadd.f32 %v229, %v255
    %v257 = vpop.f32.mrf.mxu0
    %v258 = vadd.f32 %v229, %v257
    %259 = vdwg.mxu0
    %v260 = vmul.f32 %v256, 0.35355338
    %v261 = vmul.f32 %v258, 0.35355338
    %v262 = vpack.c.bf16 %v261, %v260
    %v263 = vpack.c.bf16 %v258, %v256
    %265 = vrot.lane.b32.xlu0 %v263, 96
    %v266 = vpop.permute.xlu0 %265
    %vm267 = vcmask 64512
    %v269 = vsel %vm267, %v262, 0
    %v272 = vsel %vm267, %v266, 0
    %274 = vmatpush.bf16.xpose.msra.mxu0 0
    %275 = vmatpush.bf16.xpose.msra.mxu0 0
    %276 = vmatpush.bf16.xpose.msra.mxu0 0
    %277 = vmatpush.bf16.xpose.msra.mxu0 0
    %278 = vmatpush.bf16.xpose.msra.mxu0 0
    %279 = vmatpush.bf16.xpose.msra.mxu0 0
    %280 = vmatpush.bf16.xpose.msra.mxu0 0
    %281 = vmatpush.bf16.xpose.msra.mxu0 %v272
    %282 = vmatmul.bf16.gmra.mxu0 %v269
    %v283 = vpop.f32.mrf.mxu0
    %v284 = vadd.f32 %v220, %v283
    %v285 = vpop.f32.mrf.mxu0
    %v286 = vadd.f32 %v221, %v285
    %287 = vdwg.mxu0
    %vm288 = vcmask 130048
    %v289 = vsel %vm288, %v284, -inf
    %290 = vmax.xlane.f32.xlu0 %v289
    %v291 = vpop.xlane.xlu0 %290
    %v292 = vsel %vm288, %v286, -inf
    %293 = vmax.xlane.f32.xlu0 %v292
    %v294 = vpop.xlane.xlu0 %293
    %v295 = vsub.f32 %v284, %v291
    %v296 = vsub.f32 %v286, %v294
    %v297 = vmul.f32 %v295, 1.442695
    %v298 = vpow.pop %v297
    %v299 = vmul.f32 %v296, 1.442695
    %v300 = vpow.pop %v299
    %v301 = vsel %vm288, %v298, 0.0
    %302 = vadd.xlane.f32.xlu0 %v301
    %v303 = vpop.xlane.xlu0 %302
    %v304 = vsel %vm288, %v300, 0.0
    %305 = vadd.xlane.f32.xlu0 %v304
    %v306 = vpop.xlane.xlu0 %305
    %v307 = vrcp.pop %v303
    %v308 = vrcp.pop %v306
    %v309 = vmul.f32 %v298, %v307
    %v310 = vmul.f32 %v300, %v308
    %v311 = vpack.c.bf16 %v310, %v309
    %312 = vrot.lane.b32.xlu0 %v263, 64
    %v313 = vpop.permute.xlu0 %312
    %v316 = vsel %vm288, %v311, 0
    %318 = vmatpush.bf16.msra.mxu0 0
    %319 = vmatpush.bf16.msra.mxu0 0
    %320 = vmatpush.bf16.msra.mxu0 0
    %321 = vmatpush.bf16.msra.mxu0 0
    %322 = vmatpush.bf16.msra.mxu0 0
    %323 = vmatpush.bf16.msra.mxu0 0
    %324 = vmatpush.bf16.msra.mxu0 0
    %325 = vmatpush.bf16.msra.mxu0 %v313
    %326 = vmatmul.bf16.gmra.mxu0 %v316
    %v327 = vpop.f32.mrf.mxu0
    %v328 = vadd.f32 0.0, %v327
    %v329 = vpop.f32.mrf.mxu0
    %v330 = vadd.f32 0.0, %v329
    %331 = vdwg.mxu0
    %333 = vrot.lane.b32.xlu0 %v262, 120
    %v334 = vpop.permute.xlu0 %333
    %335 = vrot.lane.b32.xlu0 %v263, 88
    %v336 = vpop.permute.xlu0 %335
    %v338 = vsel %vm267, %v334, 0
    %v341 = vsel %vm267, %v336, 0
    %343 = vmatpush.bf16.xpose.msra.mxu0 0
    %344 = vmatpush.bf16.xpose.msra.mxu0 0
    %345 = vmatpush.bf16.xpose.msra.mxu0 0
    %346 = vmatpush.bf16.xpose.msra.mxu0 0
    %347 = vmatpush.bf16.xpose.msra.mxu0 0
    %348 = vmatpush.bf16.xpose.msra.mxu0 0
    %349 = vmatpush.bf16.xpose.msra.mxu0 0
    %350 = vmatpush.bf16.xpose.msra.mxu0 %v341
    %351 = vmatmul.bf16.gmra.mxu0 %v338
    %v352 = vpop.f32.mrf.mxu0
    %v353 = vadd.f32 %v220, %v352
    %v354 = vpop.f32.mrf.mxu0
    %v355 = vadd.f32 %v221, %v354
    %356 = vdwg.mxu0
    %v357 = vsel %vm288, %v353, -inf
    %358 = vmax.xlane.f32.xlu0 %v357
    %v359 = vpop.xlane.xlu0 %358
    %v360 = vsel %vm288, %v355, -inf
    %361 = vmax.xlane.f32.xlu0 %v360
    %v362 = vpop.xlane.xlu0 %361
    %v363 = vsub.f32 %v353, %v359
    %v364 = vsub.f32 %v355, %v362
    %v365 = vmul.f32 %v363, 1.442695
    %v366 = vpow.pop %v365
    %v367 = vmul.f32 %v364, 1.442695
    %v368 = vpow.pop %v367
    %v369 = vsel %vm288, %v366, 0.0
    %370 = vadd.xlane.f32.xlu0 %v369
    %v371 = vpop.xlane.xlu0 %370
    %v372 = vsel %vm288, %v368, 0.0
    %373 = vadd.xlane.f32.xlu0 %v372
    %v374 = vpop.xlane.xlu0 %373
    %v375 = vrcp.pop %v371
    %v376 = vrcp.pop %v374
    %v377 = vmul.f32 %v366, %v375
    %v378 = vmul.f32 %v368, %v376
    %v379 = vpack.c.bf16 %v378, %v377
    %380 = vrot.lane.b32.xlu0 %v263, 56
    %v381 = vpop.permute.xlu0 %380
    %v384 = vsel %vm288, %v379, 0
    %386 = vmatpush.bf16.msra.mxu0 0
    %387 = vmatpush.bf16.msra.mxu0 0
    %388 = vmatpush.bf16.msra.mxu0 0
    %389 = vmatpush.bf16.msra.mxu0 0
    %390 = vmatpush.bf16.msra.mxu0 0
    %391 = vmatpush.bf16.msra.mxu0 0
    %392 = vmatpush.bf16.msra.mxu0 0
    %393 = vmatpush.bf16.msra.mxu0 %v381
    %394 = vmatmul.bf16.gmra.mxu0 %v384
    %v395 = vpop.f32.mrf.mxu0
    %v396 = vadd.f32 0.0, %v395
    %v397 = vpop.f32.mrf.mxu0
    %v398 = vadd.f32 0.0, %v397
    %399 = vdwg.mxu0
    %400 = vrot.lane.b32.xlu0 %v262, 112
    %v401 = vpop.permute.xlu0 %400
    %402 = vrot.lane.b32.xlu0 %v263, 80
    %v403 = vpop.permute.xlu0 %402
    %v405 = vsel %vm267, %v401, 0
    %v408 = vsel %vm267, %v403, 0
    %410 = vmatpush.bf16.xpose.msra.mxu0 0
    %411 = vmatpush.bf16.xpose.msra.mxu0 0
    %412 = vmatpush.bf16.xpose.msra.mxu0 0
    %413 = vmatpush.bf16.xpose.msra.mxu0 0
    %414 = vmatpush.bf16.xpose.msra.mxu0 0
    %415 = vmatpush.bf16.xpose.msra.mxu0 0
    %416 = vmatpush.bf16.xpose.msra.mxu0 0
    %417 = vmatpush.bf16.xpose.msra.mxu0 %v408
    %418 = vmatmul.bf16.gmra.mxu0 %v405
    %v419 = vpop.f32.mrf.mxu0
    %v420 = vadd.f32 %v220, %v419
    %v421 = vpop.f32.mrf.mxu0
    %v422 = vadd.f32 %v221, %v421
    %423 = vdwg.mxu0
    %v424 = vsel %vm288, %v420, -inf
    %425 = vmax.xlane.f32.xlu0 %v424
    %v426 = vpop.xlane.xlu0 %425
    %v427 = vsel %vm288, %v422, -inf
    %428 = vmax.xlane.f32.xlu0 %v427
    %v429 = vpop.xlane.xlu0 %428
    %v430 = vsub.f32 %v420, %v426
    %v431 = vsub.f32 %v422, %v429
    %v432 = vmul.f32 %v430, 1.442695
    %v433 = vpow.pop %v432
    %v434 = vmul.f32 %v431, 1.442695
    %v435 = vpow.pop %v434
    %v436 = vsel %vm288, %v433, 0.0
    %437 = vadd.xlane.f32.xlu0 %v436
    %v438 = vpop.xlane.xlu0 %437
    %v439 = vsel %vm288, %v435, 0.0
    %440 = vadd.xlane.f32.xlu0 %v439
    %v441 = vpop.xlane.xlu0 %440
    %v442 = vrcp.pop %v438
    %v443 = vrcp.pop %v441
    %v444 = vmul.f32 %v433, %v442
    %v445 = vmul.f32 %v435, %v443
    %v446 = vpack.c.bf16 %v445, %v444
    %447 = vrot.lane.b32.xlu0 %v263, 48
    %v448 = vpop.permute.xlu0 %447
    %v451 = vsel %vm288, %v446, 0
    %453 = vmatpush.bf16.msra.mxu0 0
    %454 = vmatpush.bf16.msra.mxu0 0
    %455 = vmatpush.bf16.msra.mxu0 0
    %456 = vmatpush.bf16.msra.mxu0 0
    %457 = vmatpush.bf16.msra.mxu0 0
    %458 = vmatpush.bf16.msra.mxu0 0
    %459 = vmatpush.bf16.msra.mxu0 0
    %460 = vmatpush.bf16.msra.mxu0 %v448
    %461 = vmatmul.bf16.gmra.mxu0 %v451
    %v462 = vpop.f32.mrf.mxu0
    %v463 = vadd.f32 0.0, %v462
    %v464 = vpop.f32.mrf.mxu0
    %v465 = vadd.f32 0.0, %v464
    %466 = vdwg.mxu0
    %467 = vrot.lane.b32.xlu0 %v262, 104
    %v468 = vpop.permute.xlu0 %467
    %469 = vrot.lane.b32.xlu0 %v263, 72
    %v470 = vpop.permute.xlu0 %469
    %v472 = vsel %vm267, %v468, 0
    %v475 = vsel %vm267, %v470, 0
    %477 = vmatpush.bf16.xpose.msra.mxu0 0
    %478 = vmatpush.bf16.xpose.msra.mxu0 0
    %479 = vmatpush.bf16.xpose.msra.mxu0 0
    %480 = vmatpush.bf16.xpose.msra.mxu0 0
    %481 = vmatpush.bf16.xpose.msra.mxu0 0
    %482 = vmatpush.bf16.xpose.msra.mxu0 0
    %483 = vmatpush.bf16.xpose.msra.mxu0 0
    %484 = vmatpush.bf16.xpose.msra.mxu0 %v475
    %485 = vmatmul.bf16.gmra.mxu0 %v472
    %v486 = vpop.f32.mrf.mxu0
    %v487 = vadd.f32 %v220, %v486
    %v488 = vpop.f32.mrf.mxu0
    %v489 = vadd.f32 %v221, %v488
    %490 = vdwg.mxu0
    %v491 = vsel %vm288, %v487, -inf
    %492 = vmax.xlane.f32.xlu0 %v491
    %v493 = vpop.xlane.xlu0 %492
    %v494 = vsel %vm288, %v489, -inf
    %495 = vmax.xlane.f32.xlu0 %v494
    %v496 = vpop.xlane.xlu0 %495
    %v497 = vsub.f32 %v487, %v493
    %v498 = vsub.f32 %v489, %v496
    %v499 = vmul.f32 %v497, 1.442695
    %v500 = vpow.pop %v499
    %v501 = vmul.f32 %v498, 1.442695
    %v502 = vpow.pop %v501
    %v503 = vsel %vm288, %v500, 0.0
    %504 = vadd.xlane.f32.xlu0 %v503
    %v505 = vpop.xlane.xlu0 %504
    %v506 = vsel %vm288, %v502, 0.0
    %507 = vadd.xlane.f32.xlu0 %v506
    %v508 = vpop.xlane.xlu0 %507
    %v509 = vrcp.pop %v505
    %v510 = vrcp.pop %v508
    %v511 = vmul.f32 %v500, %v509
    %v512 = vmul.f32 %v502, %v510
    %v513 = vpack.c.bf16 %v512, %v511
    %514 = vrot.lane.b32.xlu0 %v263, 40
    %v515 = vpop.permute.xlu0 %514
    %v518 = vsel %vm288, %v513, 0
    %520 = vmatpush.bf16.msra.mxu0 0
    %521 = vmatpush.bf16.msra.mxu0 0
    %522 = vmatpush.bf16.msra.mxu0 0
    %523 = vmatpush.bf16.msra.mxu0 0
    %524 = vmatpush.bf16.msra.mxu0 0
    %525 = vmatpush.bf16.msra.mxu0 0
    %526 = vmatpush.bf16.msra.mxu0 0
    %527 = vmatpush.bf16.msra.mxu0 %v515
    %528 = vmatmul.bf16.gmra.mxu0 %v518
    %v529 = vpop.f32.mrf.mxu0
    %v530 = vadd.f32 0.0, %v529
    %v531 = vpop.f32.mrf.mxu0
    %v532 = vadd.f32 0.0, %v531
    %533 = vdwg.mxu0
    %536 = vrot.lane.b32.xlu0 %v396, 8
    %v537 = vpop.permute.xlu0 %536
    %538 = vrot.lane.b32.xlu0 %v398, 8
    %v539 = vpop.permute.xlu0 %538
    %544 = vrot.lane.b32.xlu0 %v463, 16
    %v545 = vpop.permute.xlu0 %544
    %546 = vrot.lane.b32.xlu0 %v465, 16
    %v547 = vpop.permute.xlu0 %546
    %552 = vrot.lane.b32.xlu0 %v530, 24
    %v553 = vpop.permute.xlu0 %552
    %554 = vrot.lane.b32.xlu0 %v532, 24
    %v555 = vpop.permute.xlu0 %554
    %v558 = vsel %vm267, %v328, %v537
    %v559 = vsel %vm267, %v330, %v539
    %v560 = vsel %vm288, %v558, %v545
    %v561 = vsel %vm288, %v559, %v547
    %vm562 = vcmask 195584
    %v563 = vsel %vm562, %v560, %v553
    %v564 = vsel %vm562, %v561, %v555
    %v565 = vpack.c.bf16 %v564, %v563
    %v566 = vld [vmem:[%s17] sm:$0xf]
    %v567 = vld [vmem:[%s17 + $0x4] sm:$0xf]
    %v568 = vld [vmem:[%s17 + $0x8] sm:$0xf]
    %v569 = vld [vmem:[%s17 + $0xc] sm:$0xf]
    %v570 = vld [vmem:[%s19] sm:$0x1]
    %v572 = vperm.slane %v570, 0
    %v578 = vunpack.c.l.b16 %v566
    %v579 = vunpack.c.l.b16 %v567
    %v580 = vunpack.c.l.b16 %v568
    %v581 = vunpack.c.l.b16 %v569
    %v582 = vpack.c.b16 %v579, %v578
    %v583 = vpack.c.b16 %v581, %v580
    %v587 = vsel %vm158, %v565, 0
    %589 = vmatpush.bf16.msra.mxu0 0
    %590 = vmatpush.bf16.msra.mxu0 0
    %591 = vmatpush.bf16.msra.mxu0 0
    %592 = vmatpush.bf16.msra.mxu0 0
    %593 = vmatpush.bf16.msra.mxu0 0
    %594 = vmatpush.bf16.msra.mxu0 0
    %595 = vmatpush.bf16.msra.mxu0 %v583
    %596 = vmatpush.bf16.msra.mxu0 %v582
    %597 = vmatmul.bf16.gmra.mxu0 %v587
    %v598 = vpop.f32.mrf.mxu0
    %v599 = vadd.f32 %v572, %v598
    %v600 = vpop.f32.mrf.mxu0
    %v601 = vadd.f32 %v572, %v600
    %602 = vdwg.mxu0
    %v603 = vadd.f32 %v599, %v218
    %v604 = vadd.f32 %v601, %v219
    %v605 = vld [vmem:[%s21] sm:$0x1]
    %v606 = vld [vmem:[%s23] sm:$0x1]
    %v607 = vsel %vm158, %v603, 0.0
    %608 = vadd.xlane.f32.xlu0 %v607
    %v609 = vpop.xlane.xlu0 %608
    %v610 = vsel %vm158, %v604, 0.0
    %611 = vadd.xlane.f32.xlu0 %v610
    %v612 = vpop.xlane.xlu0 %611
    %v613 = vmul.f32 %v609, %v171
    %v614 = vmul.f32 %v612, %v171
    %v615 = vsub.f32 %v603, %v613
    %v616 = vsub.f32 %v604, %v614
    %v617 = vmul.f32 %v615, %v615
    %v618 = vmul.f32 %v616, %v616
    %v619 = vsel %vm158, %v617, 0.0
    %620 = vadd.xlane.f32.xlu0 %v619
    %v621 = vpop.xlane.xlu0 %620
    %v622 = vsel %vm158, %v618, 0.0
    %623 = vadd.xlane.f32.xlu0 %v622
    %v624 = vpop.xlane.xlu0 %623
    %v625 = vmul.f32 %v621, %v171
    %v626 = vmul.f32 %v624, %v171
    %v627 = vadd.f32 %v625, 1e-12
    %v628 = vadd.f32 %v626, 1e-12
    %v629 = vrsqrt.pop %v627
    %v630 = vmul.f32 %v629, %v627
    %v631 = vmul.f32 %v630, %v629
    %v632 = vmul.f32 0.5, %v631
    %v633 = vsub.f32 1.5, %v632
    %v634 = vmul.f32 %v629, %v633
    %vm635 = vweird.f32 %v627
    %vm636 = vweird.f32 %v629
    %vm637 = vmor %vm635, %vm636
    %v638 = vsel %vm637, %v629, %v634
    %v639 = vrsqrt.pop %v628
    %v640 = vmul.f32 %v639, %v628
    %v641 = vmul.f32 %v640, %v639
    %v642 = vmul.f32 0.5, %v641
    %v643 = vsub.f32 1.5, %v642
    %v644 = vmul.f32 %v639, %v643
    %vm645 = vweird.f32 %v628
    %vm646 = vweird.f32 %v639
    %vm647 = vmor %vm645, %vm646
    %v648 = vsel %vm647, %v639, %v644
    %v649 = vmul.f32 %v615, %v638
    %v650 = vmul.f32 %v616, %v648
    %v652 = vperm.slane %v605, 0
    %v654 = vmul.f32 %v649, %v652
    %v655 = vmul.f32 %v650, %v652
    %v657 = vperm.slane %v606, 0
    %v659 = vadd.f32 %v654, %v657
    %v660 = vadd.f32 %v655, %v657
    %v661 = vpack.c.bf16 %v660, %v659
    %v662 = vld [vmem:[%s25] sm:$0xf]
    %v663 = vld [vmem:[%s25 + $0x4] sm:$0xf]
    %v664 = vld [vmem:[%s25 + $0x8] sm:$0xf]
    %v665 = vld [vmem:[%s25 + $0xc] sm:$0xf]
    %v666 = vld [vmem:[%s27] sm:$0x1]
    %v668 = vperm.slane %v666, 0
    %v674 = vunpack.c.l.b16 %v662
    %v675 = vunpack.c.l.b16 %v663
    %v676 = vunpack.c.l.b16 %v664
    %v677 = vunpack.c.l.b16 %v665
    %v678 = vpack.c.b16 %v675, %v674
    %v679 = vpack.c.b16 %v677, %v676
    %v683 = vsel %vm158, %v661, 0
    %685 = vmatpush.bf16.msra.mxu0 0
    %686 = vmatpush.bf16.msra.mxu0 0
    %687 = vmatpush.bf16.msra.mxu0 0
    %688 = vmatpush.bf16.msra.mxu0 0
    %689 = vmatpush.bf16.msra.mxu0 0
    %690 = vmatpush.bf16.msra.mxu0 0
    %691 = vmatpush.bf16.msra.mxu0 %v679
    %692 = vmatpush.bf16.msra.mxu0 %v678
    %693 = vmatmul.bf16.gmra.mxu0 %v683
    %v694 = vpop.f32.mrf.mxu0
    %v695 = vadd.f32 %v668, %v694
    %v696 = vpop.f32.mrf.mxu0
    %v697 = vadd.f32 %v668, %v696
    %698 = vdwg.mxu0
    %v699 = vmul.f32 %v695, 0.5
    %v700 = vmul.f32 %v697, 0.5
    %v701 = vmul.f32 %v695, 0.70710677
    %v702 = vmul.f32 %v697, 0.70710677
    %v703 = vmul.f32 %v701, %v701
    %v704 = vmin.f32 16.0, %v703
    %v705 = vmul.f32 %v704, 2.1237322e-06
    %v706 = vadd.f32 %v705, 0.00028619796
    %v707 = vmul.f32 %v704, %v706
    %v708 = vadd.f32 %v707, 0.0036580483
    %v709 = vmul.f32 %v704, %v708
    %v710 = vadd.f32 %v709, 0.05243302
    %v711 = vmul.f32 %v704, %v710
    %v712 = vadd.f32 %v711, 0.18741608
    %v713 = vmul.f32 %v704, %v712
    %v714 = vadd.f32 %v713, 1.1283791
    %v715 = vmul.f32 %v701, %v714
    %v716 = vmul.f32 %v704, 3.8918573e-05
    %v717 = vadd.f32 %v716, 0.001143296
    %v718 = vmul.f32 %v704, %v717
    %v719 = vadd.f32 %v718, 0.014752088
    %v720 = vmul.f32 %v704, %v719
    %v721 = vadd.f32 %v720, 0.112945676
    %v722 = vmul.f32 %v704, %v721
    %v723 = vadd.f32 %v722, 0.4994258
    %v724 = vmul.f32 %v704, %v723
    %v725 = vadd.f32 %v724, 1.0
    %v726 = vrcp.pop %v725
    %v727 = vmul.f32 %v725, %v726
    %v728 = vsub.f32 1.0, %v727
    %v729 = vmul.f32 %v726, %v728
    %v730 = vadd.f32 %v726, %v729
    %vm731 = vweird.f32 %v725
    %vm732 = vweird.f32 %v726
    %vm733 = vmor %vm731, %vm732
    %v734 = vsel %vm733, %v726, %v730
    %v735 = vand.u32 2147483647, %v725
    %vm736 = vcmp.eq.f32.partialorder %v735, 8.507059e+37
    %v737 = vand.u32 %v725, 2147483648
    %v738 = vor.u32 1.1754944e-38, %v737
    %v739 = vsel %vm736, %v738, %v734
    %v740 = vmul.f32 %v715, %v739
    %v741 = vmin.f32 %v740, 1.0
    %v742 = vmax.f32 %v741, -1.0
    %v743 = vmul.f32 %v702, %v702
    %v744 = vmin.f32 16.0, %v743
    %v745 = vmul.f32 %v744, 2.1237322e-06
    %v746 = vadd.f32 %v745, 0.00028619796
    %v747 = vmul.f32 %v744, %v746
    %v748 = vadd.f32 %v747, 0.0036580483
    %v749 = vmul.f32 %v744, %v748
    %v750 = vadd.f32 %v749, 0.05243302
    %v751 = vmul.f32 %v744, %v750
    %v752 = vadd.f32 %v751, 0.18741608
    %v753 = vmul.f32 %v744, %v752
    %v754 = vadd.f32 %v753, 1.1283791
    %v755 = vmul.f32 %v702, %v754
    %v756 = vmul.f32 %v744, 3.8918573e-05
    %v757 = vadd.f32 %v756, 0.001143296
    %v758 = vmul.f32 %v744, %v757
    %v759 = vadd.f32 %v758, 0.014752088
    %v760 = vmul.f32 %v744, %v759
    %v761 = vadd.f32 %v760, 0.112945676
    %v762 = vmul.f32 %v744, %v761
    %v763 = vadd.f32 %v762, 0.4994258
    %v764 = vmul.f32 %v744, %v763
    %v765 = vadd.f32 %v764, 1.0
    %v766 = vrcp.pop %v765
    %v767 = vmul.f32 %v765, %v766
    %v768 = vsub.f32 1.0, %v767
    %v769 = vmul.f32 %v766, %v768
    %v770 = vadd.f32 %v766, %v769
    %vm771 = vweird.f32 %v765
    %vm772 = vweird.f32 %v766
    %vm773 = vmor %vm771, %vm772
    %v774 = vsel %vm773, %v766, %v770
    %v775 = vand.u32 2147483647, %v765
    %vm776 = vcmp.eq.f32.partialorder %v775, 8.507059e+37
    %v777 = vand.u32 %v765, 2147483648
    %v778 = vor.u32 1.1754944e-38, %v777
    %v779 = vsel %vm776, %v778, %v774
    %v780 = vmul.f32 %v755, %v779
    %v781 = vmin.f32 %v780, 1.0
    %v782 = vmax.f32 %v781, -1.0
    %v783 = vadd.f32 %v742, 1.0
    %v784 = vadd.f32 %v782, 1.0
    %v785 = vmul.f32 %v699, %v783
    %v786 = vmul.f32 %v700, %v784
    %v787 = vpack.c.bf16 %v786, %v785
    %v788 = vld [vmem:[%s29] sm:$0xf]
    %v789 = vld [vmem:[%s29 + $0x4] sm:$0xf]
    %v790 = vld [vmem:[%s29 + $0x8] sm:$0xf]
    %v791 = vld [vmem:[%s29 + $0xc] sm:$0xf]
    %v792 = vld [vmem:[%s29 + $0x10] sm:$0xf]
    %v793 = vld [vmem:[%s29 + $0x14] sm:$0xf]
    %v794 = vld [vmem:[%s29 + $0x18] sm:$0xf]
    %v795 = vld [vmem:[%s29 + $0x1c] sm:$0xf]
    %v796 = vld [vmem:[%s31] sm:$0x1]
    %v798 = vperm.slane %v796, 0
    %v808 = vunpack.c.l.b16 %v788
    %v809 = vunpack.c.l.b16 %v789
    %v810 = vunpack.c.l.b16 %v790
    %v811 = vunpack.c.l.b16 %v791
    %v812 = vunpack.c.l.b16 %v792
    %v813 = vunpack.c.l.b16 %v793
    %v814 = vunpack.c.l.b16 %v794
    %v815 = vunpack.c.l.b16 %v795
    %v816 = vpack.c.b16 %v809, %v808
    %v817 = vpack.c.b16 %v811, %v810
    %v818 = vpack.c.b16 %v813, %v812
    %v819 = vpack.c.b16 %v815, %v814
    %vm824 = vcmask 523264
    %v826 = vsel %vm824, %v787, 0
    %828 = vmatpush.bf16.msra.mxu0 0
    %829 = vmatpush.bf16.msra.mxu0 0
    %830 = vmatpush.bf16.msra.mxu0 0
    %831 = vmatpush.bf16.msra.mxu0 0
    %832 = vmatpush.bf16.msra.mxu0 %v819
    %833 = vmatpush.bf16.msra.mxu0 %v818
    %834 = vmatpush.bf16.msra.mxu0 %v817
    %835 = vmatpush.bf16.msra.mxu0 %v816
    %836 = vmatmul.bf16.gmra.mxu0 %v826
    %v837 = vpop.f32.mrf.mxu0
    %v838 = vadd.f32 %v798, %v837
    %v839 = vpop.f32.mrf.mxu0
    %v840 = vadd.f32 %v798, %v839
    %841 = vdwg.mxu0
    %v842 = vadd.f32 %v838, %v659
    %v843 = vadd.f32 %v840, %v660
    %v844 = vld [vmem:[%s33] sm:$0x1]
    %v845 = vld [vmem:[%s35] sm:$0x1]
    %v846 = vsel %vm158, %v842, 0.0
    %847 = vadd.xlane.f32.xlu0 %v846
    %v848 = vpop.xlane.xlu0 %847
    %v849 = vsel %vm158, %v843, 0.0
    %850 = vadd.xlane.f32.xlu0 %v849
    %v851 = vpop.xlane.xlu0 %850
    %v852 = vmul.f32 %v848, %v171
    %v853 = vmul.f32 %v851, %v171
    %v854 = vsub.f32 %v842, %v852
    %v855 = vsub.f32 %v843, %v853
    %v856 = vmul.f32 %v854, %v854
    %v857 = vmul.f32 %v855, %v855
    %v858 = vsel %vm158, %v856, 0.0
    %859 = vadd.xlane.f32.xlu0 %v858
    %v860 = vpop.xlane.xlu0 %859
    %v861 = vsel %vm158, %v857, 0.0
    %862 = vadd.xlane.f32.xlu0 %v861
    %v863 = vpop.xlane.xlu0 %862
    %v864 = vmul.f32 %v860, %v171
    %v865 = vmul.f32 %v863, %v171
    %v866 = vadd.f32 %v864, 1e-12
    %v867 = vadd.f32 %v865, 1e-12
    %v868 = vrsqrt.pop %v866
    %v869 = vmul.f32 %v868, %v866
    %v870 = vmul.f32 %v869, %v868
    %v871 = vmul.f32 0.5, %v870
    %v872 = vsub.f32 1.5, %v871
    %v873 = vmul.f32 %v868, %v872
    %vm874 = vweird.f32 %v866
    %vm875 = vweird.f32 %v868
    %vm876 = vmor %vm874, %vm875
    %v877 = vsel %vm876, %v868, %v873
    %v878 = vrsqrt.pop %v867
    %v879 = vmul.f32 %v878, %v867
    %v880 = vmul.f32 %v879, %v878
    %v881 = vmul.f32 0.5, %v880
    %v882 = vsub.f32 1.5, %v881
    %v883 = vmul.f32 %v878, %v882
    %vm884 = vweird.f32 %v867
    %vm885 = vweird.f32 %v878
    %vm886 = vmor %vm884, %vm885
    %v887 = vsel %vm886, %v878, %v883
    %v888 = vmul.f32 %v854, %v877
    %v889 = vmul.f32 %v855, %v887
    %v891 = vperm.slane %v844, 0
    %v893 = vmul.f32 %v888, %v891
    %v894 = vmul.f32 %v889, %v891
    %v896 = vperm.slane %v845, 0
    %v898 = vadd.f32 %v893, %v896
    %v899 = vadd.f32 %v894, %v896
    %v900 = vpack.c.bf16 %v899, %v898
    %s901 = scalar_lea.vmem %s13, 16
    %v902 = vld [vmem:[%s901] sm:$0xf]
    %v903 = vld [vmem:[%s901 + $0x4] sm:$0xf]
    %v904 = vld [vmem:[%s901 + $0x8] sm:$0xf]
    %v905 = vld [vmem:[%s901 + $0xc] sm:$0xf]
    %s906 = scalar_lea.vmem %s15, 1
    %v907 = vld [vmem:[%s906] sm:$0x1]
    %v909 = vperm.slane %v907, 0
    %v915 = vunpack.c.l.b16 %v902
    %v916 = vunpack.c.l.b16 %v903
    %v917 = vunpack.c.l.b16 %v904
    %v918 = vunpack.c.l.b16 %v905
    %v919 = vpack.c.b16 %v916, %v915
    %v920 = vpack.c.b16 %v918, %v917
    %v924 = vsel %vm158, %v900, 0
    %926 = vmatpush.bf16.msra.mxu0 0
    %927 = vmatpush.bf16.msra.mxu0 0
    %928 = vmatpush.bf16.msra.mxu0 0
    %929 = vmatpush.bf16.msra.mxu0 0
    %930 = vmatpush.bf16.msra.mxu0 0
    %931 = vmatpush.bf16.msra.mxu0 0
    %932 = vmatpush.bf16.msra.mxu0 %v920
    %933 = vmatpush.bf16.msra.mxu0 %v919
    %934 = vmatmul.bf16.gmra.mxu0 %v924
    %v935 = vpop.f32.mrf.mxu0
    %v936 = vadd.f32 %v909, %v935
    %v937 = vpop.f32.mrf.mxu0
    %v938 = vadd.f32 %v909, %v937
    %939 = vdwg.mxu0
    %v940 = vmul.f32 %v936, 0.35355338
    %v941 = vmul.f32 %v938, 0.35355338
    %v942 = vpack.c.bf16 %v941, %v940
    %v943 = vpack.c.bf16 %v938, %v936
    %945 = vrot.lane.b32.xlu0 %v943, 96
    %v946 = vpop.permute.xlu0 %945
    %v948 = vsel %vm267, %v942, 0
    %v951 = vsel %vm267, %v946, 0
    %953 = vmatpush.bf16.xpose.msra.mxu0 0
    %954 = vmatpush.bf16.xpose.msra.mxu0 0
    %955 = vmatpush.bf16.xpose.msra.mxu0 0
    %956 = vmatpush.bf16.xpose.msra.mxu0 0
    %957 = vmatpush.bf16.xpose.msra.mxu0 0
    %958 = vmatpush.bf16.xpose.msra.mxu0 0
    %959 = vmatpush.bf16.xpose.msra.mxu0 0
    %960 = vmatpush.bf16.xpose.msra.mxu0 %v951
    %961 = vmatmul.bf16.gmra.mxu0 %v948
    %v962 = vpop.f32.mrf.mxu0
    %v963 = vadd.f32 %v220, %v962
    %v964 = vpop.f32.mrf.mxu0
    %v965 = vadd.f32 %v221, %v964
    %966 = vdwg.mxu0
    %v967 = vsel %vm288, %v963, -inf
    %968 = vmax.xlane.f32.xlu0 %v967
    %v969 = vpop.xlane.xlu0 %968
    %v970 = vsel %vm288, %v965, -inf
    %971 = vmax.xlane.f32.xlu0 %v970
    %v972 = vpop.xlane.xlu0 %971
    %v973 = vsub.f32 %v963, %v969
    %v974 = vsub.f32 %v965, %v972
    %v975 = vmul.f32 %v973, 1.442695
    %v976 = vpow.pop %v975
    %v977 = vmul.f32 %v974, 1.442695
    %v978 = vpow.pop %v977
    %v979 = vsel %vm288, %v976, 0.0
    %980 = vadd.xlane.f32.xlu0 %v979
    %v981 = vpop.xlane.xlu0 %980
    %v982 = vsel %vm288, %v978, 0.0
    %983 = vadd.xlane.f32.xlu0 %v982
    %v984 = vpop.xlane.xlu0 %983
    %v985 = vrcp.pop %v981
    %v986 = vrcp.pop %v984
    %v987 = vmul.f32 %v976, %v985
    %v988 = vmul.f32 %v978, %v986
    %v989 = vpack.c.bf16 %v988, %v987
    %990 = vrot.lane.b32.xlu0 %v943, 64
    %v991 = vpop.permute.xlu0 %990
    %v994 = vsel %vm288, %v989, 0
    %996 = vmatpush.bf16.msra.mxu0 0
    %997 = vmatpush.bf16.msra.mxu0 0
    %998 = vmatpush.bf16.msra.mxu0 0
    %999 = vmatpush.bf16.msra.mxu0 0
    %1000 = vmatpush.bf16.msra.mxu0 0
    %1001 = vmatpush.bf16.msra.mxu0 0
    %1002 = vmatpush.bf16.msra.mxu0 0
    %1003 = vmatpush.bf16.msra.mxu0 %v991
    %1004 = vmatmul.bf16.gmra.mxu0 %v994
    %v1005 = vpop.f32.mrf.mxu0
    %v1006 = vadd.f32 0.0, %v1005
    %v1007 = vpop.f32.mrf.mxu0
    %v1008 = vadd.f32 0.0, %v1007
    %1009 = vdwg.mxu0
    %1011 = vrot.lane.b32.xlu0 %v942, 120
    %v1012 = vpop.permute.xlu0 %1011
    %1013 = vrot.lane.b32.xlu0 %v943, 88
    %v1014 = vpop.permute.xlu0 %1013
    %v1016 = vsel %vm267, %v1012, 0
    %v1019 = vsel %vm267, %v1014, 0
    %1021 = vmatpush.bf16.xpose.msra.mxu0 0
    %1022 = vmatpush.bf16.xpose.msra.mxu0 0
    %1023 = vmatpush.bf16.xpose.msra.mxu0 0
    %1024 = vmatpush.bf16.xpose.msra.mxu0 0
    %1025 = vmatpush.bf16.xpose.msra.mxu0 0
    %1026 = vmatpush.bf16.xpose.msra.mxu0 0
    %1027 = vmatpush.bf16.xpose.msra.mxu0 0
    %1028 = vmatpush.bf16.xpose.msra.mxu0 %v1019
    %1029 = vmatmul.bf16.gmra.mxu0 %v1016
    %v1030 = vpop.f32.mrf.mxu0
    %v1031 = vadd.f32 %v220, %v1030
    %v1032 = vpop.f32.mrf.mxu0
    %v1033 = vadd.f32 %v221, %v1032
    %1034 = vdwg.mxu0
    %v1035 = vsel %vm288, %v1031, -inf
    %1036 = vmax.xlane.f32.xlu0 %v1035
    %v1037 = vpop.xlane.xlu0 %1036
    %v1038 = vsel %vm288, %v1033, -inf
    %1039 = vmax.xlane.f32.xlu0 %v1038
    %v1040 = vpop.xlane.xlu0 %1039
    %v1041 = vsub.f32 %v1031, %v1037
    %v1042 = vsub.f32 %v1033, %v1040
    %v1043 = vmul.f32 %v1041, 1.442695
    %v1044 = vpow.pop %v1043
    %v1045 = vmul.f32 %v1042, 1.442695
    %v1046 = vpow.pop %v1045
    %v1047 = vsel %vm288, %v1044, 0.0
    %1048 = vadd.xlane.f32.xlu0 %v1047
    %v1049 = vpop.xlane.xlu0 %1048
    %v1050 = vsel %vm288, %v1046, 0.0
    %1051 = vadd.xlane.f32.xlu0 %v1050
    %v1052 = vpop.xlane.xlu0 %1051
    %v1053 = vrcp.pop %v1049
    %v1054 = vrcp.pop %v1052
    %v1055 = vmul.f32 %v1044, %v1053
    %v1056 = vmul.f32 %v1046, %v1054
    %v1057 = vpack.c.bf16 %v1056, %v1055
    %1058 = vrot.lane.b32.xlu0 %v943, 56
    %v1059 = vpop.permute.xlu0 %1058
    %v1062 = vsel %vm288, %v1057, 0
    %1064 = vmatpush.bf16.msra.mxu0 0
    %1065 = vmatpush.bf16.msra.mxu0 0
    %1066 = vmatpush.bf16.msra.mxu0 0
    %1067 = vmatpush.bf16.msra.mxu0 0
    %1068 = vmatpush.bf16.msra.mxu0 0
    %1069 = vmatpush.bf16.msra.mxu0 0
    %1070 = vmatpush.bf16.msra.mxu0 0
    %1071 = vmatpush.bf16.msra.mxu0 %v1059
    %1072 = vmatmul.bf16.gmra.mxu0 %v1062
    %v1073 = vpop.f32.mrf.mxu0
    %v1074 = vadd.f32 0.0, %v1073
    %v1075 = vpop.f32.mrf.mxu0
    %v1076 = vadd.f32 0.0, %v1075
    %1077 = vdwg.mxu0
    %1078 = vrot.lane.b32.xlu0 %v942, 112
    %v1079 = vpop.permute.xlu0 %1078
    %1080 = vrot.lane.b32.xlu0 %v943, 80
    %v1081 = vpop.permute.xlu0 %1080
    %v1083 = vsel %vm267, %v1079, 0
    %v1086 = vsel %vm267, %v1081, 0
    %1088 = vmatpush.bf16.xpose.msra.mxu0 0
    %1089 = vmatpush.bf16.xpose.msra.mxu0 0
    %1090 = vmatpush.bf16.xpose.msra.mxu0 0
    %1091 = vmatpush.bf16.xpose.msra.mxu0 0
    %1092 = vmatpush.bf16.xpose.msra.mxu0 0
    %1093 = vmatpush.bf16.xpose.msra.mxu0 0
    %1094 = vmatpush.bf16.xpose.msra.mxu0 0
    %1095 = vmatpush.bf16.xpose.msra.mxu0 %v1086
    %1096 = vmatmul.bf16.gmra.mxu0 %v1083
    %v1097 = vpop.f32.mrf.mxu0
    %v1098 = vadd.f32 %v220, %v1097
    %v1099 = vpop.f32.mrf.mxu0
    %v1100 = vadd.f32 %v221, %v1099
    %1101 = vdwg.mxu0
    %v1102 = vsel %vm288, %v1098, -inf
    %1103 = vmax.xlane.f32.xlu0 %v1102
    %v1104 = vpop.xlane.xlu0 %1103
    %v1105 = vsel %vm288, %v1100, -inf
    %1106 = vmax.xlane.f32.xlu0 %v1105
    %v1107 = vpop.xlane.xlu0 %1106
    %v1108 = vsub.f32 %v1098, %v1104
    %v1109 = vsub.f32 %v1100, %v1107
    %v1110 = vmul.f32 %v1108, 1.442695
    %v1111 = vpow.pop %v1110
    %v1112 = vmul.f32 %v1109, 1.442695
    %v1113 = vpow.pop %v1112
    %v1114 = vsel %vm288, %v1111, 0.0
    %1115 = vadd.xlane.f32.xlu0 %v1114
    %v1116 = vpop.xlane.xlu0 %1115
    %v1117 = vsel %vm288, %v1113, 0.0
    %1118 = vadd.xlane.f32.xlu0 %v1117
    %v1119 = vpop.xlane.xlu0 %1118
    %v1120 = vrcp.pop %v1116
    %v1121 = vrcp.pop %v1119
    %v1122 = vmul.f32 %v1111, %v1120
    %v1123 = vmul.f32 %v1113, %v1121
    %v1124 = vpack.c.bf16 %v1123, %v1122
    %1125 = vrot.lane.b32.xlu0 %v943, 48
    %v1126 = vpop.permute.xlu0 %1125
    %v1129 = vsel %vm288, %v1124, 0
    %1131 = vmatpush.bf16.msra.mxu0 0
    %1132 = vmatpush.bf16.msra.mxu0 0
    %1133 = vmatpush.bf16.msra.mxu0 0
    %1134 = vmatpush.bf16.msra.mxu0 0
    %1135 = vmatpush.bf16.msra.mxu0 0
    %1136 = vmatpush.bf16.msra.mxu0 0
    %1137 = vmatpush.bf16.msra.mxu0 0
    %1138 = vmatpush.bf16.msra.mxu0 %v1126
    %1139 = vmatmul.bf16.gmra.mxu0 %v1129
    %v1140 = vpop.f32.mrf.mxu0
    %v1141 = vadd.f32 0.0, %v1140
    %v1142 = vpop.f32.mrf.mxu0
    %v1143 = vadd.f32 0.0, %v1142
    %1144 = vdwg.mxu0
    %1145 = vrot.lane.b32.xlu0 %v942, 104
    %v1146 = vpop.permute.xlu0 %1145
    %1147 = vrot.lane.b32.xlu0 %v943, 72
    %v1148 = vpop.permute.xlu0 %1147
    %v1150 = vsel %vm267, %v1146, 0
    %v1153 = vsel %vm267, %v1148, 0
    %1155 = vmatpush.bf16.xpose.msra.mxu0 0
    %1156 = vmatpush.bf16.xpose.msra.mxu0 0
    %1157 = vmatpush.bf16.xpose.msra.mxu0 0
    %1158 = vmatpush.bf16.xpose.msra.mxu0 0
    %1159 = vmatpush.bf16.xpose.msra.mxu0 0
    %1160 = vmatpush.bf16.xpose.msra.mxu0 0
    %1161 = vmatpush.bf16.xpose.msra.mxu0 0
    %1162 = vmatpush.bf16.xpose.msra.mxu0 %v1153
    %1163 = vmatmul.bf16.gmra.mxu0 %v1150
    %v1164 = vpop.f32.mrf.mxu0
    %v1165 = vadd.f32 %v220, %v1164
    %v1166 = vpop.f32.mrf.mxu0
    %v1167 = vadd.f32 %v221, %v1166
    %1168 = vdwg.mxu0
    %v1169 = vsel %vm288, %v1165, -inf
    %1170 = vmax.xlane.f32.xlu0 %v1169
    %v1171 = vpop.xlane.xlu0 %1170
    %v1172 = vsel %vm288, %v1167, -inf
    %1173 = vmax.xlane.f32.xlu0 %v1172
    %v1174 = vpop.xlane.xlu0 %1173
    %v1175 = vsub.f32 %v1165, %v1171
    %v1176 = vsub.f32 %v1167, %v1174
    %v1177 = vmul.f32 %v1175, 1.442695
    %v1178 = vpow.pop %v1177
    %v1179 = vmul.f32 %v1176, 1.442695
    %v1180 = vpow.pop %v1179
    %v1181 = vsel %vm288, %v1178, 0.0
    %1182 = vadd.xlane.f32.xlu0 %v1181
    %v1183 = vpop.xlane.xlu0 %1182
    %v1184 = vsel %vm288, %v1180, 0.0
    %1185 = vadd.xlane.f32.xlu0 %v1184
    %v1186 = vpop.xlane.xlu0 %1185
    %v1187 = vrcp.pop %v1183
    %v1188 = vrcp.pop %v1186
    %v1189 = vmul.f32 %v1178, %v1187
    %v1190 = vmul.f32 %v1180, %v1188
    %v1191 = vpack.c.bf16 %v1190, %v1189
    %1192 = vrot.lane.b32.xlu0 %v943, 40
    %v1193 = vpop.permute.xlu0 %1192
    %v1196 = vsel %vm288, %v1191, 0
    %1198 = vmatpush.bf16.msra.mxu0 0
    %1199 = vmatpush.bf16.msra.mxu0 0
    %1200 = vmatpush.bf16.msra.mxu0 0
    %1201 = vmatpush.bf16.msra.mxu0 0
    %1202 = vmatpush.bf16.msra.mxu0 0
    %1203 = vmatpush.bf16.msra.mxu0 0
    %1204 = vmatpush.bf16.msra.mxu0 0
    %1205 = vmatpush.bf16.msra.mxu0 %v1193
    %1206 = vmatmul.bf16.gmra.mxu0 %v1196
    %v1207 = vpop.f32.mrf.mxu0
    %v1208 = vadd.f32 0.0, %v1207
    %v1209 = vpop.f32.mrf.mxu0
    %v1210 = vadd.f32 0.0, %v1209
    %1211 = vdwg.mxu0
    %1214 = vrot.lane.b32.xlu0 %v1074, 8
    %v1215 = vpop.permute.xlu0 %1214
    %1216 = vrot.lane.b32.xlu0 %v1076, 8
    %v1217 = vpop.permute.xlu0 %1216
    %1222 = vrot.lane.b32.xlu0 %v1141, 16
    %v1223 = vpop.permute.xlu0 %1222
    %1224 = vrot.lane.b32.xlu0 %v1143, 16
    %v1225 = vpop.permute.xlu0 %1224
    %1230 = vrot.lane.b32.xlu0 %v1208, 24
    %v1231 = vpop.permute.xlu0 %1230
    %1232 = vrot.lane.b32.xlu0 %v1210, 24
    %v1233 = vpop.permute.xlu0 %1232
    %v1236 = vsel %vm267, %v1006, %v1215
    %v1237 = vsel %vm267, %v1008, %v1217
    %v1238 = vsel %vm288, %v1236, %v1223
    %v1239 = vsel %vm288, %v1237, %v1225
    %v1240 = vsel %vm562, %v1238, %v1231
    %v1241 = vsel %vm562, %v1239, %v1233
    %v1242 = vpack.c.bf16 %v1241, %v1240
    %s1243 = scalar_lea.vmem %s17, 16
    %v1244 = vld [vmem:[%s1243] sm:$0xf]
    %v1245 = vld [vmem:[%s1243 + $0x4] sm:$0xf]
    %v1246 = vld [vmem:[%s1243 + $0x8] sm:$0xf]
    %v1247 = vld [vmem:[%s1243 + $0xc] sm:$0xf]
    %s1248 = scalar_lea.vmem %s19, 1
    %v1249 = vld [vmem:[%s1248] sm:$0x1]
    %v1251 = vperm.slane %v1249, 0
    %v1257 = vunpack.c.l.b16 %v1244
    %v1258 = vunpack.c.l.b16 %v1245
    %v1259 = vunpack.c.l.b16 %v1246
    %v1260 = vunpack.c.l.b16 %v1247
    %v1261 = vpack.c.b16 %v1258, %v1257
    %v1262 = vpack.c.b16 %v1260, %v1259
    %v1266 = vsel %vm158, %v1242, 0
    %1268 = vmatpush.bf16.msra.mxu0 0
    %1269 = vmatpush.bf16.msra.mxu0 0
    %1270 = vmatpush.bf16.msra.mxu0 0
    %1271 = vmatpush.bf16.msra.mxu0 0
    %1272 = vmatpush.bf16.msra.mxu0 0
    %1273 = vmatpush.bf16.msra.mxu0 0
    %1274 = vmatpush.bf16.msra.mxu0 %v1262
    %1275 = vmatpush.bf16.msra.mxu0 %v1261
    %1276 = vmatmul.bf16.gmra.mxu0 %v1266
    %v1277 = vpop.f32.mrf.mxu0
    %v1278 = vadd.f32 %v1251, %v1277
    %v1279 = vpop.f32.mrf.mxu0
    %v1280 = vadd.f32 %v1251, %v1279
    %1281 = vdwg.mxu0
    %v1282 = vadd.f32 %v1278, %v898
    %v1283 = vadd.f32 %v1280, %v899
    %s1284 = scalar_lea.vmem %s21, 1
    %v1285 = vld [vmem:[%s1284] sm:$0x1]
    %s1286 = scalar_lea.vmem %s23, 1
    %v1287 = vld [vmem:[%s1286] sm:$0x1]
    %v1288 = vsel %vm158, %v1282, 0.0
    %1289 = vadd.xlane.f32.xlu0 %v1288
    %v1290 = vpop.xlane.xlu0 %1289
    %v1291 = vsel %vm158, %v1283, 0.0
    %1292 = vadd.xlane.f32.xlu0 %v1291
    %v1293 = vpop.xlane.xlu0 %1292
    %v1294 = vmul.f32 %v1290, %v171
    %v1295 = vmul.f32 %v1293, %v171
    %v1296 = vsub.f32 %v1282, %v1294
    %v1297 = vsub.f32 %v1283, %v1295
    %v1298 = vmul.f32 %v1296, %v1296
    %v1299 = vmul.f32 %v1297, %v1297
    %v1300 = vsel %vm158, %v1298, 0.0
    %1301 = vadd.xlane.f32.xlu0 %v1300
    %v1302 = vpop.xlane.xlu0 %1301
    %v1303 = vsel %vm158, %v1299, 0.0
    %1304 = vadd.xlane.f32.xlu0 %v1303
    %v1305 = vpop.xlane.xlu0 %1304
    %v1306 = vmul.f32 %v1302, %v171
    %v1307 = vmul.f32 %v1305, %v171
    %v1308 = vadd.f32 %v1306, 1e-12
    %v1309 = vadd.f32 %v1307, 1e-12
    %v1310 = vrsqrt.pop %v1308
    %v1311 = vmul.f32 %v1310, %v1308
    %v1312 = vmul.f32 %v1311, %v1310
    %v1313 = vmul.f32 0.5, %v1312
    %v1314 = vsub.f32 1.5, %v1313
    %v1315 = vmul.f32 %v1310, %v1314
    %vm1316 = vweird.f32 %v1308
    %vm1317 = vweird.f32 %v1310
    %vm1318 = vmor %vm1316, %vm1317
    %v1319 = vsel %vm1318, %v1310, %v1315
    %v1320 = vrsqrt.pop %v1309
    %v1321 = vmul.f32 %v1320, %v1309
    %v1322 = vmul.f32 %v1321, %v1320
    %v1323 = vmul.f32 0.5, %v1322
    %v1324 = vsub.f32 1.5, %v1323
    %v1325 = vmul.f32 %v1320, %v1324
    %vm1326 = vweird.f32 %v1309
    %vm1327 = vweird.f32 %v1320
    %vm1328 = vmor %vm1326, %vm1327
    %v1329 = vsel %vm1328, %v1320, %v1325
    %v1330 = vmul.f32 %v1296, %v1319
    %v1331 = vmul.f32 %v1297, %v1329
    %v1333 = vperm.slane %v1285, 0
    %v1335 = vmul.f32 %v1330, %v1333
    %v1336 = vmul.f32 %v1331, %v1333
    %v1338 = vperm.slane %v1287, 0
    %v1340 = vadd.f32 %v1335, %v1338
    %v1341 = vadd.f32 %v1336, %v1338
    %v1342 = vpack.c.bf16 %v1341, %v1340
    %s1343 = scalar_lea.vmem %s25, 16
    %v1344 = vld [vmem:[%s1343] sm:$0xf]
    %v1345 = vld [vmem:[%s1343 + $0x4] sm:$0xf]
    %v1346 = vld [vmem:[%s1343 + $0x8] sm:$0xf]
    %v1347 = vld [vmem:[%s1343 + $0xc] sm:$0xf]
    %s1348 = scalar_lea.vmem %s27, 1
    %v1349 = vld [vmem:[%s1348] sm:$0x1]
    %v1351 = vperm.slane %v1349, 0
    %v1357 = vunpack.c.l.b16 %v1344
    %v1358 = vunpack.c.l.b16 %v1345
    %v1359 = vunpack.c.l.b16 %v1346
    %v1360 = vunpack.c.l.b16 %v1347
    %v1361 = vpack.c.b16 %v1358, %v1357
    %v1362 = vpack.c.b16 %v1360, %v1359
    %v1366 = vsel %vm158, %v1342, 0
    %1368 = vmatpush.bf16.msra.mxu0 0
    %1369 = vmatpush.bf16.msra.mxu0 0
    %1370 = vmatpush.bf16.msra.mxu0 0
    %1371 = vmatpush.bf16.msra.mxu0 0
    %1372 = vmatpush.bf16.msra.mxu0 0
    %1373 = vmatpush.bf16.msra.mxu0 0
    %1374 = vmatpush.bf16.msra.mxu0 %v1362
    %1375 = vmatpush.bf16.msra.mxu0 %v1361
    %1376 = vmatmul.bf16.gmra.mxu0 %v1366
    %v1377 = vpop.f32.mrf.mxu0
    %v1378 = vadd.f32 %v1351, %v1377
    %v1379 = vpop.f32.mrf.mxu0
    %v1380 = vadd.f32 %v1351, %v1379
    %1381 = vdwg.mxu0
    %v1382 = vmul.f32 %v1378, 0.5
    %v1383 = vmul.f32 %v1380, 0.5
    %v1384 = vmul.f32 %v1378, 0.70710677
    %v1385 = vmul.f32 %v1380, 0.70710677
    %v1386 = vmul.f32 %v1384, %v1384
    %v1387 = vmin.f32 16.0, %v1386
    %v1388 = vmul.f32 %v1387, 2.1237322e-06
    %v1389 = vadd.f32 %v1388, 0.00028619796
    %v1390 = vmul.f32 %v1387, %v1389
    %v1391 = vadd.f32 %v1390, 0.0036580483
    %v1392 = vmul.f32 %v1387, %v1391
    %v1393 = vadd.f32 %v1392, 0.05243302
    %v1394 = vmul.f32 %v1387, %v1393
    %v1395 = vadd.f32 %v1394, 0.18741608
    %v1396 = vmul.f32 %v1387, %v1395
    %v1397 = vadd.f32 %v1396, 1.1283791
    %v1398 = vmul.f32 %v1384, %v1397
    %v1399 = vmul.f32 %v1387, 3.8918573e-05
    %v1400 = vadd.f32 %v1399, 0.001143296
    %v1401 = vmul.f32 %v1387, %v1400
    %v1402 = vadd.f32 %v1401, 0.014752088
    %v1403 = vmul.f32 %v1387, %v1402
    %v1404 = vadd.f32 %v1403, 0.112945676
    %v1405 = vmul.f32 %v1387, %v1404
    %v1406 = vadd.f32 %v1405, 0.4994258
    %v1407 = vmul.f32 %v1387, %v1406
    %v1408 = vadd.f32 %v1407, 1.0
    %v1409 = vrcp.pop %v1408
    %v1410 = vmul.f32 %v1408, %v1409
    %v1411 = vsub.f32 1.0, %v1410
    %v1412 = vmul.f32 %v1409, %v1411
    %v1413 = vadd.f32 %v1409, %v1412
    %vm1414 = vweird.f32 %v1408
    %vm1415 = vweird.f32 %v1409
    %vm1416 = vmor %vm1414, %vm1415
    %v1417 = vsel %vm1416, %v1409, %v1413
    %v1418 = vand.u32 2147483647, %v1408
    %vm1419 = vcmp.eq.f32.partialorder %v1418, 8.507059e+37
    %v1420 = vand.u32 %v1408, 2147483648
    %v1421 = vor.u32 1.1754944e-38, %v1420
    %v1422 = vsel %vm1419, %v1421, %v1417
    %v1423 = vmul.f32 %v1398, %v1422
    %v1424 = vmin.f32 %v1423, 1.0
    %v1425 = vmax.f32 %v1424, -1.0
    %v1426 = vmul.f32 %v1385, %v1385
    %v1427 = vmin.f32 16.0, %v1426
    %v1428 = vmul.f32 %v1427, 2.1237322e-06
    %v1429 = vadd.f32 %v1428, 0.00028619796
    %v1430 = vmul.f32 %v1427, %v1429
    %v1431 = vadd.f32 %v1430, 0.0036580483
    %v1432 = vmul.f32 %v1427, %v1431
    %v1433 = vadd.f32 %v1432, 0.05243302
    %v1434 = vmul.f32 %v1427, %v1433
    %v1435 = vadd.f32 %v1434, 0.18741608
    %v1436 = vmul.f32 %v1427, %v1435
    %v1437 = vadd.f32 %v1436, 1.1283791
    %v1438 = vmul.f32 %v1385, %v1437
    %v1439 = vmul.f32 %v1427, 3.8918573e-05
    %v1440 = vadd.f32 %v1439, 0.001143296
    %v1441 = vmul.f32 %v1427, %v1440
    %v1442 = vadd.f32 %v1441, 0.014752088
    %v1443 = vmul.f32 %v1427, %v1442
    %v1444 = vadd.f32 %v1443, 0.112945676
    %v1445 = vmul.f32 %v1427, %v1444
    %v1446 = vadd.f32 %v1445, 0.4994258
    %v1447 = vmul.f32 %v1427, %v1446
    %v1448 = vadd.f32 %v1447, 1.0
    %v1449 = vrcp.pop %v1448
    %v1450 = vmul.f32 %v1448, %v1449
    %v1451 = vsub.f32 1.0, %v1450
    %v1452 = vmul.f32 %v1449, %v1451
    %v1453 = vadd.f32 %v1449, %v1452
    %vm1454 = vweird.f32 %v1448
    %vm1455 = vweird.f32 %v1449
    %vm1456 = vmor %vm1454, %vm1455
    %v1457 = vsel %vm1456, %v1449, %v1453
    %v1458 = vand.u32 2147483647, %v1448
    %vm1459 = vcmp.eq.f32.partialorder %v1458, 8.507059e+37
    %v1460 = vand.u32 %v1448, 2147483648
    %v1461 = vor.u32 1.1754944e-38, %v1460
    %v1462 = vsel %vm1459, %v1461, %v1457
    %v1463 = vmul.f32 %v1438, %v1462
    %v1464 = vmin.f32 %v1463, 1.0
    %v1465 = vmax.f32 %v1464, -1.0
    %v1466 = vadd.f32 %v1425, 1.0
    %v1467 = vadd.f32 %v1465, 1.0
    %v1468 = vmul.f32 %v1382, %v1466
    %v1469 = vmul.f32 %v1383, %v1467
    %v1470 = vpack.c.bf16 %v1469, %v1468
    %s1471 = scalar_lea.vmem %s29, 32
    %v1472 = vld [vmem:[%s1471] sm:$0xf]
    %v1473 = vld [vmem:[%s1471 + $0x4] sm:$0xf]
    %v1474 = vld [vmem:[%s1471 + $0x8] sm:$0xf]
    %v1475 = vld [vmem:[%s1471 + $0xc] sm:$0xf]
    %v1476 = vld [vmem:[%s1471 + $0x10] sm:$0xf]
    %v1477 = vld [vmem:[%s1471 + $0x14] sm:$0xf]
    %v1478 = vld [vmem:[%s1471 + $0x18] sm:$0xf]
    %v1479 = vld [vmem:[%s1471 + $0x1c] sm:$0xf]
    %s1480 = scalar_lea.vmem %s31, 1
    %v1481 = vld [vmem:[%s1480] sm:$0x1]
    %v1483 = vperm.slane %v1481, 0
    %v1493 = vunpack.c.l.b16 %v1472
    %v1494 = vunpack.c.l.b16 %v1473
    %v1495 = vunpack.c.l.b16 %v1474
    %v1496 = vunpack.c.l.b16 %v1475
    %v1497 = vunpack.c.l.b16 %v1476
    %v1498 = vunpack.c.l.b16 %v1477
    %v1499 = vunpack.c.l.b16 %v1478
    %v1500 = vunpack.c.l.b16 %v1479
    %v1501 = vpack.c.b16 %v1494, %v1493
    %v1502 = vpack.c.b16 %v1496, %v1495
    %v1503 = vpack.c.b16 %v1498, %v1497
    %v1504 = vpack.c.b16 %v1500, %v1499
    %v1510 = vsel %vm824, %v1470, 0
    %1512 = vmatpush.bf16.msra.mxu0 0
    %1513 = vmatpush.bf16.msra.mxu0 0
    %1514 = vmatpush.bf16.msra.mxu0 0
    %1515 = vmatpush.bf16.msra.mxu0 0
    %1516 = vmatpush.bf16.msra.mxu0 %v1504
    %1517 = vmatpush.bf16.msra.mxu0 %v1503
    %1518 = vmatpush.bf16.msra.mxu0 %v1502
    %1519 = vmatpush.bf16.msra.mxu0 %v1501
    %1520 = vmatmul.bf16.gmra.mxu0 %v1510
    %v1521 = vpop.f32.mrf.mxu0
    %v1522 = vadd.f32 %v1483, %v1521
    %v1523 = vpop.f32.mrf.mxu0
    %v1524 = vadd.f32 %v1483, %v1523
    %1525 = vdwg.mxu0
    %v1526 = vadd.f32 %v1522, %v1340
    %v1527 = vadd.f32 %v1524, %v1341
    %s1528 = scalar_lea.vmem %s33, 1
    %v1529 = vld [vmem:[%s1528] sm:$0x1]
    %s1530 = scalar_lea.vmem %s35, 1
    %v1531 = vld [vmem:[%s1530] sm:$0x1]
    %v1532 = vsel %vm158, %v1526, 0.0
    %1533 = vadd.xlane.f32.xlu0 %v1532
    %v1534 = vpop.xlane.xlu0 %1533
    %v1535 = vsel %vm158, %v1527, 0.0
    %1536 = vadd.xlane.f32.xlu0 %v1535
    %v1537 = vpop.xlane.xlu0 %1536
    %v1538 = vmul.f32 %v1534, %v171
    %v1539 = vmul.f32 %v1537, %v171
    %v1540 = vsub.f32 %v1526, %v1538
    %v1541 = vsub.f32 %v1527, %v1539
    %v1542 = vmul.f32 %v1540, %v1540
    %v1543 = vmul.f32 %v1541, %v1541
    %v1544 = vsel %vm158, %v1542, 0.0
    %1545 = vadd.xlane.f32.xlu0 %v1544
    %v1546 = vpop.xlane.xlu0 %1545
    %v1547 = vsel %vm158, %v1543, 0.0
    %1548 = vadd.xlane.f32.xlu0 %v1547
    %v1549 = vpop.xlane.xlu0 %1548
    %v1550 = vmul.f32 %v1546, %v171
    %v1551 = vmul.f32 %v1549, %v171
    %v1552 = vadd.f32 %v1550, 1e-12
    %v1553 = vadd.f32 %v1551, 1e-12
    %v1554 = vrsqrt.pop %v1552
    %v1555 = vmul.f32 %v1554, %v1552
    %v1556 = vmul.f32 %v1555, %v1554
    %v1557 = vmul.f32 0.5, %v1556
    %v1558 = vsub.f32 1.5, %v1557
    %v1559 = vmul.f32 %v1554, %v1558
    %vm1560 = vweird.f32 %v1552
    %vm1561 = vweird.f32 %v1554
    %vm1562 = vmor %vm1560, %vm1561
    %v1563 = vsel %vm1562, %v1554, %v1559
    %v1564 = vrsqrt.pop %v1553
    %v1565 = vmul.f32 %v1564, %v1553
    %v1566 = vmul.f32 %v1565, %v1564
    %v1567 = vmul.f32 0.5, %v1566
    %v1568 = vsub.f32 1.5, %v1567
    %v1569 = vmul.f32 %v1564, %v1568
    %vm1570 = vweird.f32 %v1553
    %vm1571 = vweird.f32 %v1564
    %vm1572 = vmor %vm1570, %vm1571
    %v1573 = vsel %vm1572, %v1564, %v1569
    %v1574 = vmul.f32 %v1540, %v1563
    %v1575 = vmul.f32 %v1541, %v1573
    %v1577 = vperm.slane %v1529, 0
    %v1579 = vmul.f32 %v1574, %v1577
    %v1580 = vmul.f32 %v1575, %v1577
    %v1582 = vperm.slane %v1531, 0
    %v1584 = vadd.f32 %v1579, %v1582
    %v1585 = vadd.f32 %v1580, %v1582
    %v1586 = vld [vmem:[%s5] sm:$0xff]
    %v1587 = vld [vmem:[%s5 + $0x8] sm:$0xff]
    %v1588 = vpack.c.bf16 %v1585, %v1584
    %v1589 = vld [vmem:[%s37] sm:$0xf]
    %v1590 = vld [vmem:[%s37 + $0x4] sm:$0xf]
    %v1591 = vld [vmem:[%s37 + $0x8] sm:$0xf]
    %v1592 = vld [vmem:[%s37 + $0xc] sm:$0xf]
    %v1593 = vld [vmem:[%s39] sm:$0x1]
    %v1595 = vperm.slane %v1593, 0
    %v1601 = vunpack.c.l.b16 %v1589
    %v1602 = vunpack.c.l.b16 %v1590
    %v1603 = vunpack.c.l.b16 %v1591
    %v1604 = vunpack.c.l.b16 %v1592
    %v1605 = vpack.c.b16 %v1602, %v1601
    %v1606 = vpack.c.b16 %v1604, %v1603
    %v1610 = vsel %vm158, %v1588, 0
    %1612 = vmatpush.bf16.msra.mxu0 0
    %1613 = vmatpush.bf16.msra.mxu0 0
    %1614 = vmatpush.bf16.msra.mxu0 0
    %1615 = vmatpush.bf16.msra.mxu0 0
    %1616 = vmatpush.bf16.msra.mxu0 0
    %1617 = vmatpush.bf16.msra.mxu0 0
    %1618 = vmatpush.bf16.msra.mxu0 %v1606
    %1619 = vmatpush.bf16.msra.mxu0 %v1605
    %1620 = vmatmul.bf16.gmra.mxu0 %v1610
    %v1621 = vpop.f32.mrf.mxu0
    %v1622 = vadd.f32 %v1595, %v1621
    %v1623 = vpop.f32.mrf.mxu0
    %v1624 = vadd.f32 %v1595, %v1623
    %1625 = vdwg.mxu0
    %v1626 = vmax.f32 %v1622, 0.0
    %v1627 = vmax.f32 %v1624, 0.0
    %v1628 = vpack.c.bf16 %v1627, %v1626
    %v1629 = vld [vmem:[%s41] sm:$0xf]
    %v1630 = vld [vmem:[%s41 + $0x4] sm:$0xf]
    %v1631 = vld [vmem:[%s41 + $0x8] sm:$0xf]
    %v1632 = vld [vmem:[%s41 + $0xc] sm:$0xf]
    %v1633 = vld [vmem:[%s43] sm:$0x1]
    %v1635 = vperm.slane %v1633, 0
    %v1641 = vunpack.c.l.b16 %v1629
    %v1642 = vunpack.c.l.b16 %v1630
    %v1643 = vunpack.c.l.b16 %v1631
    %v1644 = vunpack.c.l.b16 %v1632
    %v1645 = vpack.c.b16 %v1642, %v1641
    %v1646 = vpack.c.b16 %v1644, %v1643
    %v1650 = vsel %vm158, %v1628, 0
    %1652 = vmatpush.bf16.msra.mxu0 0
    %1653 = vmatpush.bf16.msra.mxu0 0
    %1654 = vmatpush.bf16.msra.mxu0 0
    %1655 = vmatpush.bf16.msra.mxu0 0
    %1656 = vmatpush.bf16.msra.mxu0 0
    %1657 = vmatpush.bf16.msra.mxu0 0
    %1658 = vmatpush.bf16.msra.mxu0 %v1646
    %1659 = vmatpush.bf16.msra.mxu0 %v1645
    %1660 = vmatmul.bf16.gmra.mxu0 %v1650
    %v1661 = vpop.f32.mrf.mxu0
    %v1662 = vadd.f32 %v1635, %v1661
    %v1663 = vpop.f32.mrf.mxu0
    %v1664 = vadd.f32 %v1635, %v1663
    %1665 = vdwg.mxu0
    %vm1666 = vcmask 15360
    %v1667 = vsel %vm1666, %v1662, -inf
    %1668 = vmax.xlane.f32.xlu0 %v1667
    %v1669 = vpop.xlane.xlu0 %1668
    %v1670 = vsel %vm1666, %v1664, -inf
    %1671 = vmax.xlane.f32.xlu0 %v1670
    %v1672 = vpop.xlane.xlu0 %1671
    %vm1673 = vcmp.ge.f32.partialorder %v1662, %v1669
    %vm1674 = vcmp.ge.f32.partialorder %v1664, %v1672
    %v1675 = vsel %vm1673, 1, 0
    %v1676 = vsel %vm1674, 1, 0
    %v1677 = vcvt.s32.f32 %v1675
    %v1678 = vcvt.s32.f32 %v1676
    %v1679 = vlaneseq
    %v1680 = vand.u32 %v1679, 127
    %vm1681 = vcmp.eq.s32.totalorder %v1680, 1
    %v1682 = vsel %vm1681, 1, 0
    %v1683 = vcvt.s32.f32 %v1682
    %1685 = vset.pattern.permute.xlu0 0
    %1686 = vperm.xlu0 %1685, %v1586
    %v1687 = vpop.permute.xlu0 %1686
    %1690 = vset.pattern.permute.xlu0 0
    %1691 = vperm.xlu0 %1690, %v1587
    %v1692 = vpop.permute.xlu0 %1691
    %v1694 = vmul.f32 %v1677, %v1687
    %v1695 = vmul.f32 %v1678, %v1692
    %v1696 = vsub.f32 1.0, %v1586
    %v1697 = vsub.f32 1.0, %v1587
    %1699 = vset.pattern.permute.xlu0 0
    %1700 = vperm.xlu0 %1699, %v1696
    %v1701 = vpop.permute.xlu0 %1700
    %1704 = vset.pattern.permute.xlu0 0
    %1705 = vperm.xlu0 %1704, %v1697
    %v1706 = vpop.permute.xlu0 %1705
    %v1708 = vmul.f32 %v1701, %v1683
    %v1709 = vmul.f32 %v1706, %v1683
    %v1710 = vadd.f32 %v1694, %v1708
    %v1711 = vadd.f32 %v1695, %v1709
    %1712 = vst.msk [vmem:[%s75] sm:$0xff] %vm1666, %v1710
    %1713 = vst.msk [vmem:[%s75 + $0x8] sm:$0xff] %vm1666, %v1711
    %1715 = vset.pattern.permute.xlu0 0
    %1716 = vperm.xlu0 %1715, %v1710
    %v1717 = vpop.permute.xlu0 %1716
    %1720 = vset.pattern.permute.xlu0 0
    %1721 = vperm.xlu0 %1720, %v1711
    %v1722 = vpop.permute.xlu0 %1721
    %v1724 = vmul.f32 %v1584, %v1717
    %v1725 = vmul.f32 %v1585, %v1722
    %v1726 = vld [vmem:[%s45] sm:$0xf]
    %v1727 = vld [vmem:[%s45 + $0x4] sm:$0xf]
    %v1728 = vld [vmem:[%s45 + $0x8] sm:$0xf]
    %v1729 = vld [vmem:[%s45 + $0xc] sm:$0xf]
    %v1730 = vld [vmem:[%s47] sm:$0x1]
    %v1731 = vld [vmem:[%s49] sm:$0xf]
    %v1732 = vld [vmem:[%s49 + $0x4] sm:$0xf]
    %v1733 = vld [vmem:[%s49 + $0x8] sm:$0xf]
    %v1734 = vld [vmem:[%s49 + $0xc] sm:$0xf]
    %v1735 = vld [vmem:[%s49 + $0x10] sm:$0xf]
    %v1736 = vld [vmem:[%s49 + $0x14] sm:$0xf]
    %v1737 = vld [vmem:[%s49 + $0x18] sm:$0xf]
    %v1738 = vld [vmem:[%s49 + $0x1c] sm:$0xf]
    %v1739 = vld [vmem:[%s49 + $0x20] sm:$0xf]
    %v1740 = vld [vmem:[%s49 + $0x24] sm:$0xf]
    %v1741 = vld [vmem:[%s49 + $0x28] sm:$0xf]
    %v1742 = vld [vmem:[%s49 + $0x2c] sm:$0xf]
    %v1743 = vld [vmem:[%s49 + $0x30] sm:$0x3]
    %v1744 = vld [vmem:[%s51] sm:$0x1]
    %v1745 = vld [vmem:[%s53] sm:$0xf]
    %v1746 = vld [vmem:[%s53 + $0x4] sm:$0x1]
    %v1747 = vld [vmem:[%s55] sm:$0x1]
    %v1748 = vpack.c.bf16 %v1725, %v1724
    %v1750 = vperm.slane %v1730, 0
    %v1756 = vunpack.c.l.b16 %v1726
    %v1757 = vunpack.c.l.b16 %v1727
    %v1758 = vunpack.c.l.b16 %v1728
    %v1759 = vunpack.c.l.b16 %v1729
    %v1760 = vpack.c.b16 %v1757, %v1756
    %v1761 = vpack.c.b16 %v1759, %v1758
    %v1765 = vsel %vm158, %v1748, 0
    %1767 = vmatpush.bf16.msra.mxu0 0
    %1768 = vmatpush.bf16.msra.mxu0 0
    %1769 = vmatpush.bf16.msra.mxu0 0
    %1770 = vmatpush.bf16.msra.mxu0 0
    %1771 = vmatpush.bf16.msra.mxu0 0
    %1772 = vmatpush.bf16.msra.mxu0 0
    %1773 = vmatpush.bf16.msra.mxu0 %v1761
    %1774 = vmatpush.bf16.msra.mxu0 %v1760
    %1775 = vmatmul.bf16.gmra.mxu0 %v1765
    %v1776 = vpop.f32.mrf.mxu0
    %v1777 = vadd.f32 %v1750, %v1776
    %v1778 = vpop.f32.mrf.mxu0
    %v1779 = vadd.f32 %v1750, %v1778
    %1780 = vdwg.mxu0
    %vm1781 = vcmask 818176
    %v1782 = vsel %vm1781, %v1777, -inf
    %v1783 = vrot.slane %v1782, 4
    %v1784 = vmax.f32 %v1782, %v1783
    %v1785 = vrot.slane %v1784, 2
    %v1786 = vmax.f32 %v1784, %v1785
    %v1787 = vrot.slane %v1786, 1
    %v1788 = vmax.f32 %v1786, %v1787
    %v1789 = vsel %vm1781, %v1779, -inf
    %v1790 = vrot.slane %v1789, 4
    %v1791 = vmax.f32 %v1789, %v1790
    %v1792 = vrot.slane %v1791, 2
    %v1793 = vmax.f32 %v1791, %v1792
    %v1794 = vrot.slane %v1793, 1
    %v1795 = vmax.f32 %v1793, %v1794
    %vm1796 = vcmask 1040384
    %v1797 = vsel %vm1796, %v1788, %v1795
    %v1798 = vpack.c.bf16 %v1797, %v1797
    %v1800 = vperm.slane %v1744, 0
    %v1815 = vunpack.c.l.b16 %v1731
    %v1816 = vunpack.c.l.b16 %v1732
    %v1817 = vunpack.c.l.b16 %v1733
    %v1818 = vunpack.c.l.b16 %v1734
    %v1819 = vunpack.c.l.b16 %v1735
    %v1820 = vunpack.c.l.b16 %v1736
    %v1821 = vunpack.c.l.b16 %v1737
    %v1822 = vunpack.c.l.b16 %v1738
    %v1823 = vunpack.c.l.b16 %v1739
    %v1824 = vunpack.c.l.b16 %v1740
    %v1825 = vunpack.c.l.b16 %v1741
    %v1826 = vunpack.c.l.b16 %v1742
    %v1827 = vunpack.c.l.b16 %v1743
    %v1828 = vpack.c.b16 %v1816, %v1815
    %v1829 = vpack.c.b16 %v1818, %v1817
    %v1830 = vpack.c.b16 %v1820, %v1819
    %v1831 = vpack.c.b16 %v1822, %v1821
    %v1832 = vpack.c.b16 %v1824, %v1823
    %v1833 = vpack.c.b16 %v1826, %v1825
    %v1834 = vpack.c.b16 %v1827, %v1827
    %v1842 = vsel %vm1781, %v1798, 0
    %vm1844 = vcmask 1041408
    %v1846 = vsel %vm1844, %v1834, 0
    %1848 = vmatpush.bf16.msra.mxu0 0
    %1849 = vmatpush.bf16.msra.mxu0 %v1846
    %1850 = vmatpush.bf16.msra.mxu0 %v1833
    %1851 = vmatpush.bf16.msra.mxu0 %v1832
    %1852 = vmatpush.bf16.msra.mxu0 %v1831
    %1853 = vmatpush.bf16.msra.mxu0 %v1830
    %1854 = vmatpush.bf16.msra.mxu0 %v1829
    %1855 = vmatpush.bf16.msra.mxu0 %v1828
    %1856 = vmatmul.bf16.gmra.mxu0 %v1842
    %v1857 = vpop.f32.mrf.mxu0
    %v1858 = vadd.f32 %v1800, %v1857
    %v1859 = vpop.f32.mrf.mxu0
    %1860 = vdwg.mxu0
    %v1861 = vtanh.pop %v1858
    %v1862 = vpack.c.bf16 %v1861, %v1861
    %v1864 = vperm.slane %v1747, 0
    %v1868 = vunpack.c.l.b16 %v1745
    %v1869 = vunpack.c.l.b16 %v1746
    %v1870 = vpack.c.b16 %v1869, %v1868
    %vm1871 = vcmask 80896
    %v1873 = vsel %vm1871, %v1862, 0
    %vm1875 = vcmask 1044480
    %v1877 = vsel %vm1875, %v1870, 0
    %1879 = vmatpush.bf16.msra.mxu0 0
    %1880 = vmatpush.bf16.msra.mxu0 0
    %1881 = vmatpush.bf16.msra.mxu0 0
    %1882 = vmatpush.bf16.msra.mxu0 0
    %1883 = vmatpush.bf16.msra.mxu0 0
    %1884 = vmatpush.bf16.msra.mxu0 0
    %1885 = vmatpush.bf16.msra.mxu0 0
    %1886 = vmatpush.bf16.msra.mxu0 %v1877
    %1887 = vmatmul.bf16.gmra.mxu0 %v1873
    %v1888 = vpop.f32.mrf.mxu0
    %v1889 = vadd.f32 %v1864, %v1888
    %v1890 = vpop.f32.mrf.mxu0
    %1891 = vdwg.mxu0
    %vm1892 = vcmask 9216
    %1893 = vst.msk [vmem:[#allocation2] sm:$0x3] %vm1892, %v1889
    %v1894 = vld [vmem:[%s7] sm:$0x3]
    %v1895 = vld [vmem:[%s57] sm:$0x1]
    %1897 = vset.pattern.permute.xlu0 0
    %1898 = vperm.xlu0 %1897, %v1894
    %v1899 = vpop.permute.xlu0 %1898
    %v1902 = vperm.slane %v1895, 0
    %v1904 = vmul.f32 %v1899, %v1902
    %v1905 = vld [vmem:[%s59] sm:$0xf]
    %v1906 = vld [vmem:[%s59 + $0x4] sm:$0xf]
    %v1907 = vld [vmem:[%s59 + $0x8] sm:$0xf]
    %v1908 = vld [vmem:[%s59 + $0xc] sm:$0xf]
    %v1909 = vld [vmem:[%s61] sm:$0x1]
    %v1910 = vld [vmem:[%s63] sm:$0xf]
    %v1911 = vld [vmem:[%s63 + $0x4] sm:$0xf]
    %v1912 = vld [vmem:[%s63 + $0x8] sm:$0xf]
    %v1913 = vld [vmem:[%s63 + $0xc] sm:$0xf]
    %v1914 = vld [vmem:[%s63 + $0x10] sm:$0xf]
    %v1915 = vld [vmem:[%s63 + $0x14] sm:$0xf]
    %v1916 = vld [vmem:[%s63 + $0x18] sm:$0xf]
    %v1917 = vld [vmem:[%s63 + $0x1c] sm:$0xf]
    %v1918 = vld [vmem:[%s63 + $0x20] sm:$0xf]
    %v1919 = vld [vmem:[%s63 + $0x24] sm:$0xf]
    %v1920 = vld [vmem:[%s63 + $0x28] sm:$0xf]
    %v1921 = vld [vmem:[%s63 + $0x2c] sm:$0xf]
    %v1922 = vld [vmem:[%s63 + $0x30] sm:$0x3]
    %v1923 = vld [vmem:[%s65] sm:$0x1]
    %v1924 = vld [vmem:[%s67] sm:$0xf]
    %v1925 = vld [vmem:[%s67 + $0x4] sm:$0x1]
    %v1926 = vld [vmem:[%s69] sm:$0x1]
    %v1928 = vperm.slane %v1909, 0
    %v1934 = vunpack.c.l.b16 %v1905
    %v1935 = vunpack.c.l.b16 %v1906
    %v1936 = vunpack.c.l.b16 %v1907
    %v1937 = vunpack.c.l.b16 %v1908
    %v1938 = vpack.c.b16 %v1935, %v1934
    %v1939 = vpack.c.b16 %v1937, %v1936
    %1942 = vmatpush.bf16.msra.mxu0 0
    %1943 = vmatpush.bf16.msra.mxu0 0
    %1944 = vmatpush.bf16.msra.mxu0 0
    %1945 = vmatpush.bf16.msra.mxu0 0
    %1946 = vmatpush.bf16.msra.mxu0 0
    %1947 = vmatpush.bf16.msra.mxu0 0
    %1948 = vmatpush.bf16.msra.mxu0 %v1939
    %1949 = vmatpush.bf16.msra.mxu0 %v1938
    %1950 = vmatmul.bf16.gmra.mxu0 %v1765
    %v1951 = vpop.f32.mrf.mxu0
    %v1952 = vadd.f32 %v1928, %v1951
    %v1953 = vpop.f32.mrf.mxu0
    %v1954 = vadd.f32 %v1928, %v1953
    %1955 = vdwg.mxu0
    %v1956 = vsel %vm1781, %v1952, -inf
    %v1957 = vrot.slane %v1956, 4
    %v1958 = vmax.f32 %v1956, %v1957
    %v1959 = vrot.slane %v1958, 2
    %v1960 = vmax.f32 %v1958, %v1959
    %v1961 = vrot.slane %v1960, 1
    %v1962 = vmax.f32 %v1960, %v1961
    %v1963 = vsel %vm1781, %v1954, -inf
    %v1964 = vrot.slane %v1963, 4
    %v1965 = vmax.f32 %v1963, %v1964
    %v1966 = vrot.slane %v1965, 2
    %v1967 = vmax.f32 %v1965, %v1966
    %v1968 = vrot.slane %v1967, 1
    %v1969 = vmax.f32 %v1967, %v1968
    %v1970 = vsel %vm1796, %v1962, %v1969
    %v1971 = vadd.f32 %v1970, %v1904
    %v1972 = vpack.c.bf16 %v1971, %v1971
    %v1974 = vperm.slane %v1923, 0
    %v1989 = vunpack.c.l.b16 %v1910
    %v1990 = vunpack.c.l.b16 %v1911
    %v1991 = vunpack.c.l.b16 %v1912
    %v1992 = vunpack.c.l.b16 %v1913
    %v1993 = vunpack.c.l.b16 %v1914
    %v1994 = vunpack.c.l.b16 %v1915
    %v1995 = vunpack.c.l.b16 %v1916
    %v1996 = vunpack.c.l.b16 %v1917
    %v1997 = vunpack.c.l.b16 %v1918
    %v1998 = vunpack.c.l.b16 %v1919
    %v1999 = vunpack.c.l.b16 %v1920
    %v2000 = vunpack.c.l.b16 %v1921
    %v2001 = vunpack.c.l.b16 %v1922
    %v2002 = vpack.c.b16 %v1990, %v1989
    %v2003 = vpack.c.b16 %v1992, %v1991
    %v2004 = vpack.c.b16 %v1994, %v1993
    %v2005 = vpack.c.b16 %v1996, %v1995
    %v2006 = vpack.c.b16 %v1998, %v1997
    %v2007 = vpack.c.b16 %v2000, %v1999
    %v2008 = vpack.c.b16 %v2001, %v2001
    %v2016 = vsel %vm1781, %v1972, 0
    %v2019 = vsel %vm1844, %v2008, 0
    %2021 = vmatpush.bf16.msra.mxu0 0
    %2022 = vmatpush.bf16.msra.mxu0 %v2019
    %2023 = vmatpush.bf16.msra.mxu0 %v2007
    %2024 = vmatpush.bf16.msra.mxu0 %v2006
    %2025 = vmatpush.bf16.msra.mxu0 %v2005
    %2026 = vmatpush.bf16.msra.mxu0 %v2004
    %2027 = vmatpush.bf16.msra.mxu0 %v2003
    %2028 = vmatpush.bf16.msra.mxu0 %v2002
    %2029 = vmatmul.bf16.gmra.mxu0 %v2016
    %v2030 = vpop.f32.mrf.mxu0
    %v2031 = vadd.f32 %v1974, %v2030
    %v2032 = vpop.f32.mrf.mxu0
    %2033 = vdwg.mxu0
    %v2034 = vtanh.pop %v2031
    %v2035 = vpack.c.bf16 %v2034, %v2034
    %v2037 = vperm.slane %v1926, 0
    %v2041 = vunpack.c.l.b16 %v1924
    %v2042 = vunpack.c.l.b16 %v1925
    %v2043 = vpack.c.b16 %v2042, %v2041
    %v2045 = vsel %vm1871, %v2035, 0
    %v2048 = vsel %vm1875, %v2043, 0
    %2050 = vmatpush.bf16.msra.mxu0 0
    %2051 = vmatpush.bf16.msra.mxu0 0
    %2052 = vmatpush.bf16.msra.mxu0 0
    %2053 = vmatpush.bf16.msra.mxu0 0
    %2054 = vmatpush.bf16.msra.mxu0 0
    %2055 = vmatpush.bf16.msra.mxu0 0
    %2056 = vmatpush.bf16.msra.mxu0 0
    %2057 = vmatpush.bf16.msra.mxu0 %v2048
    %2058 = vmatmul.bf16.gmra.mxu0 %v2045
    %v2059 = vpop.f32.mrf.mxu0
    %v2060 = vadd.f32 %v2037, %v2059
    %v2061 = vpop.f32.mrf.mxu0
    %2062 = vdwg.mxu0
    %2063 = vst.msk [vmem:[#allocation4] sm:$0x3] %vm1892, %v2060
    // Predicated region
    $region142: #{causal_inference_forward.1} parent=1 // pred_check
      _
    $region143: #{causal_inference_forward.1} parent=1 // pred_check_branch
      %2065 = sbr.rel (0) target = $region145
    $region144: #{causal_inference_forward.1} parent=1 // pred_region
      %2067 = vsyncadd [#allocation3], 0
      %s2069 = sshll.u32 [#allocation2], 4
      %s2070 = int_to_ptr.vmem [resolvable:$true] %s2069
      %s2071 = sshll.u32 %s71, 4
      %s2072 = int_to_ptr.hbm [resolvable:$true] %s2071
      %2074 = dma.vmem_to_hbm [thread:$0]  %s2070, 32, %s2072, [#allocation3]
    $region145: #{causal_inference_forward.1} parent=1 // pred_fallthru
      _
    // Predicated region
    $region146: #{causal_inference_forward.1} parent=1 // pred_check
      _
    $region147: #{causal_inference_forward.1} parent=1 // pred_check_branch
      %2076 = sbr.rel (0) target = $region149
    $region148: #{causal_inference_forward.1} parent=1 // pred_region
      %2078 = vsyncadd [#allocation5], 0
      %s2080 = sshll.u32 [#allocation4], 4
      %s2081 = int_to_ptr.vmem [resolvable:$true] %s2080
      %s2082 = sshll.u32 %s73, 4
      %s2083 = int_to_ptr.hbm [resolvable:$true] %s2082
      %2085 = dma.vmem_to_hbm [thread:$0]  %s2081, 32, %s2083, [#allocation5]
    $region149: #{causal_inference_forward.1} parent=1 // pred_fallthru
      _
    // Predicated region
    $region150: #{causal_inference_forward.1} parent=1 // pred_check
      _
    $region151: #{causal_inference_forward.1} parent=1 // pred_check_branch
      %2087 = sbr.rel (0) target = $region153
    $region152: #{causal_inference_forward.1} parent=1 // pred_region
      _
    $region153: #{causal_inference_forward.1} parent=1 // pred_fallthru
      _
    // Predicated region
    $region154: #{causal_inference_forward.1} parent=1 // pred_check
      _
    $region155: #{causal_inference_forward.1} parent=1 // pred_check_branch
      %2089 = sbr.rel (0) target = $region157
    $region156: #{causal_inference_forward.1} parent=1 // pred_region
      %2091 = dma.done [#allocation3], 32
    $region157: #{causal_inference_forward.1} parent=1 // pred_fallthru
      _
    // Predicated region
    $region158: #{causal_inference_forward.1} parent=1 // pred_check
      _
    $region159: #{causal_inference_forward.1} parent=1 // pred_check_branch
      %2093 = sbr.rel (0) target = $region161
    $region160: #{causal_inference_forward.1} parent=1 // pred_region
      %2095 = dma.done [#allocation5], 32
    $region161: #{causal_inference_forward.1} parent=1 // pred_fallthru
      _
    // Predicated region
    $region162: #{causal_inference_forward.1} parent=1 // pred_check
      _
    $region163: #{causal_inference_forward.1} parent=1 // pred_check_branch
      %2097 = sbr.rel (0) target = $region165
    $region164: #{causal_inference_forward.1} parent=1 // pred_region
      _
    $region165: #{causal_inference_forward.1} parent=1 // pred_fallthru
      _
    %2098 = vsyncpa [#allocation3], 1
    %2099 = vsyncpa [#allocation5], 1

</llo_original>
